<compile_context>
chip_gen: v7x
topology: tpu7x:2x2x1
jax: 0.10.0
libtpu: 0.0.40
codegen_flags: <defaults>
</compile_context>

<pallas_src>
import math

import jax
import jax.numpy as jnp
from jax.experimental import pallas as pl
from jax.experimental.pallas import tpu as pltpu

# ----------------------------- model hyper-params ---------------------------
LATENCY_DIM = 4
VICTIM_ACC_DIM = 2
ACTION_DIM = 16
STEP_DIM = 10
ACTION_EMBED_DIM = 8
STEP_EMBED_DIM = 8
INPUT_DIM = LATENCY_DIM + VICTIM_ACC_DIM + ACTION_EMBED_DIM + STEP_EMBED_DIM  # 22
HIDDEN_DIM = 32
OUTPUT_DIM = 16
NHEAD = 8                      # nn.TransformerEncoderLayer(nhead=8)
HEAD_DIM = HIDDEN_DIM // NHEAD
DIM_FF = 2048                  # PyTorch default dim_feedforward
LN_EPS = 1e-5                  # PyTorch default layer_norm_eps
HEAD_PAD = 128                 # lane-padded fused policy+value head width
ROWS_PER_STEP = 512            # target activation rows (TB*S) per grid step


# ------------------------------- Pallas kernel ------------------------------
def _layer_norm(t, g, b):
    mu = jnp.mean(t, axis=-1, keepdims=True)
    var = jnp.mean((t - mu) ** 2, axis=-1, keepdims=True)
    return (t - mu) * jax.lax.rsqrt(var + LN_EPS) * g + b


def cache_ppo_kernel(
    x_ref,                        # (TB*S, INPUT_DIM) f32 features (flattened batch-major)
    wiq_ref, biq_ref,             # (INPUT_DIM, 4H), (1, 4H)  fused input|Q|K|V projection
    wo_ref,                       # (H, H)                    concat-heads output projection
    slab_ref,                     # (6, H) rows: bo, g1, be1, bff2, g2, be2
    wff1_ref, bff1_ref,           # bf16 (H, DIM_FF), f32 (1, DIM_FF)
    wff2_ref,                     # bf16 (DIM_FF, H)
    whead_ref, bhead_ref,         # (H, HEAD_PAD), (1, HEAD_PAD)  fused action|value heads
    out_ref,                      # (TB, HEAD_PAD): [:OUTPUT_DIM]=logpi, [OUTPUT_DIM]=value
):
    R, _ = x_ref.shape
    TB = out_ref.shape[0]
    S = R // TB
    H = HIDDEN_DIM
    hd = HEAD_DIM
    scale = 1.0 / math.sqrt(float(hd))

    x = x_ref[...]
    slab = slab_ref[...]
    bo = slab[0:1, :]
    g1 = slab[1:2, :]
    be1 = slab[2:3, :]
    bff2 = slab[3:4, :]
    g2 = slab[4:5, :]
    be2 = slab[5:6, :]

    # ---- fused input + QKV projection: ONE lane-dense (22, 128) MXU push ----
    hqkv = jnp.dot(x, wiq_ref[...], preferred_element_type=jnp.float32) + biq_ref[...]  # (R, 4H)
    h = hqkv[:, 0 * H:1 * H]                              # residual path (R, H)
    q = hqkv[:, 1 * H:2 * H].reshape(TB, S, H)
    k = hqkv[:, 2 * H:3 * H].reshape(TB, S, H)
    v = hqkv[:, 3 * H:4 * H].reshape(TB, S, H)

    # ---- per-head attention (tiny S x S x hd work; single-batch-dim einsums) ----
    ctx = []
    for head in range(NHEAD):
        lo = head * hd
        qh = q[:, :, lo:lo + hd]                          # (TB, S, hd)
        kh = k[:, :, lo:lo + hd]
        vh = v[:, :, lo:lo + hd]
        s = jnp.einsum("bqd,bkd->bqk", qh, kh,
                       preferred_element_type=jnp.float32) * scale
        s = s - jnp.max(s, axis=-1, keepdims=True)
        p = jnp.exp(s)
        p = p * pl.reciprocal(jnp.sum(p, axis=-1, keepdims=True), approx=True)
        ctx.append(jnp.einsum("bqk,bkd->bqd", p, vh,
                              preferred_element_type=jnp.float32))
    o = jnp.concatenate(ctx, axis=-1).reshape(R, H)       # concat heads -> (R, H)

    # ---- single concat-heads output projection ----
    attn = jnp.dot(o, wo_ref[...], preferred_element_type=jnp.float32) + bo

    x1 = _layer_norm(h + attn, g1, be1)

    # ---- feed-forward (ReLU): bf16 weights, f32 accumulation, f32 bias/ReLU ----
    ff = jnp.dot(x1.astype(jnp.bfloat16), wff1_ref[...],
                 preferred_element_type=jnp.float32) + bff1_ref[...]
    ff = jnp.maximum(ff, 0.0)
    ff = jnp.dot(ff.astype(jnp.bfloat16), wff2_ref[...],
                 preferred_element_type=jnp.float32) + bff2

    x2 = _layer_norm(x1 + ff, g2, be2)

    # ---- mean over sequence dim ----
    m = jnp.mean(x2.reshape(TB, S, H), axis=1)            # (TB, H)

    # ---- fused policy/value heads, lane-padded to 128 (single unmasked store) ----
    head_out = jnp.dot(m, whead_ref[...], preferred_element_type=jnp.float32) + bhead_ref[...]
    col = jax.lax.broadcasted_iota(jnp.int32, head_out.shape, 1)
    is_logit = col < OUTPUT_DIM
    masked = jnp.where(is_logit, head_out, -1e30)
    lmax = jnp.max(masked, axis=-1, keepdims=True)
    e = jnp.where(is_logit, jnp.exp(head_out - lmax), 0.0)
    lse = jnp.log(jnp.sum(e, axis=-1, keepdims=True))
    # logit columns -> log_softmax; other columns (value @ col OUTPUT_DIM, zero pad) pass through
    out_ref[...] = jnp.where(is_logit, head_out - lmax - lse, head_out)


# ------------------------------ JAX glue -------------------------------------
def build_features(obs, params):
    """one-hot + embedding + step==-1 masking + concat (pure JAX glue)."""
    obs = obs.astype(jnp.int32)
    l, v, act, stp = obs[..., 0], obs[..., 1], obs[..., 2], obs[..., 3]
    mask = stp == -1

    def one_hot_masked(src, n):
        s = jnp.where(mask, 0, src)
        oh = jax.nn.one_hot(s, n, dtype=jnp.float32)
        return jnp.where(mask[..., None], 0.0, oh)

    def embed_masked(src, table):
        s = jnp.where(mask, 0, src)
        e = table[s]
        return jnp.where(mask[..., None], 0.0, e)

    l_oh = one_hot_masked(l, LATENCY_DIM)
    v_oh = one_hot_masked(v, VICTIM_ACC_DIM)
    a_e = embed_masked(act, params["action_embed"])
    s_e = embed_masked(stp, params["step_embed"])
    return jnp.concatenate([l_oh, v_oh, a_e, s_e], axis=-1)  # (B, S, INPUT_DIM)


def cache_ppo_forward(obs, params, rows_per_step=ROWS_PER_STEP):
    x = build_features(obs, params)                     # (B, S, INPUT_DIM)
    B, S, Din = x.shape
    H = HIDDEN_DIM

    # ---- batch-block tiling: each grid step handles TB full sequences ----
    # Target >= rows_per_step activation rows per step (fills the MXU M dim and
    # amortizes per-step overhead) while bounding the (R, 2048) FFN intermediate
    # for v7x's smaller VMEM. TB is a multiple of 8 whenever the grid has >1 block.
    tb_cap = max(1, rows_per_step // S)
    if B <= tb_cap:
        TB, n_blocks = B, 1
    else:
        TB = max(8, (tb_cap // 8) * 8)
        n_blocks = -(-B // TB)
    Bp = n_blocks * TB
    if Bp != B:
        x = jnp.pad(x, ((0, Bp - B), (0, 0), (0, 0)))   # zero-featured pad rows (sliced off)

    x2d = x.reshape(Bp * S, Din)                        # flattened batch-major

    # ---- fused weights (host-side prep) ----
    wi, bi = params["wi"], params["bi"]
    wq, wk, wv = params["wq"], params["wk"], params["wv"]
    bq, bk, bv = params["bq"], params["bk"], params["bv"]
    # x@W gives [h | q | k | v] in one (22, 128) lane-dense matmul.
    w_inqkv = jnp.concatenate([wi, wi @ wq, wi @ wk, wi @ wv], axis=1)            # (22, 4H)
    b_inqkv = jnp.concatenate(
        [bi, bi @ wq + bq, bi @ wk + bk, bi @ wv + bv]).reshape(1, 4 * H)

    slab = jnp.stack([params["bo"], params["g1"], params["be1"],
                      params["bff2"], params["g2"], params["be2"]], axis=0)       # (6, H)

    wff1 = params["wff1"].astype(jnp.bfloat16)
    wff2 = params["wff2"].astype(jnp.bfloat16)
    bff1 = params["bff1"].reshape(1, DIM_FF)

    whead = jnp.zeros((H, HEAD_PAD), jnp.float32)
    whead = whead.at[:, :OUTPUT_DIM].set(params["wact"])
    whead = whead.at[:, OUTPUT_DIM:OUTPUT_DIM + 1].set(params["wval"])
    bhead = jnp.zeros((1, HEAD_PAD), jnp.float32)
    bhead = bhead.at[0, :OUTPUT_DIM].set(params["bact"])
    bhead = bhead.at[0, OUTPUT_DIM].set(params["bval"][0])

    weights = (w_inqkv, b_inqkv, params["wo"], slab, wff1, bff1, wff2, whead, bhead)

    in_specs = [pl.BlockSpec((TB * S, Din), lambda b: (b, 0))]              # activations: batch-block tiled
    in_specs += [pl.BlockSpec(w.shape, lambda b: (0, 0)) for w in weights]  # weights: broadcast / VMEM-resident

    out = pl.pallas_call(
        cache_ppo_kernel,
        out_shape=jax.ShapeDtypeStruct((Bp, HEAD_PAD), jnp.float32),
        grid=(n_blocks,),
        in_specs=in_specs,
        out_specs=pl.BlockSpec((TB, HEAD_PAD), lambda b: (b, 0)),
        compiler_params=pltpu.CompilerParams(
            dimension_semantics=("parallel",),          # shard batch blocks across v7x's 2 TCs
            vmem_limit_bytes=32 << 20,                  # <= half of v7x physical VMEM; fine on v5e/v6e
        ),
    )(x2d, *weights)

    logpi = out[:B, :OUTPUT_DIM]
    value = out[:B, OUTPUT_DIM:OUTPUT_DIM + 1]
    return logpi, value


# ------------------------- pure-JAX reference (for sanity) -------------------
def reference_forward(obs, p):
    x = build_features(obs, p)
    B, S, _ = x.shape
    H, hd = HIDDEN_DIM, HEAD_DIM

    h = x @ p["wi"] + p["bi"]                                  # (B, S, H)
    q = h @ p["wq"] + p["bq"]
    k = h @ p["wk"] + p["bk"]
    v = h @ p["wv"] + p["bv"]
    qh = q.reshape(B, S, NHEAD, hd).transpose(0, 2, 1, 3)
    kh = k.reshape(B, S, NHEAD, hd).transpose(0, 2, 1, 3)
    vh = v.reshape(B, S, NHEAD, hd).transpose(0, 2, 1, 3)
    s = jnp.einsum("bhqd,bhkd->bhqk", qh, kh) / math.sqrt(hd)
    a = jax.nn.softmax(s, axis=-1)
    o = jnp.einsum("bhqk,bhkd->bhqd", a, vh).transpose(0, 2, 1, 3).reshape(B, S, H)
    attn = o @ p["wo"] + p["bo"]

    def ln(t, g, b):
        mu = jnp.mean(t, axis=-1, keepdims=True)
        var = jnp.mean((t - mu) ** 2, axis=-1, keepdims=True)
        return (t - mu) * jax.lax.rsqrt(var + LN_EPS) * g + b

    x1 = ln(h + attn, p["g1"], p["be1"])
    ff = jnp.maximum(x1 @ p["wff1"] + p["bff1"], 0.0) @ p["wff2"] + p["bff2"]
    x2 = ln(x1 + ff, p["g2"], p["be2"])
    m = x2.mean(axis=1)
    logits = m @ p["wact"] + p["bact"]
    logpi = jax.nn.log_softmax(logits, axis=-1)
    value = m @ p["wval"] + p["bval"]
    return logpi, value


# ------------------------------- param init ----------------------------------
def init_params(key):
    ks = jax.random.split(key, 12)
    H = HIDDEN_DIM
    n = lambda k, shape, s=0.05: (s * jax.random.normal(k, shape)).astype(jnp.float32)
    z = lambda shape: jnp.zeros(shape, jnp.float32)
    o = lambda shape: jnp.ones(shape, jnp.float32)
    return {
        "action_embed": n(ks[0], (ACTION_DIM, ACTION_EMBED_DIM), 0.1),
        "step_embed": n(ks[1], (STEP_DIM, STEP_EMBED_DIM), 0.1),
        "wi": n(ks[2], (INPUT_DIM, H)), "bi": z((H,)),
        "wq": n(ks[3], (H, H)), "bq": z((H,)),
        "wk": n(ks[4], (H, H)), "bk": z((H,)),
        "wv": n(ks[5], (H, H)), "bv": z((H,)),
        "wo": n(ks[6], (H, H)), "bo": z((H,)),
        "g1": o((H,)), "be1": z((H,)),
        "wff1": n(ks[7], (H, DIM_FF)), "bff1": z((DIM_FF,)),
        "wff2": n(ks[8], (DIM_FF, H)), "bff2": z((H,)),
        "g2": o((H,)), "be2": z((H,)),
        "wact": n(ks[9], (H, OUTPUT_DIM)), "bact": z((OUTPUT_DIM,)),
        "wval": n(ks[10], (H, 1)), "bval": z((1,)),
    }


def make_obs(key, B, S):
    k1, k2, k3, k4 = jax.random.split(key, 4)
    l = jax.random.randint(k1, (B, S), 0, LATENCY_DIM)
    v = jax.random.randint(k2, (B, S), 0, VICTIM_ACC_DIM)
    act = jax.random.randint(k3, (B, S), 0, ACTION_DIM)
    stp = jax.random.randint(k4, (B, S), 0, STEP_DIM)
    stp = stp.at[1, S - 3:].set(-1)          # padded tail -> mask = (step == -1)
    return jnp.stack([l, v, act, stp], axis=-1).astype(jnp.int32)   # (B, S, 4)


# ---------------------------------- main --------------------------------------
if __name__ == "__main__":
    key = jax.random.PRNGKey(0)
    kp, ko1, ko2 = jax.random.split(key, 3)
    params = init_params(kp)

    # small single-block case (B=2, S=8)
    obs = make_obs(ko1, 2, 8)
    logpi, value = cache_ppo_forward(obs, params)
    (logpi, value) = jax.block_until_ready((logpi, value))
    logpi_ref, value_ref = reference_forward(obs, params)
    err = float(jnp.max(jnp.abs(logpi - logpi_ref)) + jnp.max(jnp.abs(value - value_ref)))
    assert jnp.all(jnp.isfinite(logpi)) and jnp.all(jnp.isfinite(value))
    assert err < 5e-2, f"small-case mismatch vs reference: {err}"

    # multi-block case exercising the batch-tiled grid (B=40, S=8, 128 rows/step)
    obs2 = make_obs(ko2, 40, 8)
    logpi2, value2 = cache_ppo_forward(obs2, params, rows_per_step=128)
    (logpi2, value2) = jax.block_until_ready((logpi2, value2))
    logpi2_ref, value2_ref = reference_forward(obs2, params)
    err2 = float(jnp.max(jnp.abs(logpi2 - logpi2_ref)) + jnp.max(jnp.abs(value2 - value2_ref)))
    assert jnp.all(jnp.isfinite(logpi2)) and jnp.all(jnp.isfinite(value2))
    assert err2 < 5e-2, f"multi-block mismatch vs reference: {err2}"

    print("KERNEL_OK")
</pallas_src>

<mosaic_0001>
module attributes {stable_mosaic.version = 11 : i64} {
  func.func @cache_ppo_kernel(%arg0: i32, %arg1: memref<16x22xf32, #tpu.memory_space<vmem>>, %arg2: memref<22x128xf32, #tpu.memory_space<vmem>>, %arg3: memref<1x128xf32, #tpu.memory_space<vmem>>, %arg4: memref<32x32xf32, #tpu.memory_space<vmem>>, %arg5: memref<6x32xf32, #tpu.memory_space<vmem>>, %arg6: memref<32x2048xbf16, #tpu.memory_space<vmem>>, %arg7: memref<1x2048xf32, #tpu.memory_space<vmem>>, %arg8: memref<2048x32xbf16, #tpu.memory_space<vmem>>, %arg9: memref<32x128xf32, #tpu.memory_space<vmem>>, %arg10: memref<1x128xf32, #tpu.memory_space<vmem>>, %arg11: memref<2x128xf32, #tpu.memory_space<vmem>>) attributes {dimension_semantics = [#tpu.dimension_semantics<parallel>], iteration_bounds = array<i64: 1>, scalar_prefetch = 0 : i64, scratch_operands = 0 : i64, tpu.core_type = #tpu.core_type<tc>, window_params = [{transform_indices = @transform_0, window_bounds = array<i64: 16, 22>}, {pipeline_mode = #tpu.pipeline_mode<synchronous>, transform_indices = @transform_1, window_bounds = array<i64: 22, 128>}, {pipeline_mode = #tpu.pipeline_mode<synchronous>, transform_indices = @transform_2, window_bounds = array<i64: 1, 128>}, {pipeline_mode = #tpu.pipeline_mode<synchronous>, transform_indices = @transform_3, window_bounds = array<i64: 32, 32>}, {pipeline_mode = #tpu.pipeline_mode<synchronous>, transform_indices = @transform_4, window_bounds = array<i64: 6, 32>}, {pipeline_mode = #tpu.pipeline_mode<synchronous>, transform_indices = @transform_5, window_bounds = array<i64: 32, 2048>}, {pipeline_mode = #tpu.pipeline_mode<synchronous>, transform_indices = @transform_6, window_bounds = array<i64: 1, 2048>}, {pipeline_mode = #tpu.pipeline_mode<synchronous>, transform_indices = @transform_7, window_bounds = array<i64: 2048, 32>}, {pipeline_mode = #tpu.pipeline_mode<synchronous>, transform_indices = @transform_8, window_bounds = array<i64: 32, 128>}, {pipeline_mode = #tpu.pipeline_mode<synchronous>, transform_indices = @transform_9, window_bounds = array<i64: 1, 128>}, {transform_indices = @transform_10, window_bounds = array<i64: 2, 128>}]} {
    %c0 = arith.constant 0 : index
    %c0_0 = arith.constant 0 : index
    %0 = vector.load %arg1[%c0, %c0_0] : memref<16x22xf32, #tpu.memory_space<vmem>>, vector<16x22xf32>
    %c0_1 = arith.constant 0 : index
    %c0_2 = arith.constant 0 : index
    %1 = vector.load %arg5[%c0_1, %c0_2] : memref<6x32xf32, #tpu.memory_space<vmem>>, vector<6x32xf32>
    %2 = vector.extract_strided_slice %1 {offsets = [0, 0], sizes = [1, 32], strides = [1, 1]} : vector<6x32xf32> to vector<1x32xf32>
    %3 = vector.extract_strided_slice %1 {offsets = [1, 0], sizes = [1, 32], strides = [1, 1]} : vector<6x32xf32> to vector<1x32xf32>
    %4 = vector.extract_strided_slice %1 {offsets = [2, 0], sizes = [1, 32], strides = [1, 1]} : vector<6x32xf32> to vector<1x32xf32>
    %5 = vector.extract_strided_slice %1 {offsets = [3, 0], sizes = [1, 32], strides = [1, 1]} : vector<6x32xf32> to vector<1x32xf32>
    %6 = vector.extract_strided_slice %1 {offsets = [4, 0], sizes = [1, 32], strides = [1, 1]} : vector<6x32xf32> to vector<1x32xf32>
    %7 = vector.extract_strided_slice %1 {offsets = [5, 0], sizes = [1, 32], strides = [1, 1]} : vector<6x32xf32> to vector<1x32xf32>
    %c0_3 = arith.constant 0 : index
    %c0_4 = arith.constant 0 : index
    %8 = vector.load %arg2[%c0_3, %c0_4] : memref<22x128xf32, #tpu.memory_space<vmem>>, vector<22x128xf32>
    %cst = arith.constant dense<0.000000e+00> : vector<16x128xf32>
    %9 = tpu.matmul %0, %8, %cst {dimension_numbers = #tpu.dot_dimension_numbers<[1], [0], [0], [1], [0, 0, 1, 1], [], []>} : vector<16x22xf32>, vector<22x128xf32>, vector<16x128xf32> -> vector<16x128xf32>
    %c0_5 = arith.constant 0 : index
    %c0_6 = arith.constant 0 : index
    %10 = vector.load %arg3[%c0_5, %c0_6] : memref<1x128xf32, #tpu.memory_space<vmem>>, vector<1x128xf32>
    %11 = vector.broadcast %10 : vector<1x128xf32> to vector<16x128xf32>
    %12 = arith.addf %9, %11 : vector<16x128xf32>
    %13 = vector.extract_strided_slice %12 {offsets = [0, 0], sizes = [16, 32], strides = [1, 1]} : vector<16x128xf32> to vector<16x32xf32>
    %14 = vector.extract_strided_slice %12 {offsets = [0, 32], sizes = [16, 32], strides = [1, 1]} : vector<16x128xf32> to vector<16x32xf32>
    %15 = vector.shape_cast %14 : vector<16x32xf32> to vector<2x8x32xf32>
    %16 = vector.extract_strided_slice %12 {offsets = [0, 64], sizes = [16, 32], strides = [1, 1]} : vector<16x128xf32> to vector<16x32xf32>
    %17 = vector.shape_cast %16 : vector<16x32xf32> to vector<2x8x32xf32>
    %18 = vector.extract_strided_slice %12 {offsets = [0, 96], sizes = [16, 32], strides = [1, 1]} : vector<16x128xf32> to vector<16x32xf32>
    %19 = vector.shape_cast %18 : vector<16x32xf32> to vector<2x8x32xf32>
    %20 = vector.extract_strided_slice %15 {offsets = [0, 0, 0], sizes = [2, 8, 4], strides = [1, 1, 1]} : vector<2x8x32xf32> to vector<2x8x4xf32>
    %21 = vector.extract_strided_slice %17 {offsets = [0, 0, 0], sizes = [2, 8, 4], strides = [1, 1, 1]} : vector<2x8x32xf32> to vector<2x8x4xf32>
    %22 = vector.extract_strided_slice %19 {offsets = [0, 0, 0], sizes = [2, 8, 4], strides = [1, 1, 1]} : vector<2x8x32xf32> to vector<2x8x4xf32>
    "tpu.trace_start"() <{level = 10 : i32, message = "bqd,bkd->bqk"}> : () -> ()
    %cst_7 = arith.constant dense<0.000000e+00> : vector<2x8x8xf32>
    %23 = tpu.matmul %20, %21, %cst_7 {dimension_numbers = #tpu.dot_dimension_numbers<[2], [2], [1], [1], [0, 0, 0, 1, 1, 1], [0], [0]>} : vector<2x8x4xf32>, vector<2x8x4xf32>, vector<2x8x8xf32> -> vector<2x8x8xf32>
    "tpu.trace_stop"() : () -> ()
    %cst_8 = arith.constant 5.000000e-01 : f32
    %24 = vector.broadcast %cst_8 : f32 to vector<2x8x8xf32>
    %25 = arith.mulf %23, %24 : vector<2x8x8xf32>
    %cst_9 = arith.constant dense<0xFF800000> : vector<2x8xf32>
    %26 = vector.multi_reduction <maximumf>, %25, %cst_9 [2] : vector<2x8x8xf32> to vector<2x8xf32>
    %27 = vector.shape_cast %26 : vector<2x8xf32> to vector<2x8x1xf32>
    %28 = vector.broadcast %27 : vector<2x8x1xf32> to vector<2x8x8xf32>
    %29 = arith.subf %25, %28 : vector<2x8x8xf32>
    %30 = math.exp %29 : vector<2x8x8xf32>
    %cst_10 = arith.constant dense<0.000000e+00> : vector<2x8xf32>
    %31 = vector.multi_reduction <add>, %30, %cst_10 [2] : vector<2x8x8xf32> to vector<2x8xf32>
    %32 = vector.shape_cast %31 : vector<2x8xf32> to vector<2x8x1xf32>
    %33 = tpu.reciprocal %32 {approx = true} : vector<2x8x1xf32> -> vector<2x8x1xf32>
    %34 = vector.broadcast %33 : vector<2x8x1xf32> to vector<2x8x8xf32>
    %35 = arith.mulf %30, %34 : vector<2x8x8xf32>
    "tpu.trace_start"() <{level = 10 : i32, message = "bqk,bkd->bqd"}> : () -> ()
    %cst_11 = arith.constant dense<0.000000e+00> : vector<2x8x4xf32>
    %36 = tpu.matmul %35, %22, %cst_11 {dimension_numbers = #tpu.dot_dimension_numbers<[2], [1], [1], [2], [0, 0, 0, 1, 1, 2], [0], [0]>} : vector<2x8x8xf32>, vector<2x8x4xf32>, vector<2x8x4xf32> -> vector<2x8x4xf32>
    "tpu.trace_stop"() : () -> ()
    %37 = vector.extract_strided_slice %15 {offsets = [0, 0, 4], sizes = [2, 8, 4], strides = [1, 1, 1]} : vector<2x8x32xf32> to vector<2x8x4xf32>
    %38 = vector.extract_strided_slice %17 {offsets = [0, 0, 4], sizes = [2, 8, 4], strides = [1, 1, 1]} : vector<2x8x32xf32> to vector<2x8x4xf32>
    %39 = vector.extract_strided_slice %19 {offsets = [0, 0, 4], sizes = [2, 8, 4], strides = [1, 1, 1]} : vector<2x8x32xf32> to vector<2x8x4xf32>
    "tpu.trace_start"() <{level = 10 : i32, message = "bqd,bkd->bqk"}> : () -> ()
    %cst_12 = arith.constant dense<0.000000e+00> : vector<2x8x8xf32>
    %40 = tpu.matmul %37, %38, %cst_12 {dimension_numbers = #tpu.dot_dimension_numbers<[2], [2], [1], [1], [0, 0, 0, 1, 1, 1], [0], [0]>} : vector<2x8x4xf32>, vector<2x8x4xf32>, vector<2x8x8xf32> -> vector<2x8x8xf32>
    "tpu.trace_stop"() : () -> ()
    %cst_13 = arith.constant 5.000000e-01 : f32
    %41 = vector.broadcast %cst_13 : f32 to vector<2x8x8xf32>
    %42 = arith.mulf %40, %41 : vector<2x8x8xf32>
    %cst_14 = arith.constant dense<0xFF800000> : vector<2x8xf32>
    %43 = vector.multi_reduction <maximumf>, %42, %cst_14 [2] : vector<2x8x8xf32> to vector<2x8xf32>
    %44 = vector.shape_cast %43 : vector<2x8xf32> to vector<2x8x1xf32>
    %45 = vector.broadcast %44 : vector<2x8x1xf32> to vector<2x8x8xf32>
    %46 = arith.subf %42, %45 : vector<2x8x8xf32>
    %47 = math.exp %46 : vector<2x8x8xf32>
    %cst_15 = arith.constant dense<0.000000e+00> : vector<2x8xf32>
    %48 = vector.multi_reduction <add>, %47, %cst_15 [2] : vector<2x8x8xf32> to vector<2x8xf32>
    %49 = vector.shape_cast %48 : vector<2x8xf32> to vector<2x8x1xf32>
    %50 = tpu.reciprocal %49 {approx = true} : vector<2x8x1xf32> -> vector<2x8x1xf32>
    %51 = vector.broadcast %50 : vector<2x8x1xf32> to vector<2x8x8xf32>
    %52 = arith.mulf %47, %51 : vector<2x8x8xf32>
    "tpu.trace_start"() <{level = 10 : i32, message = "bqk,bkd->bqd"}> : () -> ()
    %cst_16 = arith.constant dense<0.000000e+00> : vector<2x8x4xf32>
    %53 = tpu.matmul %52, %39, %cst_16 {dimension_numbers = #tpu.dot_dimension_numbers<[2], [1], [1], [2], [0, 0, 0, 1, 1, 2], [0], [0]>} : vector<2x8x8xf32>, vector<2x8x4xf32>, vector<2x8x4xf32> -> vector<2x8x4xf32>
    "tpu.trace_stop"() : () -> ()
    %54 = vector.extract_strided_slice %15 {offsets = [0, 0, 8], sizes = [2, 8, 4], strides = [1, 1, 1]} : vector<2x8x32xf32> to vector<2x8x4xf32>
    %55 = vector.extract_strided_slice %17 {offsets = [0, 0, 8], sizes = [2, 8, 4], strides = [1, 1, 1]} : vector<2x8x32xf32> to vector<2x8x4xf32>
    %56 = vector.extract_strided_slice %19 {offsets = [0, 0, 8], sizes = [2, 8, 4], strides = [1, 1, 1]} : vector<2x8x32xf32> to vector<2x8x4xf32>
    "tpu.trace_start"() <{level = 10 : i32, message = "bqd,bkd->bqk"}> : () -> ()
    %cst_17 = arith.constant dense<0.000000e+00> : vector<2x8x8xf32>
    %57 = tpu.matmul %54, %55, %cst_17 {dimension_numbers = #tpu.dot_dimension_numbers<[2], [2], [1], [1], [0, 0, 0, 1, 1, 1], [0], [0]>} : vector<2x8x4xf32>, vector<2x8x4xf32>, vector<2x8x8xf32> -> vector<2x8x8xf32>
    "tpu.trace_stop"() : () -> ()
    %cst_18 = arith.constant 5.000000e-01 : f32
    %58 = vector.broadcast %cst_18 : f32 to vector<2x8x8xf32>
    %59 = arith.mulf %57, %58 : vector<2x8x8xf32>
    %cst_19 = arith.constant dense<0xFF800000> : vector<2x8xf32>
    %60 = vector.multi_reduction <maximumf>, %59, %cst_19 [2] : vector<2x8x8xf32> to vector<2x8xf32>
    %61 = vector.shape_cast %60 : vector<2x8xf32> to vector<2x8x1xf32>
    %62 = vector.broadcast %61 : vector<2x8x1xf32> to vector<2x8x8xf32>
    %63 = arith.subf %59, %62 : vector<2x8x8xf32>
    %64 = math.exp %63 : vector<2x8x8xf32>
    %cst_20 = arith.constant dense<0.000000e+00> : vector<2x8xf32>
    %65 = vector.multi_reduction <add>, %64, %cst_20 [2] : vector<2x8x8xf32> to vector<2x8xf32>
    %66 = vector.shape_cast %65 : vector<2x8xf32> to vector<2x8x1xf32>
    %67 = tpu.reciprocal %66 {approx = true} : vector<2x8x1xf32> -> vector<2x8x1xf32>
    %68 = vector.broadcast %67 : vector<2x8x1xf32> to vector<2x8x8xf32>
    %69 = arith.mulf %64, %68 : vector<2x8x8xf32>
    "tpu.trace_start"() <{level = 10 : i32, message = "bqk,bkd->bqd"}> : () -> ()
    %cst_21 = arith.constant dense<0.000000e+00> : vector<2x8x4xf32>
    %70 = tpu.matmul %69, %56, %cst_21 {dimension_numbers = #tpu.dot_dimension_numbers<[2], [1], [1], [2], [0, 0, 0, 1, 1, 2], [0], [0]>} : vector<2x8x8xf32>, vector<2x8x4xf32>, vector<2x8x4xf32> -> vector<2x8x4xf32>
    "tpu.trace_stop"() : () -> ()
    %71 = vector.extract_strided_slice %15 {offsets = [0, 0, 12], sizes = [2, 8, 4], strides = [1, 1, 1]} : vector<2x8x32xf32> to vector<2x8x4xf32>
    %72 = vector.extract_strided_slice %17 {offsets = [0, 0, 12], sizes = [2, 8, 4], strides = [1, 1, 1]} : vector<2x8x32xf32> to vector<2x8x4xf32>
    %73 = vector.extract_strided_slice %19 {offsets = [0, 0, 12], sizes = [2, 8, 4], strides = [1, 1, 1]} : vector<2x8x32xf32> to vector<2x8x4xf32>
    "tpu.trace_start"() <{level = 10 : i32, message = "bqd,bkd->bqk"}> : () -> ()
    %cst_22 = arith.constant dense<0.000000e+00> : vector<2x8x8xf32>
    %74 = tpu.matmul %71, %72, %cst_22 {dimension_numbers = #tpu.dot_dimension_numbers<[2], [2], [1], [1], [0, 0, 0, 1, 1, 1], [0], [0]>} : vector<2x8x4xf32>, vector<2x8x4xf32>, vector<2x8x8xf32> -> vector<2x8x8xf32>
    "tpu.trace_stop"() : () -> ()
    %cst_23 = arith.constant 5.000000e-01 : f32
    %75 = vector.broadcast %cst_23 : f32 to vector<2x8x8xf32>
    %76 = arith.mulf %74, %75 : vector<2x8x8xf32>
    %cst_24 = arith.constant dense<0xFF800000> : vector<2x8xf32>
    %77 = vector.multi_reduction <maximumf>, %76, %cst_24 [2] : vector<2x8x8xf32> to vector<2x8xf32>
    %78 = vector.shape_cast %77 : vector<2x8xf32> to vector<2x8x1xf32>
    %79 = vector.broadcast %78 : vector<2x8x1xf32> to vector<2x8x8xf32>
    %80 = arith.subf %76, %79 : vector<2x8x8xf32>
    %81 = math.exp %80 : vector<2x8x8xf32>
    %cst_25 = arith.constant dense<0.000000e+00> : vector<2x8xf32>
    %82 = vector.multi_reduction <add>, %81, %cst_25 [2] : vector<2x8x8xf32> to vector<2x8xf32>
    %83 = vector.shape_cast %82 : vector<2x8xf32> to vector<2x8x1xf32>
    %84 = tpu.reciprocal %83 {approx = true} : vector<2x8x1xf32> -> vector<2x8x1xf32>
    %85 = vector.broadcast %84 : vector<2x8x1xf32> to vector<2x8x8xf32>
    %86 = arith.mulf %81, %85 : vector<2x8x8xf32>
    "tpu.trace_start"() <{level = 10 : i32, message = "bqk,bkd->bqd"}> : () -> ()
    %cst_26 = arith.constant dense<0.000000e+00> : vector<2x8x4xf32>
    %87 = tpu.matmul %86, %73, %cst_26 {dimension_numbers = #tpu.dot_dimension_numbers<[2], [1], [1], [2], [0, 0, 0, 1, 1, 2], [0], [0]>} : vector<2x8x8xf32>, vector<2x8x4xf32>, vector<2x8x4xf32> -> vector<2x8x4xf32>
    "tpu.trace_stop"() : () -> ()
    %88 = vector.extract_strided_slice %15 {offsets = [0, 0, 16], sizes = [2, 8, 4], strides = [1, 1, 1]} : vector<2x8x32xf32> to vector<2x8x4xf32>
    %89 = vector.extract_strided_slice %17 {offsets = [0, 0, 16], sizes = [2, 8, 4], strides = [1, 1, 1]} : vector<2x8x32xf32> to vector<2x8x4xf32>
    %90 = vector.extract_strided_slice %19 {offsets = [0, 0, 16], sizes = [2, 8, 4], strides = [1, 1, 1]} : vector<2x8x32xf32> to vector<2x8x4xf32>
    "tpu.trace_start"() <{level = 10 : i32, message = "bqd,bkd->bqk"}> : () -> ()
    %cst_27 = arith.constant dense<0.000000e+00> : vector<2x8x8xf32>
    %91 = tpu.matmul %88, %89, %cst_27 {dimension_numbers = #tpu.dot_dimension_numbers<[2], [2], [1], [1], [0, 0, 0, 1, 1, 1], [0], [0]>} : vector<2x8x4xf32>, vector<2x8x4xf32>, vector<2x8x8xf32> -> vector<2x8x8xf32>
    "tpu.trace_stop"() : () -> ()
    %cst_28 = arith.constant 5.000000e-01 : f32
    %92 = vector.broadcast %cst_28 : f32 to vector<2x8x8xf32>
    %93 = arith.mulf %91, %92 : vector<2x8x8xf32>
    %cst_29 = arith.constant dense<0xFF800000> : vector<2x8xf32>
    %94 = vector.multi_reduction <maximumf>, %93, %cst_29 [2] : vector<2x8x8xf32> to vector<2x8xf32>
    %95 = vector.shape_cast %94 : vector<2x8xf32> to vector<2x8x1xf32>
    %96 = vector.broadcast %95 : vector<2x8x1xf32> to vector<2x8x8xf32>
    %97 = arith.subf %93, %96 : vector<2x8x8xf32>
    %98 = math.exp %97 : vector<2x8x8xf32>
    %cst_30 = arith.constant dense<0.000000e+00> : vector<2x8xf32>
    %99 = vector.multi_reduction <add>, %98, %cst_30 [2] : vector<2x8x8xf32> to vector<2x8xf32>
    %100 = vector.shape_cast %99 : vector<2x8xf32> to vector<2x8x1xf32>
    %101 = tpu.reciprocal %100 {approx = true} : vector<2x8x1xf32> -> vector<2x8x1xf32>
    %102 = vector.broadcast %101 : vector<2x8x1xf32> to vector<2x8x8xf32>
    %103 = arith.mulf %98, %102 : vector<2x8x8xf32>
    "tpu.trace_start"() <{level = 10 : i32, message = "bqk,bkd->bqd"}> : () -> ()
    %cst_31 = arith.constant dense<0.000000e+00> : vector<2x8x4xf32>
    %104 = tpu.matmul %103, %90, %cst_31 {dimension_numbers = #tpu.dot_dimension_numbers<[2], [1], [1], [2], [0, 0, 0, 1, 1, 2], [0], [0]>} : vector<2x8x8xf32>, vector<2x8x4xf32>, vector<2x8x4xf32> -> vector<2x8x4xf32>
    "tpu.trace_stop"() : () -> ()
    %105 = vector.extract_strided_slice %15 {offsets = [0, 0, 20], sizes = [2, 8, 4], strides = [1, 1, 1]} : vector<2x8x32xf32> to vector<2x8x4xf32>
    %106 = vector.extract_strided_slice %17 {offsets = [0, 0, 20], sizes = [2, 8, 4], strides = [1, 1, 1]} : vector<2x8x32xf32> to vector<2x8x4xf32>
    %107 = vector.extract_strided_slice %19 {offsets = [0, 0, 20], sizes = [2, 8, 4], strides = [1, 1, 1]} : vector<2x8x32xf32> to vector<2x8x4xf32>
    "tpu.trace_start"() <{level = 10 : i32, message = "bqd,bkd->bqk"}> : () -> ()
    %cst_32 = arith.constant dense<0.000000e+00> : vector<2x8x8xf32>
    %108 = tpu.matmul %105, %106, %cst_32 {dimension_numbers = #tpu.dot_dimension_numbers<[2], [2], [1], [1], [0, 0, 0, 1, 1, 1], [0], [0]>} : vector<2x8x4xf32>, vector<2x8x4xf32>, vector<2x8x8xf32> -> vector<2x8x8xf32>
    "tpu.trace_stop"() : () -> ()
    %cst_33 = arith.constant 5.000000e-01 : f32
    %109 = vector.broadcast %cst_33 : f32 to vector<2x8x8xf32>
    %110 = arith.mulf %108, %109 : vector<2x8x8xf32>
    %cst_34 = arith.constant dense<0xFF800000> : vector<2x8xf32>
    %111 = vector.multi_reduction <maximumf>, %110, %cst_34 [2] : vector<2x8x8xf32> to vector<2x8xf32>
    %112 = vector.shape_cast %111 : vector<2x8xf32> to vector<2x8x1xf32>
    %113 = vector.broadcast %112 : vector<2x8x1xf32> to vector<2x8x8xf32>
    %114 = arith.subf %110, %113 : vector<2x8x8xf32>
    %115 = math.exp %114 : vector<2x8x8xf32>
    %cst_35 = arith.constant dense<0.000000e+00> : vector<2x8xf32>
    %116 = vector.multi_reduction <add>, %115, %cst_35 [2] : vector<2x8x8xf32> to vector<2x8xf32>
    %117 = vector.shape_cast %116 : vector<2x8xf32> to vector<2x8x1xf32>
    %118 = tpu.reciprocal %117 {approx = true} : vector<2x8x1xf32> -> vector<2x8x1xf32>
    %119 = vector.broadcast %118 : vector<2x8x1xf32> to vector<2x8x8xf32>
    %120 = arith.mulf %115, %119 : vector<2x8x8xf32>
    "tpu.trace_start"() <{level = 10 : i32, message = "bqk,bkd->bqd"}> : () -> ()
    %cst_36 = arith.constant dense<0.000000e+00> : vector<2x8x4xf32>
    %121 = tpu.matmul %120, %107, %cst_36 {dimension_numbers = #tpu.dot_dimension_numbers<[2], [1], [1], [2], [0, 0, 0, 1, 1, 2], [0], [0]>} : vector<2x8x8xf32>, vector<2x8x4xf32>, vector<2x8x4xf32> -> vector<2x8x4xf32>
    "tpu.trace_stop"() : () -> ()
    %122 = vector.extract_strided_slice %15 {offsets = [0, 0, 24], sizes = [2, 8, 4], strides = [1, 1, 1]} : vector<2x8x32xf32> to vector<2x8x4xf32>
    %123 = vector.extract_strided_slice %17 {offsets = [0, 0, 24], sizes = [2, 8, 4], strides = [1, 1, 1]} : vector<2x8x32xf32> to vector<2x8x4xf32>
    %124 = vector.extract_strided_slice %19 {offsets = [0, 0, 24], sizes = [2, 8, 4], strides = [1, 1, 1]} : vector<2x8x32xf32> to vector<2x8x4xf32>
    "tpu.trace_start"() <{level = 10 : i32, message = "bqd,bkd->bqk"}> : () -> ()
    %cst_37 = arith.constant dense<0.000000e+00> : vector<2x8x8xf32>
    %125 = tpu.matmul %122, %123, %cst_37 {dimension_numbers = #tpu.dot_dimension_numbers<[2], [2], [1], [1], [0, 0, 0, 1, 1, 1], [0], [0]>} : vector<2x8x4xf32>, vector<2x8x4xf32>, vector<2x8x8xf32> -> vector<2x8x8xf32>
    "tpu.trace_stop"() : () -> ()
    %cst_38 = arith.constant 5.000000e-01 : f32
    %126 = vector.broadcast %cst_38 : f32 to vector<2x8x8xf32>
    %127 = arith.mulf %125, %126 : vector<2x8x8xf32>
    %cst_39 = arith.constant dense<0xFF800000> : vector<2x8xf32>
    %128 = vector.multi_reduction <maximumf>, %127, %cst_39 [2] : vector<2x8x8xf32> to vector<2x8xf32>
    %129 = vector.shape_cast %128 : vector<2x8xf32> to vector<2x8x1xf32>
    %130 = vector.broadcast %129 : vector<2x8x1xf32> to vector<2x8x8xf32>
    %131 = arith.subf %127, %130 : vector<2x8x8xf32>
    %132 = math.exp %131 : vector<2x8x8xf32>
    %cst_40 = arith.constant dense<0.000000e+00> : vector<2x8xf32>
    %133 = vector.multi_reduction <add>, %132, %cst_40 [2] : vector<2x8x8xf32> to vector<2x8xf32>
    %134 = vector.shape_cast %133 : vector<2x8xf32> to vector<2x8x1xf32>
    %135 = tpu.reciprocal %134 {approx = true} : vector<2x8x1xf32> -> vector<2x8x1xf32>
    %136 = vector.broadcast %135 : vector<2x8x1xf32> to vector<2x8x8xf32>
    %137 = arith.mulf %132, %136 : vector<2x8x8xf32>
    "tpu.trace_start"() <{level = 10 : i32, message = "bqk,bkd->bqd"}> : () -> ()
    %cst_41 = arith.constant dense<0.000000e+00> : vector<2x8x4xf32>
    %138 = tpu.matmul %137, %124, %cst_41 {dimension_numbers = #tpu.dot_dimension_numbers<[2], [1], [1], [2], [0, 0, 0, 1, 1, 2], [0], [0]>} : vector<2x8x8xf32>, vector<2x8x4xf32>, vector<2x8x4xf32> -> vector<2x8x4xf32>
    "tpu.trace_stop"() : () -> ()
    %139 = vector.extract_strided_slice %15 {offsets = [0, 0, 28], sizes = [2, 8, 4], strides = [1, 1, 1]} : vector<2x8x32xf32> to vector<2x8x4xf32>
    %140 = vector.extract_strided_slice %17 {offsets = [0, 0, 28], sizes = [2, 8, 4], strides = [1, 1, 1]} : vector<2x8x32xf32> to vector<2x8x4xf32>
    %141 = vector.extract_strided_slice %19 {offsets = [0, 0, 28], sizes = [2, 8, 4], strides = [1, 1, 1]} : vector<2x8x32xf32> to vector<2x8x4xf32>
    "tpu.trace_start"() <{level = 10 : i32, message = "bqd,bkd->bqk"}> : () -> ()
    %cst_42 = arith.constant dense<0.000000e+00> : vector<2x8x8xf32>
    %142 = tpu.matmul %139, %140, %cst_42 {dimension_numbers = #tpu.dot_dimension_numbers<[2], [2], [1], [1], [0, 0, 0, 1, 1, 1], [0], [0]>} : vector<2x8x4xf32>, vector<2x8x4xf32>, vector<2x8x8xf32> -> vector<2x8x8xf32>
    "tpu.trace_stop"() : () -> ()
    %cst_43 = arith.constant 5.000000e-01 : f32
    %143 = vector.broadcast %cst_43 : f32 to vector<2x8x8xf32>
    %144 = arith.mulf %142, %143 : vector<2x8x8xf32>
    %cst_44 = arith.constant dense<0xFF800000> : vector<2x8xf32>
    %145 = vector.multi_reduction <maximumf>, %144, %cst_44 [2] : vector<2x8x8xf32> to vector<2x8xf32>
    %146 = vector.shape_cast %145 : vector<2x8xf32> to vector<2x8x1xf32>
    %147 = vector.broadcast %146 : vector<2x8x1xf32> to vector<2x8x8xf32>
    %148 = arith.subf %144, %147 : vector<2x8x8xf32>
    %149 = math.exp %148 : vector<2x8x8xf32>
    %cst_45 = arith.constant dense<0.000000e+00> : vector<2x8xf32>
    %150 = vector.multi_reduction <add>, %149, %cst_45 [2] : vector<2x8x8xf32> to vector<2x8xf32>
    %151 = vector.shape_cast %150 : vector<2x8xf32> to vector<2x8x1xf32>
    %152 = tpu.reciprocal %151 {approx = true} : vector<2x8x1xf32> -> vector<2x8x1xf32>
    %153 = vector.broadcast %152 : vector<2x8x1xf32> to vector<2x8x8xf32>
    %154 = arith.mulf %149, %153 : vector<2x8x8xf32>
    "tpu.trace_start"() <{level = 10 : i32, message = "bqk,bkd->bqd"}> : () -> ()
    %cst_46 = arith.constant dense<0.000000e+00> : vector<2x8x4xf32>
    %155 = tpu.matmul %154, %141, %cst_46 {dimension_numbers = #tpu.dot_dimension_numbers<[2], [1], [1], [2], [0, 0, 0, 1, 1, 2], [0], [0]>} : vector<2x8x8xf32>, vector<2x8x4xf32>, vector<2x8x4xf32> -> vector<2x8x4xf32>
    "tpu.trace_stop"() : () -> ()
    %156 = tpu.concatenate %36, %53, %70, %87, %104, %121, %138, %155 in 2 : vector<2x8x4xf32>, vector<2x8x4xf32>, vector<2x8x4xf32>, vector<2x8x4xf32>, vector<2x8x4xf32>, vector<2x8x4xf32>, vector<2x8x4xf32>, vector<2x8x4xf32> -> vector<2x8x32xf32>
    %157 = vector.shape_cast %156 : vector<2x8x32xf32> to vector<16x32xf32>
    %c0_47 = arith.constant 0 : index
    %c0_48 = arith.constant 0 : index
    %158 = vector.load %arg4[%c0_47, %c0_48] : memref<32x32xf32, #tpu.memory_space<vmem>>, vector<32x32xf32>
    %cst_49 = arith.constant dense<0.000000e+00> : vector<16x32xf32>
    %159 = tpu.matmul %157, %158, %cst_49 {dimension_numbers = #tpu.dot_dimension_numbers<[1], [0], [0], [1], [0, 0, 1, 1], [], []>} : vector<16x32xf32>, vector<32x32xf32>, vector<16x32xf32> -> vector<16x32xf32>
    %160 = vector.broadcast %2 : vector<1x32xf32> to vector<16x32xf32>
    %161 = arith.addf %159, %160 : vector<16x32xf32>
    %162 = arith.addf %13, %161 : vector<16x32xf32>
    %cst_50 = arith.constant dense<0.000000e+00> : vector<16xf32>
    %163 = vector.multi_reduction <add>, %162, %cst_50 [1] : vector<16x32xf32> to vector<16xf32>
    %164 = vector.shape_cast %163 : vector<16xf32> to vector<16x1xf32>
    %cst_51 = arith.constant 3.200000e+01 : f32
    %165 = vector.broadcast %cst_51 : f32 to vector<16x1xf32>
    %166 = arith.divf %164, %165 : vector<16x1xf32>
    %167 = vector.broadcast %166 : vector<16x1xf32> to vector<16x32xf32>
    %168 = arith.subf %162, %167 : vector<16x32xf32>
    %169 = arith.mulf %168, %168 : vector<16x32xf32>
    %cst_52 = arith.constant dense<0.000000e+00> : vector<16xf32>
    %170 = vector.multi_reduction <add>, %169, %cst_52 [1] : vector<16x32xf32> to vector<16xf32>
    %171 = vector.shape_cast %170 : vector<16xf32> to vector<16x1xf32>
    %cst_53 = arith.constant 3.200000e+01 : f32
    %172 = vector.broadcast %cst_53 : f32 to vector<16x1xf32>
    %173 = arith.divf %171, %172 : vector<16x1xf32>
    %174 = vector.broadcast %166 : vector<16x1xf32> to vector<16x32xf32>
    %175 = arith.subf %162, %174 : vector<16x32xf32>
    %cst_54 = arith.constant 9.99999974E-6 : f32
    %176 = vector.broadcast %cst_54 : f32 to vector<16x1xf32>
    %177 = arith.addf %173, %176 : vector<16x1xf32>
    %178 = math.rsqrt %177 : vector<16x1xf32>
    %179 = vector.broadcast %178 : vector<16x1xf32> to vector<16x32xf32>
    %180 = arith.mulf %175, %179 : vector<16x32xf32>
    %181 = vector.broadcast %3 : vector<1x32xf32> to vector<16x32xf32>
    %182 = arith.mulf %180, %181 : vector<16x32xf32>
    %183 = vector.broadcast %4 : vector<1x32xf32> to vector<16x32xf32>
    %184 = arith.addf %182, %183 : vector<16x32xf32>
    %185 = arith.truncf %184 : vector<16x32xf32> to vector<16x32xbf16>
    %c0_55 = arith.constant 0 : index
    %c0_56 = arith.constant 0 : index
    %186 = vector.load %arg6[%c0_55, %c0_56] : memref<32x2048xbf16, #tpu.memory_space<vmem>>, vector<32x2048xbf16>
    %cst_57 = arith.constant dense<0.000000e+00> : vector<16x2048xf32>
    %187 = tpu.matmul %185, %186, %cst_57 {dimension_numbers = #tpu.dot_dimension_numbers<[1], [0], [0], [1], [0, 0, 1, 1], [], []>} : vector<16x32xbf16>, vector<32x2048xbf16>, vector<16x2048xf32> -> vector<16x2048xf32>
    %c0_58 = arith.constant 0 : index
    %c0_59 = arith.constant 0 : index
    %188 = vector.load %arg7[%c0_58, %c0_59] : memref<1x2048xf32, #tpu.memory_space<vmem>>, vector<1x2048xf32>
    %189 = vector.broadcast %188 : vector<1x2048xf32> to vector<16x2048xf32>
    %190 = arith.addf %187, %189 : vector<16x2048xf32>
    %cst_60 = arith.constant 0.000000e+00 : f32
    %191 = vector.broadcast %cst_60 : f32 to vector<16x2048xf32>
    %192 = arith.maximumf %190, %191 : vector<16x2048xf32>
    %193 = arith.truncf %192 : vector<16x2048xf32> to vector<16x2048xbf16>
    %c0_61 = arith.constant 0 : index
    %c0_62 = arith.constant 0 : index
    %194 = vector.load %arg8[%c0_61, %c0_62] : memref<2048x32xbf16, #tpu.memory_space<vmem>>, vector<2048x32xbf16>
    %cst_63 = arith.constant dense<0.000000e+00> : vector<16x32xf32>
    %195 = tpu.matmul %193, %194, %cst_63 {dimension_numbers = #tpu.dot_dimension_numbers<[1], [0], [0], [1], [0, 0, 1, 1], [], []>} : vector<16x2048xbf16>, vector<2048x32xbf16>, vector<16x32xf32> -> vector<16x32xf32>
    %196 = vector.broadcast %5 : vector<1x32xf32> to vector<16x32xf32>
    %197 = arith.addf %195, %196 : vector<16x32xf32>
    %198 = arith.addf %184, %197 : vector<16x32xf32>
    %cst_64 = arith.constant dense<0.000000e+00> : vector<16xf32>
    %199 = vector.multi_reduction <add>, %198, %cst_64 [1] : vector<16x32xf32> to vector<16xf32>
    %200 = vector.shape_cast %199 : vector<16xf32> to vector<16x1xf32>
    %cst_65 = arith.constant 3.200000e+01 : f32
    %201 = vector.broadcast %cst_65 : f32 to vector<16x1xf32>
    %202 = arith.divf %200, %201 : vector<16x1xf32>
    %203 = vector.broadcast %202 : vector<16x1xf32> to vector<16x32xf32>
    %204 = arith.subf %198, %203 : vector<16x32xf32>
    %205 = arith.mulf %204, %204 : vector<16x32xf32>
    %cst_66 = arith.constant dense<0.000000e+00> : vector<16xf32>
    %206 = vector.multi_reduction <add>, %205, %cst_66 [1] : vector<16x32xf32> to vector<16xf32>
    %207 = vector.shape_cast %206 : vector<16xf32> to vector<16x1xf32>
    %cst_67 = arith.constant 3.200000e+01 : f32
    %208 = vector.broadcast %cst_67 : f32 to vector<16x1xf32>
    %209 = arith.divf %207, %208 : vector<16x1xf32>
    %210 = vector.broadcast %202 : vector<16x1xf32> to vector<16x32xf32>
    %211 = arith.subf %198, %210 : vector<16x32xf32>
    %cst_68 = arith.constant 9.99999974E-6 : f32
    %212 = vector.broadcast %cst_68 : f32 to vector<16x1xf32>
    %213 = arith.addf %209, %212 : vector<16x1xf32>
    %214 = math.rsqrt %213 : vector<16x1xf32>
    %215 = vector.broadcast %214 : vector<16x1xf32> to vector<16x32xf32>
    %216 = arith.mulf %211, %215 : vector<16x32xf32>
    %217 = vector.broadcast %6 : vector<1x32xf32> to vector<16x32xf32>
    %218 = arith.mulf %216, %217 : vector<16x32xf32>
    %219 = vector.broadcast %7 : vector<1x32xf32> to vector<16x32xf32>
    %220 = arith.addf %218, %219 : vector<16x32xf32>
    %221 = vector.shape_cast %220 : vector<16x32xf32> to vector<2x8x32xf32>
    %cst_69 = arith.constant dense<0.000000e+00> : vector<2x32xf32>
    %222 = vector.multi_reduction <add>, %221, %cst_69 [1] : vector<2x8x32xf32> to vector<2x32xf32>
    %cst_70 = arith.constant 8.000000e+00 : f32
    %223 = vector.broadcast %cst_70 : f32 to vector<2x32xf32>
    %224 = arith.divf %222, %223 : vector<2x32xf32>
    %c0_71 = arith.constant 0 : index
    %c0_72 = arith.constant 0 : index
    %225 = vector.load %arg9[%c0_71, %c0_72] : memref<32x128xf32, #tpu.memory_space<vmem>>, vector<32x128xf32>
    %cst_73 = arith.constant dense<0.000000e+00> : vector<2x128xf32>
    %226 = tpu.matmul %224, %225, %cst_73 {dimension_numbers = #tpu.dot_dimension_numbers<[1], [0], [0], [1], [0, 0, 1, 1], [], []>} : vector<2x32xf32>, vector<32x128xf32>, vector<2x128xf32> -> vector<2x128xf32>
    %c0_74 = arith.constant 0 : index
    %c0_75 = arith.constant 0 : index
    %227 = vector.load %arg10[%c0_74, %c0_75] : memref<1x128xf32, #tpu.memory_space<vmem>>, vector<1x128xf32>
    %228 = vector.broadcast %227 : vector<1x128xf32> to vector<2x128xf32>
    %229 = arith.addf %226, %228 : vector<2x128xf32>
    %230 = tpu.iota {dimensions = array<i32: 1>} : vector<2x128xi32>
    %c16_i32 = arith.constant 16 : i32
    %231 = vector.broadcast %c16_i32 : i32 to vector<2x128xi32>
    %232 = arith.cmpi slt, %230, %231 : vector<2x128xi32>
    %cst_76 = arith.constant -1.000000e+30 : f32
    %233 = vector.broadcast %cst_76 : f32 to vector<2x128xf32>
    %234 = arith.select %232, %229, %233 : vector<2x128xi1>, vector<2x128xf32>
    %cst_77 = arith.constant dense<0xFF800000> : vector<2xf32>
    %235 = vector.multi_reduction <maximumf>, %234, %cst_77 [1] : vector<2x128xf32> to vector<2xf32>
    %236 = vector.shape_cast %235 : vector<2xf32> to vector<2x1xf32>
    %237 = vector.broadcast %236 : vector<2x1xf32> to vector<2x128xf32>
    %238 = arith.subf %229, %237 : vector<2x128xf32>
    %239 = math.exp %238 : vector<2x128xf32>
    %cst_78 = arith.constant 0.000000e+00 : f32
    %240 = vector.broadcast %cst_78 : f32 to vector<2x128xf32>
    %241 = arith.select %232, %239, %240 : vector<2x128xi1>, vector<2x128xf32>
    %cst_79 = arith.constant dense<0.000000e+00> : vector<2xf32>
    %242 = vector.multi_reduction <add>, %241, %cst_79 [1] : vector<2x128xf32> to vector<2xf32>
    %243 = vector.shape_cast %242 : vector<2xf32> to vector<2x1xf32>
    %244 = math.log %243 : vector<2x1xf32>
    %245 = vector.broadcast %236 : vector<2x1xf32> to vector<2x128xf32>
    %246 = arith.subf %229, %245 : vector<2x128xf32>
    %247 = vector.broadcast %244 : vector<2x1xf32> to vector<2x128xf32>
    %248 = arith.subf %246, %247 : vector<2x128xf32>
    %249 = arith.select %232, %248, %229 : vector<2x128xi1>, vector<2x128xf32>
    %c0_80 = arith.constant 0 : index
    %c0_81 = arith.constant 0 : index
    %250 = vector.load %arg11[%c0_80, %c0_81] : memref<2x128xf32, #tpu.memory_space<vmem>>, vector<2x128xf32>
    tpu.vector_store %arg11[%c0_80, %c0_81], %249 {strides = array<i32>} : memref<2x128xf32, #tpu.memory_space<vmem>>, vector<2x128xf32>,
    return
  }
  func.func @transform_0(%arg0: i32) -> (i32, i32) {
    %c0_i32 = arith.constant 0 : i32
    %c0_i32_0 = arith.constant 0 : i32
    return %arg0, %c0_i32 : i32, i32
  }
  func.func @transform_1(%arg0: i32) -> (i32, i32) {
    %c0_i32 = arith.constant 0 : i32
    %c0_i32_0 = arith.constant 0 : i32
    %c0_i32_1 = arith.constant 0 : i32
    return %c0_i32, %c0_i32_0 : i32, i32
  }
  func.func @transform_2(%arg0: i32) -> (i32, i32) {
    %c0_i32 = arith.constant 0 : i32
    %c0_i32_0 = arith.constant 0 : i32
    %c0_i32_1 = arith.constant 0 : i32
    return %c0_i32, %c0_i32_0 : i32, i32
  }
  func.func @transform_3(%arg0: i32) -> (i32, i32) {
    %c0_i32 = arith.constant 0 : i32
    %c0_i32_0 = arith.constant 0 : i32
    %c0_i32_1 = arith.constant 0 : i32
    return %c0_i32, %c0_i32_0 : i32, i32
  }
  func.func @transform_4(%arg0: i32) -> (i32, i32) {
    %c0_i32 = arith.constant 0 : i32
    %c0_i32_0 = arith.constant 0 : i32
    %c0_i32_1 = arith.constant 0 : i32
    return %c0_i32, %c0_i32_0 : i32, i32
  }
  func.func @transform_5(%arg0: i32) -> (i32, i32) {
    %c0_i32 = arith.constant 0 : i32
    %c0_i32_0 = arith.constant 0 : i32
    %c0_i32_1 = arith.constant 0 : i32
    return %c0_i32, %c0_i32_0 : i32, i32
  }
  func.func @transform_6(%arg0: i32) -> (i32, i32) {
    %c0_i32 = arith.constant 0 : i32
    %c0_i32_0 = arith.constant 0 : i32
    %c0_i32_1 = arith.constant 0 : i32
    return %c0_i32, %c0_i32_0 : i32, i32
  }
  func.func @transform_7(%arg0: i32) -> (i32, i32) {
    %c0_i32 = arith.constant 0 : i32
    %c0_i32_0 = arith.constant 0 : i32
    %c0_i32_1 = arith.constant 0 : i32
    return %c0_i32, %c0_i32_0 : i32, i32
  }
  func.func @transform_8(%arg0: i32) -> (i32, i32) {
    %c0_i32 = arith.constant 0 : i32
    %c0_i32_0 = arith.constant 0 : i32
    %c0_i32_1 = arith.constant 0 : i32
    return %c0_i32, %c0_i32_0 : i32, i32
  }
  func.func @transform_9(%arg0: i32) -> (i32, i32) {
    %c0_i32 = arith.constant 0 : i32
    %c0_i32_0 = arith.constant 0 : i32
    %c0_i32_1 = arith.constant 0 : i32
    return %c0_i32, %c0_i32_0 : i32, i32
  }
  func.func @transform_10(%arg0: i32) -> (i32, i32) {
    %c0_i32 = arith.constant 0 : i32
    %c0_i32_0 = arith.constant 0 : i32
    return %arg0, %c0_i32 : i32, i32
  }
}

</mosaic_0001>

<llo_original>
// kernel: tpu_custom_call.1
$region0: #{tpu_custom_call.1}
  #allocation0 [shape = 'u32[]', space=smem, size = 0x4, offset = 0x4, fixed_abs, tag = 'smem constant byte address 0x4 - core index']
  #allocation1 [shape = 'u32[144,128]{1,0:T(1,128)}', space=vmem, size = 0x12000, scoped, tag = 'internal scratch']
  %s0 = inlined_call_operand.vmem [shape: f32[16,22], index: 0, kind: input, shape index: {}]
  %s1 = inlined_call_operand.vmem [shape: f32[22,128], index: 1, kind: input, shape index: {}]
  %s2 = inlined_call_operand.vmem [shape: f32[1,128], index: 2, kind: input, shape index: {}]
  %s3 = inlined_call_operand.vmem [shape: f32[32,32], index: 3, kind: input, shape index: {}]
  %s4 = inlined_call_operand.vmem [shape: f32[6,32], index: 4, kind: input, shape index: {}]
  %s5 = inlined_call_operand.vmem [shape: bf16[32,2048], index: 5, kind: input, shape index: {}]
  %s6 = inlined_call_operand.vmem [shape: f32[1,2048], index: 6, kind: input, shape index: {}]
  %s7 = inlined_call_operand.vmem [shape: bf16[2048,32], index: 7, kind: input, shape index: {}]
  %s8 = inlined_call_operand.vmem [shape: f32[32,128], index: 8, kind: input, shape index: {}]
  %s9 = inlined_call_operand.vmem [shape: f32[1,128], index: 9, kind: input, shape index: {}]
  %s10 = inlined_call_operand.hbm [shape: f32[2,128], index: 10, kind: output, shape index: {}]
  %s11 = sld [smem:[#allocation0]]
  $region50: #{tpu_custom_call.1} parent=0
    _
  %s13 = ssub.s32 1, %s11
  %s14 = scalar_select 0, %s13, %s11
  $region1: #{tpu_custom_call.1} parent=0
    #allocation2 [shape = 'u8[1024]{0}', space=vmem, size = 0x400, scoped, tag = 'output window, operand 0, single buffered']
    #allocation3 [shape = 's32[1]{0}', space=sflag, size = 0x4, scoped, tag = 'scoped memory for tpu_custom_call.1']
    %15 = vsyncpa [#allocation3], 0
    // Predicated region
    $region2: #{tpu_custom_call.1} parent=1 // pred_check
      _
    $region3: #{tpu_custom_call.1} parent=1 // pred_check_branch
      %17 = sbr.rel (0) target = $region5
    $region4: #{tpu_custom_call.1} parent=1 // pred_region
      _
    $region5: #{tpu_custom_call.1} parent=1 // pred_fallthru
      _
    // Predicated region
    $region6: #{tpu_custom_call.1} parent=1 // pred_check
      _
    $region7: #{tpu_custom_call.1} parent=1 // pred_check_branch
      %19 = sbr.rel (0) target = $region9
    $region8: #{tpu_custom_call.1} parent=1 // pred_region
      _
    $region9: #{tpu_custom_call.1} parent=1 // pred_fallthru
      _
    // Predicated region
    $region10: #{tpu_custom_call.1} parent=1 // pred_check
      _
    $region11: #{tpu_custom_call.1} parent=1 // pred_check_branch
      %21 = sbr.rel (0) target = $region13
    $region12: #{tpu_custom_call.1} parent=1 // pred_region
      _
    $region13: #{tpu_custom_call.1} parent=1 // pred_fallthru
      _
    // Predicated region
    $region14: #{tpu_custom_call.1} parent=1 // pred_check
      _
    $region15: #{tpu_custom_call.1} parent=1 // pred_check_branch
      %23 = sbr.rel (0) target = $region17
    $region16: #{tpu_custom_call.1} parent=1 // pred_region
      _
    $region17: #{tpu_custom_call.1} parent=1 // pred_fallthru
      _
    // Predicated region
    $region18: #{tpu_custom_call.1} parent=1 // pred_check
      _
    $region19: #{tpu_custom_call.1} parent=1 // pred_check_branch
      %25 = sbr.rel (0) target = $region21
    $region20: #{tpu_custom_call.1} parent=1 // pred_region
      _
    $region21: #{tpu_custom_call.1} parent=1 // pred_fallthru
      _
    // Predicated region
    $region22: #{tpu_custom_call.1} parent=1 // pred_check
      _
    $region23: #{tpu_custom_call.1} parent=1 // pred_check_branch
      %27 = sbr.rel (0) target = $region25
    $region24: #{tpu_custom_call.1} parent=1 // pred_region
      _
    $region25: #{tpu_custom_call.1} parent=1 // pred_fallthru
      _
    // Predicated region
    $region26: #{tpu_custom_call.1} parent=1 // pred_check
      _
    $region27: #{tpu_custom_call.1} parent=1 // pred_check_branch
      %29 = sbr.rel (0) target = $region29
    $region28: #{tpu_custom_call.1} parent=1 // pred_region
      _
    $region29: #{tpu_custom_call.1} parent=1 // pred_fallthru
      _
    // Predicated region
    $region30: #{tpu_custom_call.1} parent=1 // pred_check
      _
    $region31: #{tpu_custom_call.1} parent=1 // pred_check_branch
      %31 = sbr.rel (0) target = $region33
    $region32: #{tpu_custom_call.1} parent=1 // pred_region
      _
    $region33: #{tpu_custom_call.1} parent=1 // pred_fallthru
      _
    // Predicated region
    $region34: #{tpu_custom_call.1} parent=1 // pred_check
      _
    $region35: #{tpu_custom_call.1} parent=1 // pred_check_branch
      %33 = sbr.rel (0) target = $region37
    $region36: #{tpu_custom_call.1} parent=1 // pred_region
      _
    $region37: #{tpu_custom_call.1} parent=1 // pred_fallthru
      _
    // Predicated region
    $region38: #{tpu_custom_call.1} parent=1 // pred_check
      _
    $region39: #{tpu_custom_call.1} parent=1 // pred_check_branch
      %35 = sbr.rel (0) target = $region41
    $region40: #{tpu_custom_call.1} parent=1 // pred_region
      _
    $region41: #{tpu_custom_call.1} parent=1 // pred_fallthru
      _
    %v37 = vld [vmem:[%s0] sm:$0xff]
    %v38 = vld [vmem:[%s0 + $0x8] sm:$0xff]
    %v39 = vld [vmem:[%s4] sm:$0x3f]
    %v40 = vld [vmem:[%s1] sm:$0xff]
    %v41 = vld [vmem:[%s1 + $0x8] sm:$0xff]
    %v42 = vld [vmem:[%s1 + $0x10] sm:$0x3f]
    %v43 = vld [vmem:[%s2] sm:$0x1]
    %v45 = vlaneseq
    %v46 = vshrl.u32 %v45, 7
    %v47 = vsub.s32 0, %v46
    %v48 = vrot.slane %v43, %v47
    %vm50 = vcmask 179200
    %v52 = vsel %vm50, %v37, 0
    %v55 = vsel %vm50, %v38, 0
    %vm57 = vcmask 1045504
    %v59 = vsel %vm57, %v42, 0
    %61 = vmatprep.subr.mxu0 0.0
    %62 = vmatpush1.msra.mxu0 %v40
    %63 = vmatprep.subr.mxu0 0.0
    %64 = vmatpush1.msra.mxu0 %v41
    %65 = vmatprep.subr.mxu0 0.0
    %66 = vmatpush1.msra.mxu0 %v59
    %67 = vmatprep.subr.mxu0 0.0
    %68 = vmatpush1.msra.mxu0 0.0
    %69 = vmatprep.subr.mxu0 0.0
    %70 = vmatpush1.msra.mxu0 0.0
    %71 = vmatprep.subr.mxu0 0.0
    %72 = vmatpush1.msra.mxu0 0.0
    %73 = vmatprep.subr.mxu0 0.0
    %74 = vmatpush1.msra.mxu0 0.0
    %75 = vmatprep.subr.mxu0 0.0
    %76 = vmatpush1.msra.mxu0 0.0
    %77 = vmatprep.subr.mxu0 0.0
    %78 = vmatpush1.msra.mxu0 0.0
    %79 = vmatprep.subr.mxu0 0.0
    %80 = vmatpush1.msra.mxu0 0.0
    %81 = vmatprep.subr.mxu0 0.0
    %82 = vmatpush1.msra.mxu0 0.0
    %83 = vmatprep.subr.mxu0 0.0
    %84 = vmatpush1.msra.mxu0 0.0
    %85 = vmatprep.subr.mxu0 0.0
    %86 = vmatpush1.msra.mxu0 0.0
    %87 = vmatprep.subr.mxu0 0.0
    %88 = vmatpush1.msra.mxu0 0.0
    %89 = vmatprep.subr.mxu0 0.0
    %90 = vmatpush1.msra.mxu0 0.0
    %91 = vmatprep.subr.mxu0 0.0
    %92 = vmatpush1.msra.mxu0 0.0
    %93 = vmatprep.subr.mxu0 0.0
    %94 = vmatpush1.msra.mxu0 0.0
    %95 = vmatprep.subr.mxu0 0.0
    %96 = vmatpush1.msra.mxu0 0.0
    %97 = vmatprep.subr.mxu0 0.0
    %98 = vmatpush1.msra.mxu0 0.0
    %99 = vmatprep.subr.mxu0 0.0
    %100 = vmatpush1.msra.mxu0 0.0
    %101 = vmatprep.subr.mxu0 0.0
    %102 = vmatpush1.msra.mxu0 0.0
    %103 = vmatprep.subr.mxu0 0.0
    %104 = vmatpush1.msra.mxu0 0.0
    %105 = vmatprep.subr.mxu0 0.0
    %106 = vmatpush1.msra.mxu0 0.0
    %107 = vmatprep.subr.mxu0 0.0
    %108 = vmatpush1.msra.mxu0 0.0
    %109 = vmatprep.subr.mxu0 0.0
    %110 = vmatpush1.msra.mxu0 0.0
    %111 = vmatprep.subr.mxu0 0.0
    %112 = vmatpush1.msra.mxu0 0.0
    %113 = vmatprep.subr.mxu0 0.0
    %114 = vmatpush1.msra.mxu0 0.0
    %115 = vmatprep.subr.mxu0 0.0
    %116 = vmatpush1.msra.mxu0 0.0
    %117 = vmatprep.subr.mxu0 0.0
    %118 = vmatpush1.msra.mxu0 0.0
    %119 = vmatprep.subr.mxu0 0.0
    %120 = vmatpush1.msra.mxu0 0.0
    %121 = vmatprep.subr.mxu0 0.0
    %122 = vmatpush1.msra.mxu0 0.0
    %123 = vmatprep.subr.mxu0 0.0
    %124 = vmatpush1.msra.mxu0 0.0
    %125 = vmatprep.mubr.f32.mxu0 0.0
    %126 = vmatmul.mubr.f32.gmra.mrb[0].mxu0 %v52
    %v127 = vpop.f32.mrb[0].mxu0
    %v128 = vadd.f32 %v48, %v127
    %v129 = vpop.f32.mrb[0].mxu0
    %130 = vmatprep.mubr.f32.mxu0 0.0
    %131 = vmatmul.mubr.f32.gmra.mrb[0].mxu0 %v55
    %v132 = vpop.f32.mrb[0].mxu0
    %v133 = vadd.f32 %v48, %v132
    %v134 = vpop.f32.mrb[0].mxu0
    %135 = vdwg.mxu0
    %137 = vrot.lane.b32.xlu0 %v128, 96
    %v138 = vpop.permute.xlu0 %137
    %139 = vrot.lane.b32.xlu0 %v128, 64
    %v140 = vpop.permute.xlu0 %139
    %vm141 = vcmask 31744
    %v142 = vsel %vm141, %v138, 0
    %v144 = vsel %vm141, %v140, 0
    %146 = vmatprep.subr.mxu0 0.0
    %147 = vmatpush1.xpose.msra.mxu0 %v144
    %148 = vmatprep.subr.mxu0 0.0
    %149 = vmatpush1.xpose.msra.mxu0 0.0
    %150 = vmatprep.subr.mxu0 0.0
    %151 = vmatpush1.xpose.msra.mxu0 0.0
    %152 = vmatprep.subr.mxu0 0.0
    %153 = vmatpush1.xpose.msra.mxu0 0.0
    %154 = vmatprep.subr.mxu0 0.0
    %155 = vmatpush1.xpose.msra.mxu0 0.0
    %156 = vmatprep.subr.mxu0 0.0
    %157 = vmatpush1.xpose.msra.mxu0 0.0
    %158 = vmatprep.subr.mxu0 0.0
    %159 = vmatpush1.xpose.msra.mxu0 0.0
    %160 = vmatprep.subr.mxu0 0.0
    %161 = vmatpush1.xpose.msra.mxu0 0.0
    %162 = vmatprep.subr.mxu0 0.0
    %163 = vmatpush1.xpose.msra.mxu0 0.0
    %164 = vmatprep.subr.mxu0 0.0
    %165 = vmatpush1.xpose.msra.mxu0 0.0
    %166 = vmatprep.subr.mxu0 0.0
    %167 = vmatpush1.xpose.msra.mxu0 0.0
    %168 = vmatprep.subr.mxu0 0.0
    %169 = vmatpush1.xpose.msra.mxu0 0.0
    %170 = vmatprep.subr.mxu0 0.0
    %171 = vmatpush1.xpose.msra.mxu0 0.0
    %172 = vmatprep.subr.mxu0 0.0
    %173 = vmatpush1.xpose.msra.mxu0 0.0
    %174 = vmatprep.subr.mxu0 0.0
    %175 = vmatpush1.xpose.msra.mxu0 0.0
    %176 = vmatprep.subr.mxu0 0.0
    %177 = vmatpush1.xpose.msra.mxu0 0.0
    %178 = vmatprep.subr.mxu0 0.0
    %179 = vmatpush1.xpose.msra.mxu0 0.0
    %180 = vmatprep.subr.mxu0 0.0
    %181 = vmatpush1.xpose.msra.mxu0 0.0
    %182 = vmatprep.subr.mxu0 0.0
    %183 = vmatpush1.xpose.msra.mxu0 0.0
    %184 = vmatprep.subr.mxu0 0.0
    %185 = vmatpush1.xpose.msra.mxu0 0.0
    %186 = vmatprep.subr.mxu0 0.0
    %187 = vmatpush1.xpose.msra.mxu0 0.0
    %188 = vmatprep.subr.mxu0 0.0
    %189 = vmatpush1.xpose.msra.mxu0 0.0
    %190 = vmatprep.subr.mxu0 0.0
    %191 = vmatpush1.xpose.msra.mxu0 0.0
    %192 = vmatprep.subr.mxu0 0.0
    %193 = vmatpush1.xpose.msra.mxu0 0.0
    %194 = vmatprep.subr.mxu0 0.0
    %195 = vmatpush1.xpose.msra.mxu0 0.0
    %196 = vmatprep.subr.mxu0 0.0
    %197 = vmatpush1.xpose.msra.mxu0 0.0
    %198 = vmatprep.subr.mxu0 0.0
    %199 = vmatpush1.xpose.msra.mxu0 0.0
    %200 = vmatprep.subr.mxu0 0.0
    %201 = vmatpush1.xpose.msra.mxu0 0.0
    %202 = vmatprep.subr.mxu0 0.0
    %203 = vmatpush1.xpose.msra.mxu0 0.0
    %204 = vmatprep.subr.mxu0 0.0
    %205 = vmatpush1.xpose.msra.mxu0 0.0
    %206 = vmatprep.subr.mxu0 0.0
    %207 = vmatpush1.xpose.msra.mxu0 0.0
    %208 = vmatprep.subr.mxu0 0.0
    %209 = vmatpush1.xpose.msra.mxu0 0.0
    %210 = vmatprep.mubr.f32.mxu0 0.0
    %211 = vmatmul.mubr.f32.gmra.mrb[0].mxu0 %v142
    %v212 = vpop.f32.mrb[0].mxu0
    %v213 = vadd.f32 0.0, %v212
    %v214 = vpop.f32.mrb[0].mxu0
    %215 = vdwg.mxu0
    %217 = vrot.lane.b32.xlu0 %v133, 96
    %v218 = vpop.permute.xlu0 %217
    %219 = vrot.lane.b32.xlu0 %v133, 64
    %v220 = vpop.permute.xlu0 %219
    %v221 = vsel %vm141, %v218, 0
    %v223 = vsel %vm141, %v220, 0
    %225 = vmatprep.subr.mxu0 0.0
    %226 = vmatpush1.xpose.msra.mxu0 %v223
    %227 = vmatprep.subr.mxu0 0.0
    %228 = vmatpush1.xpose.msra.mxu0 0.0
    %229 = vmatprep.subr.mxu0 0.0
    %230 = vmatpush1.xpose.msra.mxu0 0.0
    %231 = vmatprep.subr.mxu0 0.0
    %232 = vmatpush1.xpose.msra.mxu0 0.0
    %233 = vmatprep.subr.mxu0 0.0
    %234 = vmatpush1.xpose.msra.mxu0 0.0
    %235 = vmatprep.subr.mxu0 0.0
    %236 = vmatpush1.xpose.msra.mxu0 0.0
    %237 = vmatprep.subr.mxu0 0.0
    %238 = vmatpush1.xpose.msra.mxu0 0.0
    %239 = vmatprep.subr.mxu0 0.0
    %240 = vmatpush1.xpose.msra.mxu0 0.0
    %241 = vmatprep.subr.mxu0 0.0
    %242 = vmatpush1.xpose.msra.mxu0 0.0
    %243 = vmatprep.subr.mxu0 0.0
    %244 = vmatpush1.xpose.msra.mxu0 0.0
    %245 = vmatprep.subr.mxu0 0.0
    %246 = vmatpush1.xpose.msra.mxu0 0.0
    %247 = vmatprep.subr.mxu0 0.0
    %248 = vmatpush1.xpose.msra.mxu0 0.0
    %249 = vmatprep.subr.mxu0 0.0
    %250 = vmatpush1.xpose.msra.mxu0 0.0
    %251 = vmatprep.subr.mxu0 0.0
    %252 = vmatpush1.xpose.msra.mxu0 0.0
    %253 = vmatprep.subr.mxu0 0.0
    %254 = vmatpush1.xpose.msra.mxu0 0.0
    %255 = vmatprep.subr.mxu0 0.0
    %256 = vmatpush1.xpose.msra.mxu0 0.0
    %257 = vmatprep.subr.mxu0 0.0
    %258 = vmatpush1.xpose.msra.mxu0 0.0
    %259 = vmatprep.subr.mxu0 0.0
    %260 = vmatpush1.xpose.msra.mxu0 0.0
    %261 = vmatprep.subr.mxu0 0.0
    %262 = vmatpush1.xpose.msra.mxu0 0.0
    %263 = vmatprep.subr.mxu0 0.0
    %264 = vmatpush1.xpose.msra.mxu0 0.0
    %265 = vmatprep.subr.mxu0 0.0
    %266 = vmatpush1.xpose.msra.mxu0 0.0
    %267 = vmatprep.subr.mxu0 0.0
    %268 = vmatpush1.xpose.msra.mxu0 0.0
    %269 = vmatprep.subr.mxu0 0.0
    %270 = vmatpush1.xpose.msra.mxu0 0.0
    %271 = vmatprep.subr.mxu0 0.0
    %272 = vmatpush1.xpose.msra.mxu0 0.0
    %273 = vmatprep.subr.mxu0 0.0
    %274 = vmatpush1.xpose.msra.mxu0 0.0
    %275 = vmatprep.subr.mxu0 0.0
    %276 = vmatpush1.xpose.msra.mxu0 0.0
    %277 = vmatprep.subr.mxu0 0.0
    %278 = vmatpush1.xpose.msra.mxu0 0.0
    %279 = vmatprep.subr.mxu0 0.0
    %280 = vmatpush1.xpose.msra.mxu0 0.0
    %281 = vmatprep.subr.mxu0 0.0
    %282 = vmatpush1.xpose.msra.mxu0 0.0
    %283 = vmatprep.subr.mxu0 0.0
    %284 = vmatpush1.xpose.msra.mxu0 0.0
    %285 = vmatprep.subr.mxu0 0.0
    %286 = vmatpush1.xpose.msra.mxu0 0.0
    %287 = vmatprep.subr.mxu0 0.0
    %288 = vmatpush1.xpose.msra.mxu0 0.0
    %289 = vmatprep.mubr.f32.mxu0 0.0
    %290 = vmatmul.mubr.f32.gmra.mrb[0].mxu0 %v221
    %v291 = vpop.f32.mrb[0].mxu0
    %v292 = vadd.f32 0.0, %v291
    %v293 = vpop.f32.mrb[0].mxu0
    %294 = vdwg.mxu0
    %v295 = vmul.f32 %v213, 0.5
    %v296 = vmul.f32 %v292, 0.5
    %vm297 = vcmask 64512
    %v298 = vsel %vm297, %v295, -inf
    %299 = vmax.xlane.f32.xlu0 %v298
    %v300 = vpop.xlane.xlu0 %299
    %v301 = vsel %vm297, %v296, -inf
    %302 = vmax.xlane.f32.xlu0 %v301
    %v303 = vpop.xlane.xlu0 %302
    %v304 = vsub.f32 %v295, %v300
    %v305 = vsub.f32 %v296, %v303
    %v306 = vmul.f32 %v304, 1.442695
    %v307 = vpow.pop %v306
    %v308 = vmul.f32 %v305, 1.442695
    %v309 = vpow.pop %v308
    %v310 = vsel %vm297, %v307, 0.0
    %311 = vadd.xlane.f32.xlu0 %v310
    %v312 = vpop.xlane.xlu0 %311
    %v313 = vsel %vm297, %v309, 0.0
    %314 = vadd.xlane.f32.xlu0 %v313
    %v315 = vpop.xlane.xlu0 %314
    %v316 = vrcp.pop %v312
    %v317 = vrcp.pop %v315
    %v318 = vmul.f32 %v307, %v316
    %v319 = vmul.f32 %v309, %v317
    %320 = vrot.lane.b32.xlu0 %v128, 32
    %v321 = vpop.permute.xlu0 %320
    %v324 = vsel %vm297, %v318, 0
    %326 = vmatprep.subr.mxu0 0.0
    %327 = vmatpush1.msra.mxu0 %v321
    %328 = vmatprep.subr.mxu0 0.0
    %329 = vmatpush1.msra.mxu0 0.0
    %330 = vmatprep.subr.mxu0 0.0
    %331 = vmatpush1.msra.mxu0 0.0
    %332 = vmatprep.subr.mxu0 0.0
    %333 = vmatpush1.msra.mxu0 0.0
    %334 = vmatprep.subr.mxu0 0.0
    %335 = vmatpush1.msra.mxu0 0.0
    %336 = vmatprep.subr.mxu0 0.0
    %337 = vmatpush1.msra.mxu0 0.0
    %338 = vmatprep.subr.mxu0 0.0
    %339 = vmatpush1.msra.mxu0 0.0
    %340 = vmatprep.subr.mxu0 0.0
    %341 = vmatpush1.msra.mxu0 0.0
    %342 = vmatprep.subr.mxu0 0.0
    %343 = vmatpush1.msra.mxu0 0.0
    %344 = vmatprep.subr.mxu0 0.0
    %345 = vmatpush1.msra.mxu0 0.0
    %346 = vmatprep.subr.mxu0 0.0
    %347 = vmatpush1.msra.mxu0 0.0
    %348 = vmatprep.subr.mxu0 0.0
    %349 = vmatpush1.msra.mxu0 0.0
    %350 = vmatprep.subr.mxu0 0.0
    %351 = vmatpush1.msra.mxu0 0.0
    %352 = vmatprep.subr.mxu0 0.0
    %353 = vmatpush1.msra.mxu0 0.0
    %354 = vmatprep.subr.mxu0 0.0
    %355 = vmatpush1.msra.mxu0 0.0
    %356 = vmatprep.subr.mxu0 0.0
    %357 = vmatpush1.msra.mxu0 0.0
    %358 = vmatprep.subr.mxu0 0.0
    %359 = vmatpush1.msra.mxu0 0.0
    %360 = vmatprep.subr.mxu0 0.0
    %361 = vmatpush1.msra.mxu0 0.0
    %362 = vmatprep.subr.mxu0 0.0
    %363 = vmatpush1.msra.mxu0 0.0
    %364 = vmatprep.subr.mxu0 0.0
    %365 = vmatpush1.msra.mxu0 0.0
    %366 = vmatprep.subr.mxu0 0.0
    %367 = vmatpush1.msra.mxu0 0.0
    %368 = vmatprep.subr.mxu0 0.0
    %369 = vmatpush1.msra.mxu0 0.0
    %370 = vmatprep.subr.mxu0 0.0
    %371 = vmatpush1.msra.mxu0 0.0
    %372 = vmatprep.subr.mxu0 0.0
    %373 = vmatpush1.msra.mxu0 0.0
    %374 = vmatprep.subr.mxu0 0.0
    %375 = vmatpush1.msra.mxu0 0.0
    %376 = vmatprep.subr.mxu0 0.0
    %377 = vmatpush1.msra.mxu0 0.0
    %378 = vmatprep.subr.mxu0 0.0
    %379 = vmatpush1.msra.mxu0 0.0
    %380 = vmatprep.subr.mxu0 0.0
    %381 = vmatpush1.msra.mxu0 0.0
    %382 = vmatprep.subr.mxu0 0.0
    %383 = vmatpush1.msra.mxu0 0.0
    %384 = vmatprep.subr.mxu0 0.0
    %385 = vmatpush1.msra.mxu0 0.0
    %386 = vmatprep.subr.mxu0 0.0
    %387 = vmatpush1.msra.mxu0 0.0
    %388 = vmatprep.subr.mxu0 0.0
    %389 = vmatpush1.msra.mxu0 0.0
    %390 = vmatprep.mubr.f32.mxu0 0.0
    %391 = vmatmul.mubr.f32.gmra.mrb[0].mxu0 %v324
    %v392 = vpop.f32.mrb[0].mxu0
    %v393 = vadd.f32 0.0, %v392
    %v394 = vpop.f32.mrb[0].mxu0
    %395 = vdwg.mxu0
    %396 = vrot.lane.b32.xlu0 %v133, 32
    %v397 = vpop.permute.xlu0 %396
    %v400 = vsel %vm297, %v319, 0
    %402 = vmatprep.subr.mxu0 0.0
    %403 = vmatpush1.msra.mxu0 %v397
    %404 = vmatprep.subr.mxu0 0.0
    %405 = vmatpush1.msra.mxu0 0.0
    %406 = vmatprep.subr.mxu0 0.0
    %407 = vmatpush1.msra.mxu0 0.0
    %408 = vmatprep.subr.mxu0 0.0
    %409 = vmatpush1.msra.mxu0 0.0
    %410 = vmatprep.subr.mxu0 0.0
    %411 = vmatpush1.msra.mxu0 0.0
    %412 = vmatprep.subr.mxu0 0.0
    %413 = vmatpush1.msra.mxu0 0.0
    %414 = vmatprep.subr.mxu0 0.0
    %415 = vmatpush1.msra.mxu0 0.0
    %416 = vmatprep.subr.mxu0 0.0
    %417 = vmatpush1.msra.mxu0 0.0
    %418 = vmatprep.subr.mxu0 0.0
    %419 = vmatpush1.msra.mxu0 0.0
    %420 = vmatprep.subr.mxu0 0.0
    %421 = vmatpush1.msra.mxu0 0.0
    %422 = vmatprep.subr.mxu0 0.0
    %423 = vmatpush1.msra.mxu0 0.0
    %424 = vmatprep.subr.mxu0 0.0
    %425 = vmatpush1.msra.mxu0 0.0
    %426 = vmatprep.subr.mxu0 0.0
    %427 = vmatpush1.msra.mxu0 0.0
    %428 = vmatprep.subr.mxu0 0.0
    %429 = vmatpush1.msra.mxu0 0.0
    %430 = vmatprep.subr.mxu0 0.0
    %431 = vmatpush1.msra.mxu0 0.0
    %432 = vmatprep.subr.mxu0 0.0
    %433 = vmatpush1.msra.mxu0 0.0
    %434 = vmatprep.subr.mxu0 0.0
    %435 = vmatpush1.msra.mxu0 0.0
    %436 = vmatprep.subr.mxu0 0.0
    %437 = vmatpush1.msra.mxu0 0.0
    %438 = vmatprep.subr.mxu0 0.0
    %439 = vmatpush1.msra.mxu0 0.0
    %440 = vmatprep.subr.mxu0 0.0
    %441 = vmatpush1.msra.mxu0 0.0
    %442 = vmatprep.subr.mxu0 0.0
    %443 = vmatpush1.msra.mxu0 0.0
    %444 = vmatprep.subr.mxu0 0.0
    %445 = vmatpush1.msra.mxu0 0.0
    %446 = vmatprep.subr.mxu0 0.0
    %447 = vmatpush1.msra.mxu0 0.0
    %448 = vmatprep.subr.mxu0 0.0
    %449 = vmatpush1.msra.mxu0 0.0
    %450 = vmatprep.subr.mxu0 0.0
    %451 = vmatpush1.msra.mxu0 0.0
    %452 = vmatprep.subr.mxu0 0.0
    %453 = vmatpush1.msra.mxu0 0.0
    %454 = vmatprep.subr.mxu0 0.0
    %455 = vmatpush1.msra.mxu0 0.0
    %456 = vmatprep.subr.mxu0 0.0
    %457 = vmatpush1.msra.mxu0 0.0
    %458 = vmatprep.subr.mxu0 0.0
    %459 = vmatpush1.msra.mxu0 0.0
    %460 = vmatprep.subr.mxu0 0.0
    %461 = vmatpush1.msra.mxu0 0.0
    %462 = vmatprep.subr.mxu0 0.0
    %463 = vmatpush1.msra.mxu0 0.0
    %464 = vmatprep.subr.mxu0 0.0
    %465 = vmatpush1.msra.mxu0 0.0
    %466 = vmatprep.mubr.f32.mxu0 0.0
    %467 = vmatmul.mubr.f32.gmra.mrb[0].mxu0 %v400
    %v468 = vpop.f32.mrb[0].mxu0
    %v469 = vadd.f32 0.0, %v468
    %v470 = vpop.f32.mrb[0].mxu0
    %471 = vdwg.mxu0
    %472 = vrot.lane.b32.xlu0 %v128, 92
    %v473 = vpop.permute.xlu0 %472
    %474 = vrot.lane.b32.xlu0 %v128, 60
    %v475 = vpop.permute.xlu0 %474
    %v476 = vsel %vm141, %v473, 0
    %v478 = vsel %vm141, %v475, 0
    %480 = vmatprep.subr.mxu0 0.0
    %481 = vmatpush1.xpose.msra.mxu0 %v478
    %482 = vmatprep.subr.mxu0 0.0
    %483 = vmatpush1.xpose.msra.mxu0 0.0
    %484 = vmatprep.subr.mxu0 0.0
    %485 = vmatpush1.xpose.msra.mxu0 0.0
    %486 = vmatprep.subr.mxu0 0.0
    %487 = vmatpush1.xpose.msra.mxu0 0.0
    %488 = vmatprep.subr.mxu0 0.0
    %489 = vmatpush1.xpose.msra.mxu0 0.0
    %490 = vmatprep.subr.mxu0 0.0
    %491 = vmatpush1.xpose.msra.mxu0 0.0
    %492 = vmatprep.subr.mxu0 0.0
    %493 = vmatpush1.xpose.msra.mxu0 0.0
    %494 = vmatprep.subr.mxu0 0.0
    %495 = vmatpush1.xpose.msra.mxu0 0.0
    %496 = vmatprep.subr.mxu0 0.0
    %497 = vmatpush1.xpose.msra.mxu0 0.0
    %498 = vmatprep.subr.mxu0 0.0
    %499 = vmatpush1.xpose.msra.mxu0 0.0
    %500 = vmatprep.subr.mxu0 0.0
    %501 = vmatpush1.xpose.msra.mxu0 0.0
    %502 = vmatprep.subr.mxu0 0.0
    %503 = vmatpush1.xpose.msra.mxu0 0.0
    %504 = vmatprep.subr.mxu0 0.0
    %505 = vmatpush1.xpose.msra.mxu0 0.0
    %506 = vmatprep.subr.mxu0 0.0
    %507 = vmatpush1.xpose.msra.mxu0 0.0
    %508 = vmatprep.subr.mxu0 0.0
    %509 = vmatpush1.xpose.msra.mxu0 0.0
    %510 = vmatprep.subr.mxu0 0.0
    %511 = vmatpush1.xpose.msra.mxu0 0.0
    %512 = vmatprep.subr.mxu0 0.0
    %513 = vmatpush1.xpose.msra.mxu0 0.0
    %514 = vmatprep.subr.mxu0 0.0
    %515 = vmatpush1.xpose.msra.mxu0 0.0
    %516 = vmatprep.subr.mxu0 0.0
    %517 = vmatpush1.xpose.msra.mxu0 0.0
    %518 = vmatprep.subr.mxu0 0.0
    %519 = vmatpush1.xpose.msra.mxu0 0.0
    %520 = vmatprep.subr.mxu0 0.0
    %521 = vmatpush1.xpose.msra.mxu0 0.0
    %522 = vmatprep.subr.mxu0 0.0
    %523 = vmatpush1.xpose.msra.mxu0 0.0
    %524 = vmatprep.subr.mxu0 0.0
    %525 = vmatpush1.xpose.msra.mxu0 0.0
    %526 = vmatprep.subr.mxu0 0.0
    %527 = vmatpush1.xpose.msra.mxu0 0.0
    %528 = vmatprep.subr.mxu0 0.0
    %529 = vmatpush1.xpose.msra.mxu0 0.0
    %530 = vmatprep.subr.mxu0 0.0
    %531 = vmatpush1.xpose.msra.mxu0 0.0
    %532 = vmatprep.subr.mxu0 0.0
    %533 = vmatpush1.xpose.msra.mxu0 0.0
    %534 = vmatprep.subr.mxu0 0.0
    %535 = vmatpush1.xpose.msra.mxu0 0.0
    %536 = vmatprep.subr.mxu0 0.0
    %537 = vmatpush1.xpose.msra.mxu0 0.0
    %538 = vmatprep.subr.mxu0 0.0
    %539 = vmatpush1.xpose.msra.mxu0 0.0
    %540 = vmatprep.subr.mxu0 0.0
    %541 = vmatpush1.xpose.msra.mxu0 0.0
    %542 = vmatprep.subr.mxu0 0.0
    %543 = vmatpush1.xpose.msra.mxu0 0.0
    %544 = vmatprep.mubr.f32.mxu0 0.0
    %545 = vmatmul.mubr.f32.gmra.mrb[0].mxu0 %v476
    %v546 = vpop.f32.mrb[0].mxu0
    %v547 = vadd.f32 0.0, %v546
    %v548 = vpop.f32.mrb[0].mxu0
    %549 = vdwg.mxu0
    %550 = vrot.lane.b32.xlu0 %v133, 92
    %v551 = vpop.permute.xlu0 %550
    %552 = vrot.lane.b32.xlu0 %v133, 60
    %v553 = vpop.permute.xlu0 %552
    %v554 = vsel %vm141, %v551, 0
    %v556 = vsel %vm141, %v553, 0
    %558 = vmatprep.subr.mxu0 0.0
    %559 = vmatpush1.xpose.msra.mxu0 %v556
    %560 = vmatprep.subr.mxu0 0.0
    %561 = vmatpush1.xpose.msra.mxu0 0.0
    %562 = vmatprep.subr.mxu0 0.0
    %563 = vmatpush1.xpose.msra.mxu0 0.0
    %564 = vmatprep.subr.mxu0 0.0
    %565 = vmatpush1.xpose.msra.mxu0 0.0
    %566 = vmatprep.subr.mxu0 0.0
    %567 = vmatpush1.xpose.msra.mxu0 0.0
    %568 = vmatprep.subr.mxu0 0.0
    %569 = vmatpush1.xpose.msra.mxu0 0.0
    %570 = vmatprep.subr.mxu0 0.0
    %571 = vmatpush1.xpose.msra.mxu0 0.0
    %572 = vmatprep.subr.mxu0 0.0
    %573 = vmatpush1.xpose.msra.mxu0 0.0
    %574 = vmatprep.subr.mxu0 0.0
    %575 = vmatpush1.xpose.msra.mxu0 0.0
    %576 = vmatprep.subr.mxu0 0.0
    %577 = vmatpush1.xpose.msra.mxu0 0.0
    %578 = vmatprep.subr.mxu0 0.0
    %579 = vmatpush1.xpose.msra.mxu0 0.0
    %580 = vmatprep.subr.mxu0 0.0
    %581 = vmatpush1.xpose.msra.mxu0 0.0
    %582 = vmatprep.subr.mxu0 0.0
    %583 = vmatpush1.xpose.msra.mxu0 0.0
    %584 = vmatprep.subr.mxu0 0.0
    %585 = vmatpush1.xpose.msra.mxu0 0.0
    %586 = vmatprep.subr.mxu0 0.0
    %587 = vmatpush1.xpose.msra.mxu0 0.0
    %588 = vmatprep.subr.mxu0 0.0
    %589 = vmatpush1.xpose.msra.mxu0 0.0
    %590 = vmatprep.subr.mxu0 0.0
    %591 = vmatpush1.xpose.msra.mxu0 0.0
    %592 = vmatprep.subr.mxu0 0.0
    %593 = vmatpush1.xpose.msra.mxu0 0.0
    %594 = vmatprep.subr.mxu0 0.0
    %595 = vmatpush1.xpose.msra.mxu0 0.0
    %596 = vmatprep.subr.mxu0 0.0
    %597 = vmatpush1.xpose.msra.mxu0 0.0
    %598 = vmatprep.subr.mxu0 0.0
    %599 = vmatpush1.xpose.msra.mxu0 0.0
    %600 = vmatprep.subr.mxu0 0.0
    %601 = vmatpush1.xpose.msra.mxu0 0.0
    %602 = vmatprep.subr.mxu0 0.0
    %603 = vmatpush1.xpose.msra.mxu0 0.0
    %604 = vmatprep.subr.mxu0 0.0
    %605 = vmatpush1.xpose.msra.mxu0 0.0
    %606 = vmatprep.subr.mxu0 0.0
    %607 = vmatpush1.xpose.msra.mxu0 0.0
    %608 = vmatprep.subr.mxu0 0.0
    %609 = vmatpush1.xpose.msra.mxu0 0.0
    %610 = vmatprep.subr.mxu0 0.0
    %611 = vmatpush1.xpose.msra.mxu0 0.0
    %612 = vmatprep.subr.mxu0 0.0
    %613 = vmatpush1.xpose.msra.mxu0 0.0
    %614 = vmatprep.subr.mxu0 0.0
    %615 = vmatpush1.xpose.msra.mxu0 0.0
    %616 = vmatprep.subr.mxu0 0.0
    %617 = vmatpush1.xpose.msra.mxu0 0.0
    %618 = vmatprep.subr.mxu0 0.0
    %619 = vmatpush1.xpose.msra.mxu0 0.0
    %620 = vmatprep.subr.mxu0 0.0
    %621 = vmatpush1.xpose.msra.mxu0 0.0
    %622 = vmatprep.mubr.f32.mxu0 0.0
    %623 = vmatmul.mubr.f32.gmra.mrb[0].mxu0 %v554
    %v624 = vpop.f32.mrb[0].mxu0
    %v625 = vadd.f32 0.0, %v624
    %v626 = vpop.f32.mrb[0].mxu0
    %627 = vdwg.mxu0
    %v628 = vmul.f32 %v547, 0.5
    %v629 = vmul.f32 %v625, 0.5
    %v630 = vsel %vm297, %v628, -inf
    %631 = vmax.xlane.f32.xlu0 %v630
    %v632 = vpop.xlane.xlu0 %631
    %v633 = vsel %vm297, %v629, -inf
    %634 = vmax.xlane.f32.xlu0 %v633
    %v635 = vpop.xlane.xlu0 %634
    %v636 = vsub.f32 %v628, %v632
    %v637 = vsub.f32 %v629, %v635
    %v638 = vmul.f32 %v636, 1.442695
    %v639 = vpow.pop %v638
    %v640 = vmul.f32 %v637, 1.442695
    %v641 = vpow.pop %v640
    %v642 = vsel %vm297, %v639, 0.0
    %643 = vadd.xlane.f32.xlu0 %v642
    %v644 = vpop.xlane.xlu0 %643
    %v645 = vsel %vm297, %v641, 0.0
    %646 = vadd.xlane.f32.xlu0 %v645
    %v647 = vpop.xlane.xlu0 %646
    %v648 = vrcp.pop %v644
    %v649 = vrcp.pop %v647
    %v650 = vmul.f32 %v639, %v648
    %v651 = vmul.f32 %v641, %v649
    %652 = vrot.lane.b32.xlu0 %v128, 28
    %v653 = vpop.permute.xlu0 %652
    %v656 = vsel %vm297, %v650, 0
    %658 = vmatprep.subr.mxu0 0.0
    %659 = vmatpush1.msra.mxu0 %v653
    %660 = vmatprep.subr.mxu0 0.0
    %661 = vmatpush1.msra.mxu0 0.0
    %662 = vmatprep.subr.mxu0 0.0
    %663 = vmatpush1.msra.mxu0 0.0
    %664 = vmatprep.subr.mxu0 0.0
    %665 = vmatpush1.msra.mxu0 0.0
    %666 = vmatprep.subr.mxu0 0.0
    %667 = vmatpush1.msra.mxu0 0.0
    %668 = vmatprep.subr.mxu0 0.0
    %669 = vmatpush1.msra.mxu0 0.0
    %670 = vmatprep.subr.mxu0 0.0
    %671 = vmatpush1.msra.mxu0 0.0
    %672 = vmatprep.subr.mxu0 0.0
    %673 = vmatpush1.msra.mxu0 0.0
    %674 = vmatprep.subr.mxu0 0.0
    %675 = vmatpush1.msra.mxu0 0.0
    %676 = vmatprep.subr.mxu0 0.0
    %677 = vmatpush1.msra.mxu0 0.0
    %678 = vmatprep.subr.mxu0 0.0
    %679 = vmatpush1.msra.mxu0 0.0
    %680 = vmatprep.subr.mxu0 0.0
    %681 = vmatpush1.msra.mxu0 0.0
    %682 = vmatprep.subr.mxu0 0.0
    %683 = vmatpush1.msra.mxu0 0.0
    %684 = vmatprep.subr.mxu0 0.0
    %685 = vmatpush1.msra.mxu0 0.0
    %686 = vmatprep.subr.mxu0 0.0
    %687 = vmatpush1.msra.mxu0 0.0
    %688 = vmatprep.subr.mxu0 0.0
    %689 = vmatpush1.msra.mxu0 0.0
    %690 = vmatprep.subr.mxu0 0.0
    %691 = vmatpush1.msra.mxu0 0.0
    %692 = vmatprep.subr.mxu0 0.0
    %693 = vmatpush1.msra.mxu0 0.0
    %694 = vmatprep.subr.mxu0 0.0
    %695 = vmatpush1.msra.mxu0 0.0
    %696 = vmatprep.subr.mxu0 0.0
    %697 = vmatpush1.msra.mxu0 0.0
    %698 = vmatprep.subr.mxu0 0.0
    %699 = vmatpush1.msra.mxu0 0.0
    %700 = vmatprep.subr.mxu0 0.0
    %701 = vmatpush1.msra.mxu0 0.0
    %702 = vmatprep.subr.mxu0 0.0
    %703 = vmatpush1.msra.mxu0 0.0
    %704 = vmatprep.subr.mxu0 0.0
    %705 = vmatpush1.msra.mxu0 0.0
    %706 = vmatprep.subr.mxu0 0.0
    %707 = vmatpush1.msra.mxu0 0.0
    %708 = vmatprep.subr.mxu0 0.0
    %709 = vmatpush1.msra.mxu0 0.0
    %710 = vmatprep.subr.mxu0 0.0
    %711 = vmatpush1.msra.mxu0 0.0
    %712 = vmatprep.subr.mxu0 0.0
    %713 = vmatpush1.msra.mxu0 0.0
    %714 = vmatprep.subr.mxu0 0.0
    %715 = vmatpush1.msra.mxu0 0.0
    %716 = vmatprep.subr.mxu0 0.0
    %717 = vmatpush1.msra.mxu0 0.0
    %718 = vmatprep.subr.mxu0 0.0
    %719 = vmatpush1.msra.mxu0 0.0
    %720 = vmatprep.subr.mxu0 0.0
    %721 = vmatpush1.msra.mxu0 0.0
    %722 = vmatprep.mubr.f32.mxu0 0.0
    %723 = vmatmul.mubr.f32.gmra.mrb[0].mxu0 %v656
    %v724 = vpop.f32.mrb[0].mxu0
    %v725 = vadd.f32 0.0, %v724
    %v726 = vpop.f32.mrb[0].mxu0
    %727 = vdwg.mxu0
    %728 = vrot.lane.b32.xlu0 %v133, 28
    %v729 = vpop.permute.xlu0 %728
    %v732 = vsel %vm297, %v651, 0
    %734 = vmatprep.subr.mxu0 0.0
    %735 = vmatpush1.msra.mxu0 %v729
    %736 = vmatprep.subr.mxu0 0.0
    %737 = vmatpush1.msra.mxu0 0.0
    %738 = vmatprep.subr.mxu0 0.0
    %739 = vmatpush1.msra.mxu0 0.0
    %740 = vmatprep.subr.mxu0 0.0
    %741 = vmatpush1.msra.mxu0 0.0
    %742 = vmatprep.subr.mxu0 0.0
    %743 = vmatpush1.msra.mxu0 0.0
    %744 = vmatprep.subr.mxu0 0.0
    %745 = vmatpush1.msra.mxu0 0.0
    %746 = vmatprep.subr.mxu0 0.0
    %747 = vmatpush1.msra.mxu0 0.0
    %748 = vmatprep.subr.mxu0 0.0
    %749 = vmatpush1.msra.mxu0 0.0
    %750 = vmatprep.subr.mxu0 0.0
    %751 = vmatpush1.msra.mxu0 0.0
    %752 = vmatprep.subr.mxu0 0.0
    %753 = vmatpush1.msra.mxu0 0.0
    %754 = vmatprep.subr.mxu0 0.0
    %755 = vmatpush1.msra.mxu0 0.0
    %756 = vmatprep.subr.mxu0 0.0
    %757 = vmatpush1.msra.mxu0 0.0
    %758 = vmatprep.subr.mxu0 0.0
    %759 = vmatpush1.msra.mxu0 0.0
    %760 = vmatprep.subr.mxu0 0.0
    %761 = vmatpush1.msra.mxu0 0.0
    %762 = vmatprep.subr.mxu0 0.0
    %763 = vmatpush1.msra.mxu0 0.0
    %764 = vmatprep.subr.mxu0 0.0
    %765 = vmatpush1.msra.mxu0 0.0
    %766 = vmatprep.subr.mxu0 0.0
    %767 = vmatpush1.msra.mxu0 0.0
    %768 = vmatprep.subr.mxu0 0.0
    %769 = vmatpush1.msra.mxu0 0.0
    %770 = vmatprep.subr.mxu0 0.0
    %771 = vmatpush1.msra.mxu0 0.0
    %772 = vmatprep.subr.mxu0 0.0
    %773 = vmatpush1.msra.mxu0 0.0
    %774 = vmatprep.subr.mxu0 0.0
    %775 = vmatpush1.msra.mxu0 0.0
    %776 = vmatprep.subr.mxu0 0.0
    %777 = vmatpush1.msra.mxu0 0.0
    %778 = vmatprep.subr.mxu0 0.0
    %779 = vmatpush1.msra.mxu0 0.0
    %780 = vmatprep.subr.mxu0 0.0
    %781 = vmatpush1.msra.mxu0 0.0
    %782 = vmatprep.subr.mxu0 0.0
    %783 = vmatpush1.msra.mxu0 0.0
    %784 = vmatprep.subr.mxu0 0.0
    %785 = vmatpush1.msra.mxu0 0.0
    %786 = vmatprep.subr.mxu0 0.0
    %787 = vmatpush1.msra.mxu0 0.0
    %788 = vmatprep.subr.mxu0 0.0
    %789 = vmatpush1.msra.mxu0 0.0
    %790 = vmatprep.subr.mxu0 0.0
    %791 = vmatpush1.msra.mxu0 0.0
    %792 = vmatprep.subr.mxu0 0.0
    %793 = vmatpush1.msra.mxu0 0.0
    %794 = vmatprep.subr.mxu0 0.0
    %795 = vmatpush1.msra.mxu0 0.0
    %796 = vmatprep.subr.mxu0 0.0
    %797 = vmatpush1.msra.mxu0 0.0
    %798 = vmatprep.mubr.f32.mxu0 0.0
    %799 = vmatmul.mubr.f32.gmra.mrb[0].mxu0 %v732
    %v800 = vpop.f32.mrb[0].mxu0
    %v801 = vadd.f32 0.0, %v800
    %v802 = vpop.f32.mrb[0].mxu0
    %803 = vdwg.mxu0
    %804 = vrot.lane.b32.xlu0 %v128, 88
    %v805 = vpop.permute.xlu0 %804
    %806 = vrot.lane.b32.xlu0 %v128, 56
    %v807 = vpop.permute.xlu0 %806
    %v808 = vsel %vm141, %v805, 0
    %v810 = vsel %vm141, %v807, 0
    %812 = vmatprep.subr.mxu0 0.0
    %813 = vmatpush1.xpose.msra.mxu0 %v810
    %814 = vmatprep.subr.mxu0 0.0
    %815 = vmatpush1.xpose.msra.mxu0 0.0
    %816 = vmatprep.subr.mxu0 0.0
    %817 = vmatpush1.xpose.msra.mxu0 0.0
    %818 = vmatprep.subr.mxu0 0.0
    %819 = vmatpush1.xpose.msra.mxu0 0.0
    %820 = vmatprep.subr.mxu0 0.0
    %821 = vmatpush1.xpose.msra.mxu0 0.0
    %822 = vmatprep.subr.mxu0 0.0
    %823 = vmatpush1.xpose.msra.mxu0 0.0
    %824 = vmatprep.subr.mxu0 0.0
    %825 = vmatpush1.xpose.msra.mxu0 0.0
    %826 = vmatprep.subr.mxu0 0.0
    %827 = vmatpush1.xpose.msra.mxu0 0.0
    %828 = vmatprep.subr.mxu0 0.0
    %829 = vmatpush1.xpose.msra.mxu0 0.0
    %830 = vmatprep.subr.mxu0 0.0
    %831 = vmatpush1.xpose.msra.mxu0 0.0
    %832 = vmatprep.subr.mxu0 0.0
    %833 = vmatpush1.xpose.msra.mxu0 0.0
    %834 = vmatprep.subr.mxu0 0.0
    %835 = vmatpush1.xpose.msra.mxu0 0.0
    %836 = vmatprep.subr.mxu0 0.0
    %837 = vmatpush1.xpose.msra.mxu0 0.0
    %838 = vmatprep.subr.mxu0 0.0
    %839 = vmatpush1.xpose.msra.mxu0 0.0
    %840 = vmatprep.subr.mxu0 0.0
    %841 = vmatpush1.xpose.msra.mxu0 0.0
    %842 = vmatprep.subr.mxu0 0.0
    %843 = vmatpush1.xpose.msra.mxu0 0.0
    %844 = vmatprep.subr.mxu0 0.0
    %845 = vmatpush1.xpose.msra.mxu0 0.0
    %846 = vmatprep.subr.mxu0 0.0
    %847 = vmatpush1.xpose.msra.mxu0 0.0
    %848 = vmatprep.subr.mxu0 0.0
    %849 = vmatpush1.xpose.msra.mxu0 0.0
    %850 = vmatprep.subr.mxu0 0.0
    %851 = vmatpush1.xpose.msra.mxu0 0.0
    %852 = vmatprep.subr.mxu0 0.0
    %853 = vmatpush1.xpose.msra.mxu0 0.0
    %854 = vmatprep.subr.mxu0 0.0
    %855 = vmatpush1.xpose.msra.mxu0 0.0
    %856 = vmatprep.subr.mxu0 0.0
    %857 = vmatpush1.xpose.msra.mxu0 0.0
    %858 = vmatprep.subr.mxu0 0.0
    %859 = vmatpush1.xpose.msra.mxu0 0.0
    %860 = vmatprep.subr.mxu0 0.0
    %861 = vmatpush1.xpose.msra.mxu0 0.0
    %862 = vmatprep.subr.mxu0 0.0
    %863 = vmatpush1.xpose.msra.mxu0 0.0
    %864 = vmatprep.subr.mxu0 0.0
    %865 = vmatpush1.xpose.msra.mxu0 0.0
    %866 = vmatprep.subr.mxu0 0.0
    %867 = vmatpush1.xpose.msra.mxu0 0.0
    %868 = vmatprep.subr.mxu0 0.0
    %869 = vmatpush1.xpose.msra.mxu0 0.0
    %870 = vmatprep.subr.mxu0 0.0
    %871 = vmatpush1.xpose.msra.mxu0 0.0
    %872 = vmatprep.subr.mxu0 0.0
    %873 = vmatpush1.xpose.msra.mxu0 0.0
    %874 = vmatprep.subr.mxu0 0.0
    %875 = vmatpush1.xpose.msra.mxu0 0.0
    %876 = vmatprep.mubr.f32.mxu0 0.0
    %877 = vmatmul.mubr.f32.gmra.mrb[0].mxu0 %v808
    %v878 = vpop.f32.mrb[0].mxu0
    %v879 = vadd.f32 0.0, %v878
    %v880 = vpop.f32.mrb[0].mxu0
    %881 = vdwg.mxu0
    %882 = vrot.lane.b32.xlu0 %v133, 88
    %v883 = vpop.permute.xlu0 %882
    %884 = vrot.lane.b32.xlu0 %v133, 56
    %v885 = vpop.permute.xlu0 %884
    %v886 = vsel %vm141, %v883, 0
    %v888 = vsel %vm141, %v885, 0
    %890 = vmatprep.subr.mxu0 0.0
    %891 = vmatpush1.xpose.msra.mxu0 %v888
    %892 = vmatprep.subr.mxu0 0.0
    %893 = vmatpush1.xpose.msra.mxu0 0.0
    %894 = vmatprep.subr.mxu0 0.0
    %895 = vmatpush1.xpose.msra.mxu0 0.0
    %896 = vmatprep.subr.mxu0 0.0
    %897 = vmatpush1.xpose.msra.mxu0 0.0
    %898 = vmatprep.subr.mxu0 0.0
    %899 = vmatpush1.xpose.msra.mxu0 0.0
    %900 = vmatprep.subr.mxu0 0.0
    %901 = vmatpush1.xpose.msra.mxu0 0.0
    %902 = vmatprep.subr.mxu0 0.0
    %903 = vmatpush1.xpose.msra.mxu0 0.0
    %904 = vmatprep.subr.mxu0 0.0
    %905 = vmatpush1.xpose.msra.mxu0 0.0
    %906 = vmatprep.subr.mxu0 0.0
    %907 = vmatpush1.xpose.msra.mxu0 0.0
    %908 = vmatprep.subr.mxu0 0.0
    %909 = vmatpush1.xpose.msra.mxu0 0.0
    %910 = vmatprep.subr.mxu0 0.0
    %911 = vmatpush1.xpose.msra.mxu0 0.0
    %912 = vmatprep.subr.mxu0 0.0
    %913 = vmatpush1.xpose.msra.mxu0 0.0
    %914 = vmatprep.subr.mxu0 0.0
    %915 = vmatpush1.xpose.msra.mxu0 0.0
    %916 = vmatprep.subr.mxu0 0.0
    %917 = vmatpush1.xpose.msra.mxu0 0.0
    %918 = vmatprep.subr.mxu0 0.0
    %919 = vmatpush1.xpose.msra.mxu0 0.0
    %920 = vmatprep.subr.mxu0 0.0
    %921 = vmatpush1.xpose.msra.mxu0 0.0
    %922 = vmatprep.subr.mxu0 0.0
    %923 = vmatpush1.xpose.msra.mxu0 0.0
    %924 = vmatprep.subr.mxu0 0.0
    %925 = vmatpush1.xpose.msra.mxu0 0.0
    %926 = vmatprep.subr.mxu0 0.0
    %927 = vmatpush1.xpose.msra.mxu0 0.0
    %928 = vmatprep.subr.mxu0 0.0
    %929 = vmatpush1.xpose.msra.mxu0 0.0
    %930 = vmatprep.subr.mxu0 0.0
    %931 = vmatpush1.xpose.msra.mxu0 0.0
    %932 = vmatprep.subr.mxu0 0.0
    %933 = vmatpush1.xpose.msra.mxu0 0.0
    %934 = vmatprep.subr.mxu0 0.0
    %935 = vmatpush1.xpose.msra.mxu0 0.0
    %936 = vmatprep.subr.mxu0 0.0
    %937 = vmatpush1.xpose.msra.mxu0 0.0
    %938 = vmatprep.subr.mxu0 0.0
    %939 = vmatpush1.xpose.msra.mxu0 0.0
    %940 = vmatprep.subr.mxu0 0.0
    %941 = vmatpush1.xpose.msra.mxu0 0.0
    %942 = vmatprep.subr.mxu0 0.0
    %943 = vmatpush1.xpose.msra.mxu0 0.0
    %944 = vmatprep.subr.mxu0 0.0
    %945 = vmatpush1.xpose.msra.mxu0 0.0
    %946 = vmatprep.subr.mxu0 0.0
    %947 = vmatpush1.xpose.msra.mxu0 0.0
    %948 = vmatprep.subr.mxu0 0.0
    %949 = vmatpush1.xpose.msra.mxu0 0.0
    %950 = vmatprep.subr.mxu0 0.0
    %951 = vmatpush1.xpose.msra.mxu0 0.0
    %952 = vmatprep.subr.mxu0 0.0
    %953 = vmatpush1.xpose.msra.mxu0 0.0
    %954 = vmatprep.mubr.f32.mxu0 0.0
    %955 = vmatmul.mubr.f32.gmra.mrb[0].mxu0 %v886
    %v956 = vpop.f32.mrb[0].mxu0
    %v957 = vadd.f32 0.0, %v956
    %v958 = vpop.f32.mrb[0].mxu0
    %959 = vdwg.mxu0
    %v960 = vmul.f32 %v879, 0.5
    %v961 = vmul.f32 %v957, 0.5
    %v962 = vsel %vm297, %v960, -inf
    %963 = vmax.xlane.f32.xlu0 %v962
    %v964 = vpop.xlane.xlu0 %963
    %v965 = vsel %vm297, %v961, -inf
    %966 = vmax.xlane.f32.xlu0 %v965
    %v967 = vpop.xlane.xlu0 %966
    %v968 = vsub.f32 %v960, %v964
    %v969 = vsub.f32 %v961, %v967
    %v970 = vmul.f32 %v968, 1.442695
    %v971 = vpow.pop %v970
    %v972 = vmul.f32 %v969, 1.442695
    %v973 = vpow.pop %v972
    %v974 = vsel %vm297, %v971, 0.0
    %975 = vadd.xlane.f32.xlu0 %v974
    %v976 = vpop.xlane.xlu0 %975
    %v977 = vsel %vm297, %v973, 0.0
    %978 = vadd.xlane.f32.xlu0 %v977
    %v979 = vpop.xlane.xlu0 %978
    %v980 = vrcp.pop %v976
    %v981 = vrcp.pop %v979
    %v982 = vmul.f32 %v971, %v980
    %v983 = vmul.f32 %v973, %v981
    %984 = vrot.lane.b32.xlu0 %v128, 24
    %v985 = vpop.permute.xlu0 %984
    %v988 = vsel %vm297, %v982, 0
    %990 = vmatprep.subr.mxu0 0.0
    %991 = vmatpush1.msra.mxu0 %v985
    %992 = vmatprep.subr.mxu0 0.0
    %993 = vmatpush1.msra.mxu0 0.0
    %994 = vmatprep.subr.mxu0 0.0
    %995 = vmatpush1.msra.mxu0 0.0
    %996 = vmatprep.subr.mxu0 0.0
    %997 = vmatpush1.msra.mxu0 0.0
    %998 = vmatprep.subr.mxu0 0.0
    %999 = vmatpush1.msra.mxu0 0.0
    %1000 = vmatprep.subr.mxu0 0.0
    %1001 = vmatpush1.msra.mxu0 0.0
    %1002 = vmatprep.subr.mxu0 0.0
    %1003 = vmatpush1.msra.mxu0 0.0
    %1004 = vmatprep.subr.mxu0 0.0
    %1005 = vmatpush1.msra.mxu0 0.0
    %1006 = vmatprep.subr.mxu0 0.0
    %1007 = vmatpush1.msra.mxu0 0.0
    %1008 = vmatprep.subr.mxu0 0.0
    %1009 = vmatpush1.msra.mxu0 0.0
    %1010 = vmatprep.subr.mxu0 0.0
    %1011 = vmatpush1.msra.mxu0 0.0
    %1012 = vmatprep.subr.mxu0 0.0
    %1013 = vmatpush1.msra.mxu0 0.0
    %1014 = vmatprep.subr.mxu0 0.0
    %1015 = vmatpush1.msra.mxu0 0.0
    %1016 = vmatprep.subr.mxu0 0.0
    %1017 = vmatpush1.msra.mxu0 0.0
    %1018 = vmatprep.subr.mxu0 0.0
    %1019 = vmatpush1.msra.mxu0 0.0
    %1020 = vmatprep.subr.mxu0 0.0
    %1021 = vmatpush1.msra.mxu0 0.0
    %1022 = vmatprep.subr.mxu0 0.0
    %1023 = vmatpush1.msra.mxu0 0.0
    %1024 = vmatprep.subr.mxu0 0.0
    %1025 = vmatpush1.msra.mxu0 0.0
    %1026 = vmatprep.subr.mxu0 0.0
    %1027 = vmatpush1.msra.mxu0 0.0
    %1028 = vmatprep.subr.mxu0 0.0
    %1029 = vmatpush1.msra.mxu0 0.0
    %1030 = vmatprep.subr.mxu0 0.0
    %1031 = vmatpush1.msra.mxu0 0.0
    %1032 = vmatprep.subr.mxu0 0.0
    %1033 = vmatpush1.msra.mxu0 0.0
    %1034 = vmatprep.subr.mxu0 0.0
    %1035 = vmatpush1.msra.mxu0 0.0
    %1036 = vmatprep.subr.mxu0 0.0
    %1037 = vmatpush1.msra.mxu0 0.0
    %1038 = vmatprep.subr.mxu0 0.0
    %1039 = vmatpush1.msra.mxu0 0.0
    %1040 = vmatprep.subr.mxu0 0.0
    %1041 = vmatpush1.msra.mxu0 0.0
    %1042 = vmatprep.subr.mxu0 0.0
    %1043 = vmatpush1.msra.mxu0 0.0
    %1044 = vmatprep.subr.mxu0 0.0
    %1045 = vmatpush1.msra.mxu0 0.0
    %1046 = vmatprep.subr.mxu0 0.0
    %1047 = vmatpush1.msra.mxu0 0.0
    %1048 = vmatprep.subr.mxu0 0.0
    %1049 = vmatpush1.msra.mxu0 0.0
    %1050 = vmatprep.subr.mxu0 0.0
    %1051 = vmatpush1.msra.mxu0 0.0
    %1052 = vmatprep.subr.mxu0 0.0
    %1053 = vmatpush1.msra.mxu0 0.0
    %1054 = vmatprep.mubr.f32.mxu0 0.0
    %1055 = vmatmul.mubr.f32.gmra.mrb[0].mxu0 %v988
    %v1056 = vpop.f32.mrb[0].mxu0
    %v1057 = vadd.f32 0.0, %v1056
    %v1058 = vpop.f32.mrb[0].mxu0
    %1059 = vdwg.mxu0
    %1060 = vrot.lane.b32.xlu0 %v133, 24
    %v1061 = vpop.permute.xlu0 %1060
    %v1064 = vsel %vm297, %v983, 0
    %1066 = vmatprep.subr.mxu0 0.0
    %1067 = vmatpush1.msra.mxu0 %v1061
    %1068 = vmatprep.subr.mxu0 0.0
    %1069 = vmatpush1.msra.mxu0 0.0
    %1070 = vmatprep.subr.mxu0 0.0
    %1071 = vmatpush1.msra.mxu0 0.0
    %1072 = vmatprep.subr.mxu0 0.0
    %1073 = vmatpush1.msra.mxu0 0.0
    %1074 = vmatprep.subr.mxu0 0.0
    %1075 = vmatpush1.msra.mxu0 0.0
    %1076 = vmatprep.subr.mxu0 0.0
    %1077 = vmatpush1.msra.mxu0 0.0
    %1078 = vmatprep.subr.mxu0 0.0
    %1079 = vmatpush1.msra.mxu0 0.0
    %1080 = vmatprep.subr.mxu0 0.0
    %1081 = vmatpush1.msra.mxu0 0.0
    %1082 = vmatprep.subr.mxu0 0.0
    %1083 = vmatpush1.msra.mxu0 0.0
    %1084 = vmatprep.subr.mxu0 0.0
    %1085 = vmatpush1.msra.mxu0 0.0
    %1086 = vmatprep.subr.mxu0 0.0
    %1087 = vmatpush1.msra.mxu0 0.0
    %1088 = vmatprep.subr.mxu0 0.0
    %1089 = vmatpush1.msra.mxu0 0.0
    %1090 = vmatprep.subr.mxu0 0.0
    %1091 = vmatpush1.msra.mxu0 0.0
    %1092 = vmatprep.subr.mxu0 0.0
    %1093 = vmatpush1.msra.mxu0 0.0
    %1094 = vmatprep.subr.mxu0 0.0
    %1095 = vmatpush1.msra.mxu0 0.0
    %1096 = vmatprep.subr.mxu0 0.0
    %1097 = vmatpush1.msra.mxu0 0.0
    %1098 = vmatprep.subr.mxu0 0.0
    %1099 = vmatpush1.msra.mxu0 0.0
    %1100 = vmatprep.subr.mxu0 0.0
    %1101 = vmatpush1.msra.mxu0 0.0
    %1102 = vmatprep.subr.mxu0 0.0
    %1103 = vmatpush1.msra.mxu0 0.0
    %1104 = vmatprep.subr.mxu0 0.0
    %1105 = vmatpush1.msra.mxu0 0.0
    %1106 = vmatprep.subr.mxu0 0.0
    %1107 = vmatpush1.msra.mxu0 0.0
    %1108 = vmatprep.subr.mxu0 0.0
    %1109 = vmatpush1.msra.mxu0 0.0
    %1110 = vmatprep.subr.mxu0 0.0
    %1111 = vmatpush1.msra.mxu0 0.0
    %1112 = vmatprep.subr.mxu0 0.0
    %1113 = vmatpush1.msra.mxu0 0.0
    %1114 = vmatprep.subr.mxu0 0.0
    %1115 = vmatpush1.msra.mxu0 0.0
    %1116 = vmatprep.subr.mxu0 0.0
    %1117 = vmatpush1.msra.mxu0 0.0
    %1118 = vmatprep.subr.mxu0 0.0
    %1119 = vmatpush1.msra.mxu0 0.0
    %1120 = vmatprep.subr.mxu0 0.0
    %1121 = vmatpush1.msra.mxu0 0.0
    %1122 = vmatprep.subr.mxu0 0.0
    %1123 = vmatpush1.msra.mxu0 0.0
    %1124 = vmatprep.subr.mxu0 0.0
    %1125 = vmatpush1.msra.mxu0 0.0
    %1126 = vmatprep.subr.mxu0 0.0
    %1127 = vmatpush1.msra.mxu0 0.0
    %1128 = vmatprep.subr.mxu0 0.0
    %1129 = vmatpush1.msra.mxu0 0.0
    %1130 = vmatprep.mubr.f32.mxu0 0.0
    %1131 = vmatmul.mubr.f32.gmra.mrb[0].mxu0 %v1064
    %v1132 = vpop.f32.mrb[0].mxu0
    %v1133 = vadd.f32 0.0, %v1132
    %v1134 = vpop.f32.mrb[0].mxu0
    %1135 = vdwg.mxu0
    %1136 = vrot.lane.b32.xlu0 %v128, 84
    %v1137 = vpop.permute.xlu0 %1136
    %1138 = vrot.lane.b32.xlu0 %v128, 52
    %v1139 = vpop.permute.xlu0 %1138
    %v1140 = vsel %vm141, %v1137, 0
    %v1142 = vsel %vm141, %v1139, 0
    %1144 = vmatprep.subr.mxu0 0.0
    %1145 = vmatpush1.xpose.msra.mxu0 %v1142
    %1146 = vmatprep.subr.mxu0 0.0
    %1147 = vmatpush1.xpose.msra.mxu0 0.0
    %1148 = vmatprep.subr.mxu0 0.0
    %1149 = vmatpush1.xpose.msra.mxu0 0.0
    %1150 = vmatprep.subr.mxu0 0.0
    %1151 = vmatpush1.xpose.msra.mxu0 0.0
    %1152 = vmatprep.subr.mxu0 0.0
    %1153 = vmatpush1.xpose.msra.mxu0 0.0
    %1154 = vmatprep.subr.mxu0 0.0
    %1155 = vmatpush1.xpose.msra.mxu0 0.0
    %1156 = vmatprep.subr.mxu0 0.0
    %1157 = vmatpush1.xpose.msra.mxu0 0.0
    %1158 = vmatprep.subr.mxu0 0.0
    %1159 = vmatpush1.xpose.msra.mxu0 0.0
    %1160 = vmatprep.subr.mxu0 0.0
    %1161 = vmatpush1.xpose.msra.mxu0 0.0
    %1162 = vmatprep.subr.mxu0 0.0
    %1163 = vmatpush1.xpose.msra.mxu0 0.0
    %1164 = vmatprep.subr.mxu0 0.0
    %1165 = vmatpush1.xpose.msra.mxu0 0.0
    %1166 = vmatprep.subr.mxu0 0.0
    %1167 = vmatpush1.xpose.msra.mxu0 0.0
    %1168 = vmatprep.subr.mxu0 0.0
    %1169 = vmatpush1.xpose.msra.mxu0 0.0
    %1170 = vmatprep.subr.mxu0 0.0
    %1171 = vmatpush1.xpose.msra.mxu0 0.0
    %1172 = vmatprep.subr.mxu0 0.0
    %1173 = vmatpush1.xpose.msra.mxu0 0.0
    %1174 = vmatprep.subr.mxu0 0.0
    %1175 = vmatpush1.xpose.msra.mxu0 0.0
    %1176 = vmatprep.subr.mxu0 0.0
    %1177 = vmatpush1.xpose.msra.mxu0 0.0
    %1178 = vmatprep.subr.mxu0 0.0
    %1179 = vmatpush1.xpose.msra.mxu0 0.0
    %1180 = vmatprep.subr.mxu0 0.0
    %1181 = vmatpush1.xpose.msra.mxu0 0.0
    %1182 = vmatprep.subr.mxu0 0.0
    %1183 = vmatpush1.xpose.msra.mxu0 0.0
    %1184 = vmatprep.subr.mxu0 0.0
    %1185 = vmatpush1.xpose.msra.mxu0 0.0
    %1186 = vmatprep.subr.mxu0 0.0
    %1187 = vmatpush1.xpose.msra.mxu0 0.0
    %1188 = vmatprep.subr.mxu0 0.0
    %1189 = vmatpush1.xpose.msra.mxu0 0.0
    %1190 = vmatprep.subr.mxu0 0.0
    %1191 = vmatpush1.xpose.msra.mxu0 0.0
    %1192 = vmatprep.subr.mxu0 0.0
    %1193 = vmatpush1.xpose.msra.mxu0 0.0
    %1194 = vmatprep.subr.mxu0 0.0
    %1195 = vmatpush1.xpose.msra.mxu0 0.0
    %1196 = vmatprep.subr.mxu0 0.0
    %1197 = vmatpush1.xpose.msra.mxu0 0.0
    %1198 = vmatprep.subr.mxu0 0.0
    %1199 = vmatpush1.xpose.msra.mxu0 0.0
    %1200 = vmatprep.subr.mxu0 0.0
    %1201 = vmatpush1.xpose.msra.mxu0 0.0
    %1202 = vmatprep.subr.mxu0 0.0
    %1203 = vmatpush1.xpose.msra.mxu0 0.0
    %1204 = vmatprep.subr.mxu0 0.0
    %1205 = vmatpush1.xpose.msra.mxu0 0.0
    %1206 = vmatprep.subr.mxu0 0.0
    %1207 = vmatpush1.xpose.msra.mxu0 0.0
    %1208 = vmatprep.mubr.f32.mxu0 0.0
    %1209 = vmatmul.mubr.f32.gmra.mrb[0].mxu0 %v1140
    %v1210 = vpop.f32.mrb[0].mxu0
    %v1211 = vadd.f32 0.0, %v1210
    %v1212 = vpop.f32.mrb[0].mxu0
    %1213 = vdwg.mxu0
    %1214 = vrot.lane.b32.xlu0 %v133, 84
    %v1215 = vpop.permute.xlu0 %1214
    %1216 = vrot.lane.b32.xlu0 %v133, 52
    %v1217 = vpop.permute.xlu0 %1216
    %v1218 = vsel %vm141, %v1215, 0
    %v1220 = vsel %vm141, %v1217, 0
    %1222 = vmatprep.subr.mxu0 0.0
    %1223 = vmatpush1.xpose.msra.mxu0 %v1220
    %1224 = vmatprep.subr.mxu0 0.0
    %1225 = vmatpush1.xpose.msra.mxu0 0.0
    %1226 = vmatprep.subr.mxu0 0.0
    %1227 = vmatpush1.xpose.msra.mxu0 0.0
    %1228 = vmatprep.subr.mxu0 0.0
    %1229 = vmatpush1.xpose.msra.mxu0 0.0
    %1230 = vmatprep.subr.mxu0 0.0
    %1231 = vmatpush1.xpose.msra.mxu0 0.0
    %1232 = vmatprep.subr.mxu0 0.0
    %1233 = vmatpush1.xpose.msra.mxu0 0.0
    %1234 = vmatprep.subr.mxu0 0.0
    %1235 = vmatpush1.xpose.msra.mxu0 0.0
    %1236 = vmatprep.subr.mxu0 0.0
    %1237 = vmatpush1.xpose.msra.mxu0 0.0
    %1238 = vmatprep.subr.mxu0 0.0
    %1239 = vmatpush1.xpose.msra.mxu0 0.0
    %1240 = vmatprep.subr.mxu0 0.0
    %1241 = vmatpush1.xpose.msra.mxu0 0.0
    %1242 = vmatprep.subr.mxu0 0.0
    %1243 = vmatpush1.xpose.msra.mxu0 0.0
    %1244 = vmatprep.subr.mxu0 0.0
    %1245 = vmatpush1.xpose.msra.mxu0 0.0
    %1246 = vmatprep.subr.mxu0 0.0
    %1247 = vmatpush1.xpose.msra.mxu0 0.0
    %1248 = vmatprep.subr.mxu0 0.0
    %1249 = vmatpush1.xpose.msra.mxu0 0.0
    %1250 = vmatprep.subr.mxu0 0.0
    %1251 = vmatpush1.xpose.msra.mxu0 0.0
    %1252 = vmatprep.subr.mxu0 0.0
    %1253 = vmatpush1.xpose.msra.mxu0 0.0
    %1254 = vmatprep.subr.mxu0 0.0
    %1255 = vmatpush1.xpose.msra.mxu0 0.0
    %1256 = vmatprep.subr.mxu0 0.0
    %1257 = vmatpush1.xpose.msra.mxu0 0.0
    %1258 = vmatprep.subr.mxu0 0.0
    %1259 = vmatpush1.xpose.msra.mxu0 0.0
    %1260 = vmatprep.subr.mxu0 0.0
    %1261 = vmatpush1.xpose.msra.mxu0 0.0
    %1262 = vmatprep.subr.mxu0 0.0
    %1263 = vmatpush1.xpose.msra.mxu0 0.0
    %1264 = vmatprep.subr.mxu0 0.0
    %1265 = vmatpush1.xpose.msra.mxu0 0.0
    %1266 = vmatprep.subr.mxu0 0.0
    %1267 = vmatpush1.xpose.msra.mxu0 0.0
    %1268 = vmatprep.subr.mxu0 0.0
    %1269 = vmatpush1.xpose.msra.mxu0 0.0
    %1270 = vmatprep.subr.mxu0 0.0
    %1271 = vmatpush1.xpose.msra.mxu0 0.0
    %1272 = vmatprep.subr.mxu0 0.0
    %1273 = vmatpush1.xpose.msra.mxu0 0.0
    %1274 = vmatprep.subr.mxu0 0.0
    %1275 = vmatpush1.xpose.msra.mxu0 0.0
    %1276 = vmatprep.subr.mxu0 0.0
    %1277 = vmatpush1.xpose.msra.mxu0 0.0
    %1278 = vmatprep.subr.mxu0 0.0
    %1279 = vmatpush1.xpose.msra.mxu0 0.0
    %1280 = vmatprep.subr.mxu0 0.0
    %1281 = vmatpush1.xpose.msra.mxu0 0.0
    %1282 = vmatprep.subr.mxu0 0.0
    %1283 = vmatpush1.xpose.msra.mxu0 0.0
    %1284 = vmatprep.subr.mxu0 0.0
    %1285 = vmatpush1.xpose.msra.mxu0 0.0
    %1286 = vmatprep.mubr.f32.mxu0 0.0
    %1287 = vmatmul.mubr.f32.gmra.mrb[0].mxu0 %v1218
    %v1288 = vpop.f32.mrb[0].mxu0
    %v1289 = vadd.f32 0.0, %v1288
    %v1290 = vpop.f32.mrb[0].mxu0
    %1291 = vdwg.mxu0
    %v1292 = vmul.f32 %v1211, 0.5
    %v1293 = vmul.f32 %v1289, 0.5
    %v1294 = vsel %vm297, %v1292, -inf
    %1295 = vmax.xlane.f32.xlu0 %v1294
    %v1296 = vpop.xlane.xlu0 %1295
    %v1297 = vsel %vm297, %v1293, -inf
    %1298 = vmax.xlane.f32.xlu0 %v1297
    %v1299 = vpop.xlane.xlu0 %1298
    %v1300 = vsub.f32 %v1292, %v1296
    %v1301 = vsub.f32 %v1293, %v1299
    %v1302 = vmul.f32 %v1300, 1.442695
    %v1303 = vpow.pop %v1302
    %v1304 = vmul.f32 %v1301, 1.442695
    %v1305 = vpow.pop %v1304
    %v1306 = vsel %vm297, %v1303, 0.0
    %1307 = vadd.xlane.f32.xlu0 %v1306
    %v1308 = vpop.xlane.xlu0 %1307
    %v1309 = vsel %vm297, %v1305, 0.0
    %1310 = vadd.xlane.f32.xlu0 %v1309
    %v1311 = vpop.xlane.xlu0 %1310
    %v1312 = vrcp.pop %v1308
    %v1313 = vrcp.pop %v1311
    %v1314 = vmul.f32 %v1303, %v1312
    %v1315 = vmul.f32 %v1305, %v1313
    %1316 = vrot.lane.b32.xlu0 %v128, 20
    %v1317 = vpop.permute.xlu0 %1316
    %v1320 = vsel %vm297, %v1314, 0
    %1322 = vmatprep.subr.mxu0 0.0
    %1323 = vmatpush1.msra.mxu0 %v1317
    %1324 = vmatprep.subr.mxu0 0.0
    %1325 = vmatpush1.msra.mxu0 0.0
    %1326 = vmatprep.subr.mxu0 0.0
    %1327 = vmatpush1.msra.mxu0 0.0
    %1328 = vmatprep.subr.mxu0 0.0
    %1329 = vmatpush1.msra.mxu0 0.0
    %1330 = vmatprep.subr.mxu0 0.0
    %1331 = vmatpush1.msra.mxu0 0.0
    %1332 = vmatprep.subr.mxu0 0.0
    %1333 = vmatpush1.msra.mxu0 0.0
    %1334 = vmatprep.subr.mxu0 0.0
    %1335 = vmatpush1.msra.mxu0 0.0
    %1336 = vmatprep.subr.mxu0 0.0
    %1337 = vmatpush1.msra.mxu0 0.0
    %1338 = vmatprep.subr.mxu0 0.0
    %1339 = vmatpush1.msra.mxu0 0.0
    %1340 = vmatprep.subr.mxu0 0.0
    %1341 = vmatpush1.msra.mxu0 0.0
    %1342 = vmatprep.subr.mxu0 0.0
    %1343 = vmatpush1.msra.mxu0 0.0
    %1344 = vmatprep.subr.mxu0 0.0
    %1345 = vmatpush1.msra.mxu0 0.0
    %1346 = vmatprep.subr.mxu0 0.0
    %1347 = vmatpush1.msra.mxu0 0.0
    %1348 = vmatprep.subr.mxu0 0.0
    %1349 = vmatpush1.msra.mxu0 0.0
    %1350 = vmatprep.subr.mxu0 0.0
    %1351 = vmatpush1.msra.mxu0 0.0
    %1352 = vmatprep.subr.mxu0 0.0
    %1353 = vmatpush1.msra.mxu0 0.0
    %1354 = vmatprep.subr.mxu0 0.0
    %1355 = vmatpush1.msra.mxu0 0.0
    %1356 = vmatprep.subr.mxu0 0.0
    %1357 = vmatpush1.msra.mxu0 0.0
    %1358 = vmatprep.subr.mxu0 0.0
    %1359 = vmatpush1.msra.mxu0 0.0
    %1360 = vmatprep.subr.mxu0 0.0
    %1361 = vmatpush1.msra.mxu0 0.0
    %1362 = vmatprep.subr.mxu0 0.0
    %1363 = vmatpush1.msra.mxu0 0.0
    %1364 = vmatprep.subr.mxu0 0.0
    %1365 = vmatpush1.msra.mxu0 0.0
    %1366 = vmatprep.subr.mxu0 0.0
    %1367 = vmatpush1.msra.mxu0 0.0
    %1368 = vmatprep.subr.mxu0 0.0
    %1369 = vmatpush1.msra.mxu0 0.0
    %1370 = vmatprep.subr.mxu0 0.0
    %1371 = vmatpush1.msra.mxu0 0.0
    %1372 = vmatprep.subr.mxu0 0.0
    %1373 = vmatpush1.msra.mxu0 0.0
    %1374 = vmatprep.subr.mxu0 0.0
    %1375 = vmatpush1.msra.mxu0 0.0
    %1376 = vmatprep.subr.mxu0 0.0
    %1377 = vmatpush1.msra.mxu0 0.0
    %1378 = vmatprep.subr.mxu0 0.0
    %1379 = vmatpush1.msra.mxu0 0.0
    %1380 = vmatprep.subr.mxu0 0.0
    %1381 = vmatpush1.msra.mxu0 0.0
    %1382 = vmatprep.subr.mxu0 0.0
    %1383 = vmatpush1.msra.mxu0 0.0
    %1384 = vmatprep.subr.mxu0 0.0
    %1385 = vmatpush1.msra.mxu0 0.0
    %1386 = vmatprep.mubr.f32.mxu0 0.0
    %1387 = vmatmul.mubr.f32.gmra.mrb[0].mxu0 %v1320
    %v1388 = vpop.f32.mrb[0].mxu0
    %v1389 = vadd.f32 0.0, %v1388
    %v1390 = vpop.f32.mrb[0].mxu0
    %1391 = vdwg.mxu0
    %1392 = vrot.lane.b32.xlu0 %v133, 20
    %v1393 = vpop.permute.xlu0 %1392
    %v1396 = vsel %vm297, %v1315, 0
    %1398 = vmatprep.subr.mxu0 0.0
    %1399 = vmatpush1.msra.mxu0 %v1393
    %1400 = vmatprep.subr.mxu0 0.0
    %1401 = vmatpush1.msra.mxu0 0.0
    %1402 = vmatprep.subr.mxu0 0.0
    %1403 = vmatpush1.msra.mxu0 0.0
    %1404 = vmatprep.subr.mxu0 0.0
    %1405 = vmatpush1.msra.mxu0 0.0
    %1406 = vmatprep.subr.mxu0 0.0
    %1407 = vmatpush1.msra.mxu0 0.0
    %1408 = vmatprep.subr.mxu0 0.0
    %1409 = vmatpush1.msra.mxu0 0.0
    %1410 = vmatprep.subr.mxu0 0.0
    %1411 = vmatpush1.msra.mxu0 0.0
    %1412 = vmatprep.subr.mxu0 0.0
    %1413 = vmatpush1.msra.mxu0 0.0
    %1414 = vmatprep.subr.mxu0 0.0
    %1415 = vmatpush1.msra.mxu0 0.0
    %1416 = vmatprep.subr.mxu0 0.0
    %1417 = vmatpush1.msra.mxu0 0.0
    %1418 = vmatprep.subr.mxu0 0.0
    %1419 = vmatpush1.msra.mxu0 0.0
    %1420 = vmatprep.subr.mxu0 0.0
    %1421 = vmatpush1.msra.mxu0 0.0
    %1422 = vmatprep.subr.mxu0 0.0
    %1423 = vmatpush1.msra.mxu0 0.0
    %1424 = vmatprep.subr.mxu0 0.0
    %1425 = vmatpush1.msra.mxu0 0.0
    %1426 = vmatprep.subr.mxu0 0.0
    %1427 = vmatpush1.msra.mxu0 0.0
    %1428 = vmatprep.subr.mxu0 0.0
    %1429 = vmatpush1.msra.mxu0 0.0
    %1430 = vmatprep.subr.mxu0 0.0
    %1431 = vmatpush1.msra.mxu0 0.0
    %1432 = vmatprep.subr.mxu0 0.0
    %1433 = vmatpush1.msra.mxu0 0.0
    %1434 = vmatprep.subr.mxu0 0.0
    %1435 = vmatpush1.msra.mxu0 0.0
    %1436 = vmatprep.subr.mxu0 0.0
    %1437 = vmatpush1.msra.mxu0 0.0
    %1438 = vmatprep.subr.mxu0 0.0
    %1439 = vmatpush1.msra.mxu0 0.0
    %1440 = vmatprep.subr.mxu0 0.0
    %1441 = vmatpush1.msra.mxu0 0.0
    %1442 = vmatprep.subr.mxu0 0.0
    %1443 = vmatpush1.msra.mxu0 0.0
    %1444 = vmatprep.subr.mxu0 0.0
    %1445 = vmatpush1.msra.mxu0 0.0
    %1446 = vmatprep.subr.mxu0 0.0
    %1447 = vmatpush1.msra.mxu0 0.0
    %1448 = vmatprep.subr.mxu0 0.0
    %1449 = vmatpush1.msra.mxu0 0.0
    %1450 = vmatprep.subr.mxu0 0.0
    %1451 = vmatpush1.msra.mxu0 0.0
    %1452 = vmatprep.subr.mxu0 0.0
    %1453 = vmatpush1.msra.mxu0 0.0
    %1454 = vmatprep.subr.mxu0 0.0
    %1455 = vmatpush1.msra.mxu0 0.0
    %1456 = vmatprep.subr.mxu0 0.0
    %1457 = vmatpush1.msra.mxu0 0.0
    %1458 = vmatprep.subr.mxu0 0.0
    %1459 = vmatpush1.msra.mxu0 0.0
    %1460 = vmatprep.subr.mxu0 0.0
    %1461 = vmatpush1.msra.mxu0 0.0
    %1462 = vmatprep.mubr.f32.mxu0 0.0
    %1463 = vmatmul.mubr.f32.gmra.mrb[0].mxu0 %v1396
    %v1464 = vpop.f32.mrb[0].mxu0
    %v1465 = vadd.f32 0.0, %v1464
    %v1466 = vpop.f32.mrb[0].mxu0
    %1467 = vdwg.mxu0
    %1468 = vrot.lane.b32.xlu0 %v128, 80
    %v1469 = vpop.permute.xlu0 %1468
    %1470 = vrot.lane.b32.xlu0 %v128, 48
    %v1471 = vpop.permute.xlu0 %1470
    %v1472 = vsel %vm141, %v1469, 0
    %v1474 = vsel %vm141, %v1471, 0
    %1476 = vmatprep.subr.mxu0 0.0
    %1477 = vmatpush1.xpose.msra.mxu0 %v1474
    %1478 = vmatprep.subr.mxu0 0.0
    %1479 = vmatpush1.xpose.msra.mxu0 0.0
    %1480 = vmatprep.subr.mxu0 0.0
    %1481 = vmatpush1.xpose.msra.mxu0 0.0
    %1482 = vmatprep.subr.mxu0 0.0
    %1483 = vmatpush1.xpose.msra.mxu0 0.0
    %1484 = vmatprep.subr.mxu0 0.0
    %1485 = vmatpush1.xpose.msra.mxu0 0.0
    %1486 = vmatprep.subr.mxu0 0.0
    %1487 = vmatpush1.xpose.msra.mxu0 0.0
    %1488 = vmatprep.subr.mxu0 0.0
    %1489 = vmatpush1.xpose.msra.mxu0 0.0
    %1490 = vmatprep.subr.mxu0 0.0
    %1491 = vmatpush1.xpose.msra.mxu0 0.0
    %1492 = vmatprep.subr.mxu0 0.0
    %1493 = vmatpush1.xpose.msra.mxu0 0.0
    %1494 = vmatprep.subr.mxu0 0.0
    %1495 = vmatpush1.xpose.msra.mxu0 0.0
    %1496 = vmatprep.subr.mxu0 0.0
    %1497 = vmatpush1.xpose.msra.mxu0 0.0
    %1498 = vmatprep.subr.mxu0 0.0
    %1499 = vmatpush1.xpose.msra.mxu0 0.0
    %1500 = vmatprep.subr.mxu0 0.0
    %1501 = vmatpush1.xpose.msra.mxu0 0.0
    %1502 = vmatprep.subr.mxu0 0.0
    %1503 = vmatpush1.xpose.msra.mxu0 0.0
    %1504 = vmatprep.subr.mxu0 0.0
    %1505 = vmatpush1.xpose.msra.mxu0 0.0
    %1506 = vmatprep.subr.mxu0 0.0
    %1507 = vmatpush1.xpose.msra.mxu0 0.0
    %1508 = vmatprep.subr.mxu0 0.0
    %1509 = vmatpush1.xpose.msra.mxu0 0.0
    %1510 = vmatprep.subr.mxu0 0.0
    %1511 = vmatpush1.xpose.msra.mxu0 0.0
    %1512 = vmatprep.subr.mxu0 0.0
    %1513 = vmatpush1.xpose.msra.mxu0 0.0
    %1514 = vmatprep.subr.mxu0 0.0
    %1515 = vmatpush1.xpose.msra.mxu0 0.0
    %1516 = vmatprep.subr.mxu0 0.0
    %1517 = vmatpush1.xpose.msra.mxu0 0.0
    %1518 = vmatprep.subr.mxu0 0.0
    %1519 = vmatpush1.xpose.msra.mxu0 0.0
    %1520 = vmatprep.subr.mxu0 0.0
    %1521 = vmatpush1.xpose.msra.mxu0 0.0
    %1522 = vmatprep.subr.mxu0 0.0
    %1523 = vmatpush1.xpose.msra.mxu0 0.0
    %1524 = vmatprep.subr.mxu0 0.0
    %1525 = vmatpush1.xpose.msra.mxu0 0.0
    %1526 = vmatprep.subr.mxu0 0.0
    %1527 = vmatpush1.xpose.msra.mxu0 0.0
    %1528 = vmatprep.subr.mxu0 0.0
    %1529 = vmatpush1.xpose.msra.mxu0 0.0
    %1530 = vmatprep.subr.mxu0 0.0
    %1531 = vmatpush1.xpose.msra.mxu0 0.0
    %1532 = vmatprep.subr.mxu0 0.0
    %1533 = vmatpush1.xpose.msra.mxu0 0.0
    %1534 = vmatprep.subr.mxu0 0.0
    %1535 = vmatpush1.xpose.msra.mxu0 0.0
    %1536 = vmatprep.subr.mxu0 0.0
    %1537 = vmatpush1.xpose.msra.mxu0 0.0
    %1538 = vmatprep.subr.mxu0 0.0
    %1539 = vmatpush1.xpose.msra.mxu0 0.0
    %1540 = vmatprep.mubr.f32.mxu0 0.0
    %1541 = vmatmul.mubr.f32.gmra.mrb[0].mxu0 %v1472
    %v1542 = vpop.f32.mrb[0].mxu0
    %v1543 = vadd.f32 0.0, %v1542
    %v1544 = vpop.f32.mrb[0].mxu0
    %1545 = vdwg.mxu0
    %1546 = vrot.lane.b32.xlu0 %v133, 80
    %v1547 = vpop.permute.xlu0 %1546
    %1548 = vrot.lane.b32.xlu0 %v133, 48
    %v1549 = vpop.permute.xlu0 %1548
    %v1550 = vsel %vm141, %v1547, 0
    %v1552 = vsel %vm141, %v1549, 0
    %1554 = vmatprep.subr.mxu0 0.0
    %1555 = vmatpush1.xpose.msra.mxu0 %v1552
    %1556 = vmatprep.subr.mxu0 0.0
    %1557 = vmatpush1.xpose.msra.mxu0 0.0
    %1558 = vmatprep.subr.mxu0 0.0
    %1559 = vmatpush1.xpose.msra.mxu0 0.0
    %1560 = vmatprep.subr.mxu0 0.0
    %1561 = vmatpush1.xpose.msra.mxu0 0.0
    %1562 = vmatprep.subr.mxu0 0.0
    %1563 = vmatpush1.xpose.msra.mxu0 0.0
    %1564 = vmatprep.subr.mxu0 0.0
    %1565 = vmatpush1.xpose.msra.mxu0 0.0
    %1566 = vmatprep.subr.mxu0 0.0
    %1567 = vmatpush1.xpose.msra.mxu0 0.0
    %1568 = vmatprep.subr.mxu0 0.0
    %1569 = vmatpush1.xpose.msra.mxu0 0.0
    %1570 = vmatprep.subr.mxu0 0.0
    %1571 = vmatpush1.xpose.msra.mxu0 0.0
    %1572 = vmatprep.subr.mxu0 0.0
    %1573 = vmatpush1.xpose.msra.mxu0 0.0
    %1574 = vmatprep.subr.mxu0 0.0
    %1575 = vmatpush1.xpose.msra.mxu0 0.0
    %1576 = vmatprep.subr.mxu0 0.0
    %1577 = vmatpush1.xpose.msra.mxu0 0.0
    %1578 = vmatprep.subr.mxu0 0.0
    %1579 = vmatpush1.xpose.msra.mxu0 0.0
    %1580 = vmatprep.subr.mxu0 0.0
    %1581 = vmatpush1.xpose.msra.mxu0 0.0
    %1582 = vmatprep.subr.mxu0 0.0
    %1583 = vmatpush1.xpose.msra.mxu0 0.0
    %1584 = vmatprep.subr.mxu0 0.0
    %1585 = vmatpush1.xpose.msra.mxu0 0.0
    %1586 = vmatprep.subr.mxu0 0.0
    %1587 = vmatpush1.xpose.msra.mxu0 0.0
    %1588 = vmatprep.subr.mxu0 0.0
    %1589 = vmatpush1.xpose.msra.mxu0 0.0
    %1590 = vmatprep.subr.mxu0 0.0
    %1591 = vmatpush1.xpose.msra.mxu0 0.0
    %1592 = vmatprep.subr.mxu0 0.0
    %1593 = vmatpush1.xpose.msra.mxu0 0.0
    %1594 = vmatprep.subr.mxu0 0.0
    %1595 = vmatpush1.xpose.msra.mxu0 0.0
    %1596 = vmatprep.subr.mxu0 0.0
    %1597 = vmatpush1.xpose.msra.mxu0 0.0
    %1598 = vmatprep.subr.mxu0 0.0
    %1599 = vmatpush1.xpose.msra.mxu0 0.0
    %1600 = vmatprep.subr.mxu0 0.0
    %1601 = vmatpush1.xpose.msra.mxu0 0.0
    %1602 = vmatprep.subr.mxu0 0.0
    %1603 = vmatpush1.xpose.msra.mxu0 0.0
    %1604 = vmatprep.subr.mxu0 0.0
    %1605 = vmatpush1.xpose.msra.mxu0 0.0
    %1606 = vmatprep.subr.mxu0 0.0
    %1607 = vmatpush1.xpose.msra.mxu0 0.0
    %1608 = vmatprep.subr.mxu0 0.0
    %1609 = vmatpush1.xpose.msra.mxu0 0.0
    %1610 = vmatprep.subr.mxu0 0.0
    %1611 = vmatpush1.xpose.msra.mxu0 0.0
    %1612 = vmatprep.subr.mxu0 0.0
    %1613 = vmatpush1.xpose.msra.mxu0 0.0
    %1614 = vmatprep.subr.mxu0 0.0
    %1615 = vmatpush1.xpose.msra.mxu0 0.0
    %1616 = vmatprep.subr.mxu0 0.0
    %1617 = vmatpush1.xpose.msra.mxu0 0.0
    %1618 = vmatprep.mubr.f32.mxu0 0.0
    %1619 = vmatmul.mubr.f32.gmra.mrb[0].mxu0 %v1550
    %v1620 = vpop.f32.mrb[0].mxu0
    %v1621 = vadd.f32 0.0, %v1620
    %v1622 = vpop.f32.mrb[0].mxu0
    %1623 = vdwg.mxu0
    %v1624 = vmul.f32 %v1543, 0.5
    %v1625 = vmul.f32 %v1621, 0.5
    %v1626 = vsel %vm297, %v1624, -inf
    %1627 = vmax.xlane.f32.xlu0 %v1626
    %v1628 = vpop.xlane.xlu0 %1627
    %v1629 = vsel %vm297, %v1625, -inf
    %1630 = vmax.xlane.f32.xlu0 %v1629
    %v1631 = vpop.xlane.xlu0 %1630
    %v1632 = vsub.f32 %v1624, %v1628
    %v1633 = vsub.f32 %v1625, %v1631
    %v1634 = vmul.f32 %v1632, 1.442695
    %v1635 = vpow.pop %v1634
    %v1636 = vmul.f32 %v1633, 1.442695
    %v1637 = vpow.pop %v1636
    %v1638 = vsel %vm297, %v1635, 0.0
    %1639 = vadd.xlane.f32.xlu0 %v1638
    %v1640 = vpop.xlane.xlu0 %1639
    %v1641 = vsel %vm297, %v1637, 0.0
    %1642 = vadd.xlane.f32.xlu0 %v1641
    %v1643 = vpop.xlane.xlu0 %1642
    %v1644 = vrcp.pop %v1640
    %v1645 = vrcp.pop %v1643
    %v1646 = vmul.f32 %v1635, %v1644
    %v1647 = vmul.f32 %v1637, %v1645
    %1648 = vrot.lane.b32.xlu0 %v128, 16
    %v1649 = vpop.permute.xlu0 %1648
    %v1652 = vsel %vm297, %v1646, 0
    %1654 = vmatprep.subr.mxu0 0.0
    %1655 = vmatpush1.msra.mxu0 %v1649
    %1656 = vmatprep.subr.mxu0 0.0
    %1657 = vmatpush1.msra.mxu0 0.0
    %1658 = vmatprep.subr.mxu0 0.0
    %1659 = vmatpush1.msra.mxu0 0.0
    %1660 = vmatprep.subr.mxu0 0.0
    %1661 = vmatpush1.msra.mxu0 0.0
    %1662 = vmatprep.subr.mxu0 0.0
    %1663 = vmatpush1.msra.mxu0 0.0
    %1664 = vmatprep.subr.mxu0 0.0
    %1665 = vmatpush1.msra.mxu0 0.0
    %1666 = vmatprep.subr.mxu0 0.0
    %1667 = vmatpush1.msra.mxu0 0.0
    %1668 = vmatprep.subr.mxu0 0.0
    %1669 = vmatpush1.msra.mxu0 0.0
    %1670 = vmatprep.subr.mxu0 0.0
    %1671 = vmatpush1.msra.mxu0 0.0
    %1672 = vmatprep.subr.mxu0 0.0
    %1673 = vmatpush1.msra.mxu0 0.0
    %1674 = vmatprep.subr.mxu0 0.0
    %1675 = vmatpush1.msra.mxu0 0.0
    %1676 = vmatprep.subr.mxu0 0.0
    %1677 = vmatpush1.msra.mxu0 0.0
    %1678 = vmatprep.subr.mxu0 0.0
    %1679 = vmatpush1.msra.mxu0 0.0
    %1680 = vmatprep.subr.mxu0 0.0
    %1681 = vmatpush1.msra.mxu0 0.0
    %1682 = vmatprep.subr.mxu0 0.0
    %1683 = vmatpush1.msra.mxu0 0.0
    %1684 = vmatprep.subr.mxu0 0.0
    %1685 = vmatpush1.msra.mxu0 0.0
    %1686 = vmatprep.subr.mxu0 0.0
    %1687 = vmatpush1.msra.mxu0 0.0
    %1688 = vmatprep.subr.mxu0 0.0
    %1689 = vmatpush1.msra.mxu0 0.0
    %1690 = vmatprep.subr.mxu0 0.0
    %1691 = vmatpush1.msra.mxu0 0.0
    %1692 = vmatprep.subr.mxu0 0.0
    %1693 = vmatpush1.msra.mxu0 0.0
    %1694 = vmatprep.subr.mxu0 0.0
    %1695 = vmatpush1.msra.mxu0 0.0
    %1696 = vmatprep.subr.mxu0 0.0
    %1697 = vmatpush1.msra.mxu0 0.0
    %1698 = vmatprep.subr.mxu0 0.0
    %1699 = vmatpush1.msra.mxu0 0.0
    %1700 = vmatprep.subr.mxu0 0.0
    %1701 = vmatpush1.msra.mxu0 0.0
    %1702 = vmatprep.subr.mxu0 0.0
    %1703 = vmatpush1.msra.mxu0 0.0
    %1704 = vmatprep.subr.mxu0 0.0
    %1705 = vmatpush1.msra.mxu0 0.0
    %1706 = vmatprep.subr.mxu0 0.0
    %1707 = vmatpush1.msra.mxu0 0.0
    %1708 = vmatprep.subr.mxu0 0.0
    %1709 = vmatpush1.msra.mxu0 0.0
    %1710 = vmatprep.subr.mxu0 0.0
    %1711 = vmatpush1.msra.mxu0 0.0
    %1712 = vmatprep.subr.mxu0 0.0
    %1713 = vmatpush1.msra.mxu0 0.0
    %1714 = vmatprep.subr.mxu0 0.0
    %1715 = vmatpush1.msra.mxu0 0.0
    %1716 = vmatprep.subr.mxu0 0.0
    %1717 = vmatpush1.msra.mxu0 0.0
    %1718 = vmatprep.mubr.f32.mxu0 0.0
    %1719 = vmatmul.mubr.f32.gmra.mrb[0].mxu0 %v1652
    %v1720 = vpop.f32.mrb[0].mxu0
    %v1721 = vadd.f32 0.0, %v1720
    %v1722 = vpop.f32.mrb[0].mxu0
    %1723 = vdwg.mxu0
    %1724 = vrot.lane.b32.xlu0 %v133, 16
    %v1725 = vpop.permute.xlu0 %1724
    %v1728 = vsel %vm297, %v1647, 0
    %1730 = vmatprep.subr.mxu0 0.0
    %1731 = vmatpush1.msra.mxu0 %v1725
    %1732 = vmatprep.subr.mxu0 0.0
    %1733 = vmatpush1.msra.mxu0 0.0
    %1734 = vmatprep.subr.mxu0 0.0
    %1735 = vmatpush1.msra.mxu0 0.0
    %1736 = vmatprep.subr.mxu0 0.0
    %1737 = vmatpush1.msra.mxu0 0.0
    %1738 = vmatprep.subr.mxu0 0.0
    %1739 = vmatpush1.msra.mxu0 0.0
    %1740 = vmatprep.subr.mxu0 0.0
    %1741 = vmatpush1.msra.mxu0 0.0
    %1742 = vmatprep.subr.mxu0 0.0
    %1743 = vmatpush1.msra.mxu0 0.0
    %1744 = vmatprep.subr.mxu0 0.0
    %1745 = vmatpush1.msra.mxu0 0.0
    %1746 = vmatprep.subr.mxu0 0.0
    %1747 = vmatpush1.msra.mxu0 0.0
    %1748 = vmatprep.subr.mxu0 0.0
    %1749 = vmatpush1.msra.mxu0 0.0
    %1750 = vmatprep.subr.mxu0 0.0
    %1751 = vmatpush1.msra.mxu0 0.0
    %1752 = vmatprep.subr.mxu0 0.0
    %1753 = vmatpush1.msra.mxu0 0.0
    %1754 = vmatprep.subr.mxu0 0.0
    %1755 = vmatpush1.msra.mxu0 0.0
    %1756 = vmatprep.subr.mxu0 0.0
    %1757 = vmatpush1.msra.mxu0 0.0
    %1758 = vmatprep.subr.mxu0 0.0
    %1759 = vmatpush1.msra.mxu0 0.0
    %1760 = vmatprep.subr.mxu0 0.0
    %1761 = vmatpush1.msra.mxu0 0.0
    %1762 = vmatprep.subr.mxu0 0.0
    %1763 = vmatpush1.msra.mxu0 0.0
    %1764 = vmatprep.subr.mxu0 0.0
    %1765 = vmatpush1.msra.mxu0 0.0
    %1766 = vmatprep.subr.mxu0 0.0
    %1767 = vmatpush1.msra.mxu0 0.0
    %1768 = vmatprep.subr.mxu0 0.0
    %1769 = vmatpush1.msra.mxu0 0.0
    %1770 = vmatprep.subr.mxu0 0.0
    %1771 = vmatpush1.msra.mxu0 0.0
    %1772 = vmatprep.subr.mxu0 0.0
    %1773 = vmatpush1.msra.mxu0 0.0
    %1774 = vmatprep.subr.mxu0 0.0
    %1775 = vmatpush1.msra.mxu0 0.0
    %1776 = vmatprep.subr.mxu0 0.0
    %1777 = vmatpush1.msra.mxu0 0.0
    %1778 = vmatprep.subr.mxu0 0.0
    %1779 = vmatpush1.msra.mxu0 0.0
    %1780 = vmatprep.subr.mxu0 0.0
    %1781 = vmatpush1.msra.mxu0 0.0
    %1782 = vmatprep.subr.mxu0 0.0
    %1783 = vmatpush1.msra.mxu0 0.0
    %1784 = vmatprep.subr.mxu0 0.0
    %1785 = vmatpush1.msra.mxu0 0.0
    %1786 = vmatprep.subr.mxu0 0.0
    %1787 = vmatpush1.msra.mxu0 0.0
    %1788 = vmatprep.subr.mxu0 0.0
    %1789 = vmatpush1.msra.mxu0 0.0
    %1790 = vmatprep.subr.mxu0 0.0
    %1791 = vmatpush1.msra.mxu0 0.0
    %1792 = vmatprep.subr.mxu0 0.0
    %1793 = vmatpush1.msra.mxu0 0.0
    %1794 = vmatprep.mubr.f32.mxu0 0.0
    %1795 = vmatmul.mubr.f32.gmra.mrb[0].mxu0 %v1728
    %v1796 = vpop.f32.mrb[0].mxu0
    %v1797 = vadd.f32 0.0, %v1796
    %v1798 = vpop.f32.mrb[0].mxu0
    %1799 = vdwg.mxu0
    %1800 = vrot.lane.b32.xlu0 %v128, 76
    %v1801 = vpop.permute.xlu0 %1800
    %1802 = vrot.lane.b32.xlu0 %v128, 44
    %v1803 = vpop.permute.xlu0 %1802
    %v1804 = vsel %vm141, %v1801, 0
    %v1806 = vsel %vm141, %v1803, 0
    %1808 = vmatprep.subr.mxu0 0.0
    %1809 = vmatpush1.xpose.msra.mxu0 %v1806
    %1810 = vmatprep.subr.mxu0 0.0
    %1811 = vmatpush1.xpose.msra.mxu0 0.0
    %1812 = vmatprep.subr.mxu0 0.0
    %1813 = vmatpush1.xpose.msra.mxu0 0.0
    %1814 = vmatprep.subr.mxu0 0.0
    %1815 = vmatpush1.xpose.msra.mxu0 0.0
    %1816 = vmatprep.subr.mxu0 0.0
    %1817 = vmatpush1.xpose.msra.mxu0 0.0
    %1818 = vmatprep.subr.mxu0 0.0
    %1819 = vmatpush1.xpose.msra.mxu0 0.0
    %1820 = vmatprep.subr.mxu0 0.0
    %1821 = vmatpush1.xpose.msra.mxu0 0.0
    %1822 = vmatprep.subr.mxu0 0.0
    %1823 = vmatpush1.xpose.msra.mxu0 0.0
    %1824 = vmatprep.subr.mxu0 0.0
    %1825 = vmatpush1.xpose.msra.mxu0 0.0
    %1826 = vmatprep.subr.mxu0 0.0
    %1827 = vmatpush1.xpose.msra.mxu0 0.0
    %1828 = vmatprep.subr.mxu0 0.0
    %1829 = vmatpush1.xpose.msra.mxu0 0.0
    %1830 = vmatprep.subr.mxu0 0.0
    %1831 = vmatpush1.xpose.msra.mxu0 0.0
    %1832 = vmatprep.subr.mxu0 0.0
    %1833 = vmatpush1.xpose.msra.mxu0 0.0
    %1834 = vmatprep.subr.mxu0 0.0
    %1835 = vmatpush1.xpose.msra.mxu0 0.0
    %1836 = vmatprep.subr.mxu0 0.0
    %1837 = vmatpush1.xpose.msra.mxu0 0.0
    %1838 = vmatprep.subr.mxu0 0.0
    %1839 = vmatpush1.xpose.msra.mxu0 0.0
    %1840 = vmatprep.subr.mxu0 0.0
    %1841 = vmatpush1.xpose.msra.mxu0 0.0
    %1842 = vmatprep.subr.mxu0 0.0
    %1843 = vmatpush1.xpose.msra.mxu0 0.0
    %1844 = vmatprep.subr.mxu0 0.0
    %1845 = vmatpush1.xpose.msra.mxu0 0.0
    %1846 = vmatprep.subr.mxu0 0.0
    %1847 = vmatpush1.xpose.msra.mxu0 0.0
    %1848 = vmatprep.subr.mxu0 0.0
    %1849 = vmatpush1.xpose.msra.mxu0 0.0
    %1850 = vmatprep.subr.mxu0 0.0
    %1851 = vmatpush1.xpose.msra.mxu0 0.0
    %1852 = vmatprep.subr.mxu0 0.0
    %1853 = vmatpush1.xpose.msra.mxu0 0.0
    %1854 = vmatprep.subr.mxu0 0.0
    %1855 = vmatpush1.xpose.msra.mxu0 0.0
    %1856 = vmatprep.subr.mxu0 0.0
    %1857 = vmatpush1.xpose.msra.mxu0 0.0
    %1858 = vmatprep.subr.mxu0 0.0
    %1859 = vmatpush1.xpose.msra.mxu0 0.0
    %1860 = vmatprep.subr.mxu0 0.0
    %1861 = vmatpush1.xpose.msra.mxu0 0.0
    %1862 = vmatprep.subr.mxu0 0.0
    %1863 = vmatpush1.xpose.msra.mxu0 0.0
    %1864 = vmatprep.subr.mxu0 0.0
    %1865 = vmatpush1.xpose.msra.mxu0 0.0
    %1866 = vmatprep.subr.mxu0 0.0
    %1867 = vmatpush1.xpose.msra.mxu0 0.0
    %1868 = vmatprep.subr.mxu0 0.0
    %1869 = vmatpush1.xpose.msra.mxu0 0.0
    %1870 = vmatprep.subr.mxu0 0.0
    %1871 = vmatpush1.xpose.msra.mxu0 0.0
    %1872 = vmatprep.mubr.f32.mxu0 0.0
    %1873 = vmatmul.mubr.f32.gmra.mrb[0].mxu0 %v1804
    %v1874 = vpop.f32.mrb[0].mxu0
    %v1875 = vadd.f32 0.0, %v1874
    %v1876 = vpop.f32.mrb[0].mxu0
    %1877 = vdwg.mxu0
    %1878 = vrot.lane.b32.xlu0 %v133, 76
    %v1879 = vpop.permute.xlu0 %1878
    %1880 = vrot.lane.b32.xlu0 %v133, 44
    %v1881 = vpop.permute.xlu0 %1880
    %v1882 = vsel %vm141, %v1879, 0
    %v1884 = vsel %vm141, %v1881, 0
    %1886 = vmatprep.subr.mxu0 0.0
    %1887 = vmatpush1.xpose.msra.mxu0 %v1884
    %1888 = vmatprep.subr.mxu0 0.0
    %1889 = vmatpush1.xpose.msra.mxu0 0.0
    %1890 = vmatprep.subr.mxu0 0.0
    %1891 = vmatpush1.xpose.msra.mxu0 0.0
    %1892 = vmatprep.subr.mxu0 0.0
    %1893 = vmatpush1.xpose.msra.mxu0 0.0
    %1894 = vmatprep.subr.mxu0 0.0
    %1895 = vmatpush1.xpose.msra.mxu0 0.0
    %1896 = vmatprep.subr.mxu0 0.0
    %1897 = vmatpush1.xpose.msra.mxu0 0.0
    %1898 = vmatprep.subr.mxu0 0.0
    %1899 = vmatpush1.xpose.msra.mxu0 0.0
    %1900 = vmatprep.subr.mxu0 0.0
    %1901 = vmatpush1.xpose.msra.mxu0 0.0
    %1902 = vmatprep.subr.mxu0 0.0
    %1903 = vmatpush1.xpose.msra.mxu0 0.0
    %1904 = vmatprep.subr.mxu0 0.0
    %1905 = vmatpush1.xpose.msra.mxu0 0.0
    %1906 = vmatprep.subr.mxu0 0.0
    %1907 = vmatpush1.xpose.msra.mxu0 0.0
    %1908 = vmatprep.subr.mxu0 0.0
    %1909 = vmatpush1.xpose.msra.mxu0 0.0
    %1910 = vmatprep.subr.mxu0 0.0
    %1911 = vmatpush1.xpose.msra.mxu0 0.0
    %1912 = vmatprep.subr.mxu0 0.0
    %1913 = vmatpush1.xpose.msra.mxu0 0.0
    %1914 = vmatprep.subr.mxu0 0.0
    %1915 = vmatpush1.xpose.msra.mxu0 0.0
    %1916 = vmatprep.subr.mxu0 0.0
    %1917 = vmatpush1.xpose.msra.mxu0 0.0
    %1918 = vmatprep.subr.mxu0 0.0
    %1919 = vmatpush1.xpose.msra.mxu0 0.0
    %1920 = vmatprep.subr.mxu0 0.0
    %1921 = vmatpush1.xpose.msra.mxu0 0.0
    %1922 = vmatprep.subr.mxu0 0.0
    %1923 = vmatpush1.xpose.msra.mxu0 0.0
    %1924 = vmatprep.subr.mxu0 0.0
    %1925 = vmatpush1.xpose.msra.mxu0 0.0
    %1926 = vmatprep.subr.mxu0 0.0
    %1927 = vmatpush1.xpose.msra.mxu0 0.0
    %1928 = vmatprep.subr.mxu0 0.0
    %1929 = vmatpush1.xpose.msra.mxu0 0.0
    %1930 = vmatprep.subr.mxu0 0.0
    %1931 = vmatpush1.xpose.msra.mxu0 0.0
    %1932 = vmatprep.subr.mxu0 0.0
    %1933 = vmatpush1.xpose.msra.mxu0 0.0
    %1934 = vmatprep.subr.mxu0 0.0
    %1935 = vmatpush1.xpose.msra.mxu0 0.0
    %1936 = vmatprep.subr.mxu0 0.0
    %1937 = vmatpush1.xpose.msra.mxu0 0.0
    %1938 = vmatprep.subr.mxu0 0.0
    %1939 = vmatpush1.xpose.msra.mxu0 0.0
    %1940 = vmatprep.subr.mxu0 0.0
    %1941 = vmatpush1.xpose.msra.mxu0 0.0
    %1942 = vmatprep.subr.mxu0 0.0
    %1943 = vmatpush1.xpose.msra.mxu0 0.0
    %1944 = vmatprep.subr.mxu0 0.0
    %1945 = vmatpush1.xpose.msra.mxu0 0.0
    %1946 = vmatprep.subr.mxu0 0.0
    %1947 = vmatpush1.xpose.msra.mxu0 0.0
    %1948 = vmatprep.subr.mxu0 0.0
    %1949 = vmatpush1.xpose.msra.mxu0 0.0
    %1950 = vmatprep.mubr.f32.mxu0 0.0
    %1951 = vmatmul.mubr.f32.gmra.mrb[0].mxu0 %v1882
    %v1952 = vpop.f32.mrb[0].mxu0
    %v1953 = vadd.f32 0.0, %v1952
    %v1954 = vpop.f32.mrb[0].mxu0
    %1955 = vdwg.mxu0
    %v1956 = vmul.f32 %v1875, 0.5
    %v1957 = vmul.f32 %v1953, 0.5
    %v1958 = vsel %vm297, %v1956, -inf
    %1959 = vmax.xlane.f32.xlu0 %v1958
    %v1960 = vpop.xlane.xlu0 %1959
    %v1961 = vsel %vm297, %v1957, -inf
    %1962 = vmax.xlane.f32.xlu0 %v1961
    %v1963 = vpop.xlane.xlu0 %1962
    %v1964 = vsub.f32 %v1956, %v1960
    %v1965 = vsub.f32 %v1957, %v1963
    %v1966 = vmul.f32 %v1964, 1.442695
    %v1967 = vpow.pop %v1966
    %v1968 = vmul.f32 %v1965, 1.442695
    %v1969 = vpow.pop %v1968
    %v1970 = vsel %vm297, %v1967, 0.0
    %1971 = vadd.xlane.f32.xlu0 %v1970
    %v1972 = vpop.xlane.xlu0 %1971
    %v1973 = vsel %vm297, %v1969, 0.0
    %1974 = vadd.xlane.f32.xlu0 %v1973
    %v1975 = vpop.xlane.xlu0 %1974
    %v1976 = vrcp.pop %v1972
    %v1977 = vrcp.pop %v1975
    %v1978 = vmul.f32 %v1967, %v1976
    %v1979 = vmul.f32 %v1969, %v1977
    %1980 = vrot.lane.b32.xlu0 %v128, 12
    %v1981 = vpop.permute.xlu0 %1980
    %v1984 = vsel %vm297, %v1978, 0
    %1986 = vmatprep.subr.mxu0 0.0
    %1987 = vmatpush1.msra.mxu0 %v1981
    %1988 = vmatprep.subr.mxu0 0.0
    %1989 = vmatpush1.msra.mxu0 0.0
    %1990 = vmatprep.subr.mxu0 0.0
    %1991 = vmatpush1.msra.mxu0 0.0
    %1992 = vmatprep.subr.mxu0 0.0
    %1993 = vmatpush1.msra.mxu0 0.0
    %1994 = vmatprep.subr.mxu0 0.0
    %1995 = vmatpush1.msra.mxu0 0.0
    %1996 = vmatprep.subr.mxu0 0.0
    %1997 = vmatpush1.msra.mxu0 0.0
    %1998 = vmatprep.subr.mxu0 0.0
    %1999 = vmatpush1.msra.mxu0 0.0
    %2000 = vmatprep.subr.mxu0 0.0
    %2001 = vmatpush1.msra.mxu0 0.0
    %2002 = vmatprep.subr.mxu0 0.0
    %2003 = vmatpush1.msra.mxu0 0.0
    %2004 = vmatprep.subr.mxu0 0.0
    %2005 = vmatpush1.msra.mxu0 0.0
    %2006 = vmatprep.subr.mxu0 0.0
    %2007 = vmatpush1.msra.mxu0 0.0
    %2008 = vmatprep.subr.mxu0 0.0
    %2009 = vmatpush1.msra.mxu0 0.0
    %2010 = vmatprep.subr.mxu0 0.0
    %2011 = vmatpush1.msra.mxu0 0.0
    %2012 = vmatprep.subr.mxu0 0.0
    %2013 = vmatpush1.msra.mxu0 0.0
    %2014 = vmatprep.subr.mxu0 0.0
    %2015 = vmatpush1.msra.mxu0 0.0
    %2016 = vmatprep.subr.mxu0 0.0
    %2017 = vmatpush1.msra.mxu0 0.0
    %2018 = vmatprep.subr.mxu0 0.0
    %2019 = vmatpush1.msra.mxu0 0.0
    %2020 = vmatprep.subr.mxu0 0.0
    %2021 = vmatpush1.msra.mxu0 0.0
    %2022 = vmatprep.subr.mxu0 0.0
    %2023 = vmatpush1.msra.mxu0 0.0
    %2024 = vmatprep.subr.mxu0 0.0
    %2025 = vmatpush1.msra.mxu0 0.0
    %2026 = vmatprep.subr.mxu0 0.0
    %2027 = vmatpush1.msra.mxu0 0.0
    %2028 = vmatprep.subr.mxu0 0.0
    %2029 = vmatpush1.msra.mxu0 0.0
    %2030 = vmatprep.subr.mxu0 0.0
    %2031 = vmatpush1.msra.mxu0 0.0
    %2032 = vmatprep.subr.mxu0 0.0
    %2033 = vmatpush1.msra.mxu0 0.0
    %2034 = vmatprep.subr.mxu0 0.0
    %2035 = vmatpush1.msra.mxu0 0.0
    %2036 = vmatprep.subr.mxu0 0.0
    %2037 = vmatpush1.msra.mxu0 0.0
    %2038 = vmatprep.subr.mxu0 0.0
    %2039 = vmatpush1.msra.mxu0 0.0
    %2040 = vmatprep.subr.mxu0 0.0
    %2041 = vmatpush1.msra.mxu0 0.0
    %2042 = vmatprep.subr.mxu0 0.0
    %2043 = vmatpush1.msra.mxu0 0.0
    %2044 = vmatprep.subr.mxu0 0.0
    %2045 = vmatpush1.msra.mxu0 0.0
    %2046 = vmatprep.subr.mxu0 0.0
    %2047 = vmatpush1.msra.mxu0 0.0
    %2048 = vmatprep.subr.mxu0 0.0
    %2049 = vmatpush1.msra.mxu0 0.0
    %2050 = vmatprep.mubr.f32.mxu0 0.0
    %2051 = vmatmul.mubr.f32.gmra.mrb[0].mxu0 %v1984
    %v2052 = vpop.f32.mrb[0].mxu0
    %v2053 = vadd.f32 0.0, %v2052
    %v2054 = vpop.f32.mrb[0].mxu0
    %2055 = vdwg.mxu0
    %2056 = vrot.lane.b32.xlu0 %v133, 12
    %v2057 = vpop.permute.xlu0 %2056
    %v2060 = vsel %vm297, %v1979, 0
    %2062 = vmatprep.subr.mxu0 0.0
    %2063 = vmatpush1.msra.mxu0 %v2057
    %2064 = vmatprep.subr.mxu0 0.0
    %2065 = vmatpush1.msra.mxu0 0.0
    %2066 = vmatprep.subr.mxu0 0.0
    %2067 = vmatpush1.msra.mxu0 0.0
    %2068 = vmatprep.subr.mxu0 0.0
    %2069 = vmatpush1.msra.mxu0 0.0
    %2070 = vmatprep.subr.mxu0 0.0
    %2071 = vmatpush1.msra.mxu0 0.0
    %2072 = vmatprep.subr.mxu0 0.0
    %2073 = vmatpush1.msra.mxu0 0.0
    %2074 = vmatprep.subr.mxu0 0.0
    %2075 = vmatpush1.msra.mxu0 0.0
    %2076 = vmatprep.subr.mxu0 0.0
    %2077 = vmatpush1.msra.mxu0 0.0
    %2078 = vmatprep.subr.mxu0 0.0
    %2079 = vmatpush1.msra.mxu0 0.0
    %2080 = vmatprep.subr.mxu0 0.0
    %2081 = vmatpush1.msra.mxu0 0.0
    %2082 = vmatprep.subr.mxu0 0.0
    %2083 = vmatpush1.msra.mxu0 0.0
    %2084 = vmatprep.subr.mxu0 0.0
    %2085 = vmatpush1.msra.mxu0 0.0
    %2086 = vmatprep.subr.mxu0 0.0
    %2087 = vmatpush1.msra.mxu0 0.0
    %2088 = vmatprep.subr.mxu0 0.0
    %2089 = vmatpush1.msra.mxu0 0.0
    %2090 = vmatprep.subr.mxu0 0.0
    %2091 = vmatpush1.msra.mxu0 0.0
    %2092 = vmatprep.subr.mxu0 0.0
    %2093 = vmatpush1.msra.mxu0 0.0
    %2094 = vmatprep.subr.mxu0 0.0
    %2095 = vmatpush1.msra.mxu0 0.0
    %2096 = vmatprep.subr.mxu0 0.0
    %2097 = vmatpush1.msra.mxu0 0.0
    %2098 = vmatprep.subr.mxu0 0.0
    %2099 = vmatpush1.msra.mxu0 0.0
    %2100 = vmatprep.subr.mxu0 0.0
    %2101 = vmatpush1.msra.mxu0 0.0
    %2102 = vmatprep.subr.mxu0 0.0
    %2103 = vmatpush1.msra.mxu0 0.0
    %2104 = vmatprep.subr.mxu0 0.0
    %2105 = vmatpush1.msra.mxu0 0.0
    %2106 = vmatprep.subr.mxu0 0.0
    %2107 = vmatpush1.msra.mxu0 0.0
    %2108 = vmatprep.subr.mxu0 0.0
    %2109 = vmatpush1.msra.mxu0 0.0
    %2110 = vmatprep.subr.mxu0 0.0
    %2111 = vmatpush1.msra.mxu0 0.0
    %2112 = vmatprep.subr.mxu0 0.0
    %2113 = vmatpush1.msra.mxu0 0.0
    %2114 = vmatprep.subr.mxu0 0.0
    %2115 = vmatpush1.msra.mxu0 0.0
    %2116 = vmatprep.subr.mxu0 0.0
    %2117 = vmatpush1.msra.mxu0 0.0
    %2118 = vmatprep.subr.mxu0 0.0
    %2119 = vmatpush1.msra.mxu0 0.0
    %2120 = vmatprep.subr.mxu0 0.0
    %2121 = vmatpush1.msra.mxu0 0.0
    %2122 = vmatprep.subr.mxu0 0.0
    %2123 = vmatpush1.msra.mxu0 0.0
    %2124 = vmatprep.subr.mxu0 0.0
    %2125 = vmatpush1.msra.mxu0 0.0
    %2126 = vmatprep.mubr.f32.mxu0 0.0
    %2127 = vmatmul.mubr.f32.gmra.mrb[0].mxu0 %v2060
    %v2128 = vpop.f32.mrb[0].mxu0
    %v2129 = vadd.f32 0.0, %v2128
    %v2130 = vpop.f32.mrb[0].mxu0
    %2131 = vdwg.mxu0
    %2132 = vrot.lane.b32.xlu0 %v128, 72
    %v2133 = vpop.permute.xlu0 %2132
    %2134 = vrot.lane.b32.xlu0 %v128, 40
    %v2135 = vpop.permute.xlu0 %2134
    %v2136 = vsel %vm141, %v2133, 0
    %v2138 = vsel %vm141, %v2135, 0
    %2140 = vmatprep.subr.mxu0 0.0
    %2141 = vmatpush1.xpose.msra.mxu0 %v2138
    %2142 = vmatprep.subr.mxu0 0.0
    %2143 = vmatpush1.xpose.msra.mxu0 0.0
    %2144 = vmatprep.subr.mxu0 0.0
    %2145 = vmatpush1.xpose.msra.mxu0 0.0
    %2146 = vmatprep.subr.mxu0 0.0
    %2147 = vmatpush1.xpose.msra.mxu0 0.0
    %2148 = vmatprep.subr.mxu0 0.0
    %2149 = vmatpush1.xpose.msra.mxu0 0.0
    %2150 = vmatprep.subr.mxu0 0.0
    %2151 = vmatpush1.xpose.msra.mxu0 0.0
    %2152 = vmatprep.subr.mxu0 0.0
    %2153 = vmatpush1.xpose.msra.mxu0 0.0
    %2154 = vmatprep.subr.mxu0 0.0
    %2155 = vmatpush1.xpose.msra.mxu0 0.0
    %2156 = vmatprep.subr.mxu0 0.0
    %2157 = vmatpush1.xpose.msra.mxu0 0.0
    %2158 = vmatprep.subr.mxu0 0.0
    %2159 = vmatpush1.xpose.msra.mxu0 0.0
    %2160 = vmatprep.subr.mxu0 0.0
    %2161 = vmatpush1.xpose.msra.mxu0 0.0
    %2162 = vmatprep.subr.mxu0 0.0
    %2163 = vmatpush1.xpose.msra.mxu0 0.0
    %2164 = vmatprep.subr.mxu0 0.0
    %2165 = vmatpush1.xpose.msra.mxu0 0.0
    %2166 = vmatprep.subr.mxu0 0.0
    %2167 = vmatpush1.xpose.msra.mxu0 0.0
    %2168 = vmatprep.subr.mxu0 0.0
    %2169 = vmatpush1.xpose.msra.mxu0 0.0
    %2170 = vmatprep.subr.mxu0 0.0
    %2171 = vmatpush1.xpose.msra.mxu0 0.0
    %2172 = vmatprep.subr.mxu0 0.0
    %2173 = vmatpush1.xpose.msra.mxu0 0.0
    %2174 = vmatprep.subr.mxu0 0.0
    %2175 = vmatpush1.xpose.msra.mxu0 0.0
    %2176 = vmatprep.subr.mxu0 0.0
    %2177 = vmatpush1.xpose.msra.mxu0 0.0
    %2178 = vmatprep.subr.mxu0 0.0
    %2179 = vmatpush1.xpose.msra.mxu0 0.0
    %2180 = vmatprep.subr.mxu0 0.0
    %2181 = vmatpush1.xpose.msra.mxu0 0.0
    %2182 = vmatprep.subr.mxu0 0.0
    %2183 = vmatpush1.xpose.msra.mxu0 0.0
    %2184 = vmatprep.subr.mxu0 0.0
    %2185 = vmatpush1.xpose.msra.mxu0 0.0
    %2186 = vmatprep.subr.mxu0 0.0
    %2187 = vmatpush1.xpose.msra.mxu0 0.0
    %2188 = vmatprep.subr.mxu0 0.0
    %2189 = vmatpush1.xpose.msra.mxu0 0.0
    %2190 = vmatprep.subr.mxu0 0.0
    %2191 = vmatpush1.xpose.msra.mxu0 0.0
    %2192 = vmatprep.subr.mxu0 0.0
    %2193 = vmatpush1.xpose.msra.mxu0 0.0
    %2194 = vmatprep.subr.mxu0 0.0
    %2195 = vmatpush1.xpose.msra.mxu0 0.0
    %2196 = vmatprep.subr.mxu0 0.0
    %2197 = vmatpush1.xpose.msra.mxu0 0.0
    %2198 = vmatprep.subr.mxu0 0.0
    %2199 = vmatpush1.xpose.msra.mxu0 0.0
    %2200 = vmatprep.subr.mxu0 0.0
    %2201 = vmatpush1.xpose.msra.mxu0 0.0
    %2202 = vmatprep.subr.mxu0 0.0
    %2203 = vmatpush1.xpose.msra.mxu0 0.0
    %2204 = vmatprep.mubr.f32.mxu0 0.0
    %2205 = vmatmul.mubr.f32.gmra.mrb[0].mxu0 %v2136
    %v2206 = vpop.f32.mrb[0].mxu0
    %v2207 = vadd.f32 0.0, %v2206
    %v2208 = vpop.f32.mrb[0].mxu0
    %2209 = vdwg.mxu0
    %2210 = vrot.lane.b32.xlu0 %v133, 72
    %v2211 = vpop.permute.xlu0 %2210
    %2212 = vrot.lane.b32.xlu0 %v133, 40
    %v2213 = vpop.permute.xlu0 %2212
    %v2214 = vsel %vm141, %v2211, 0
    %v2216 = vsel %vm141, %v2213, 0
    %2218 = vmatprep.subr.mxu0 0.0
    %2219 = vmatpush1.xpose.msra.mxu0 %v2216
    %2220 = vmatprep.subr.mxu0 0.0
    %2221 = vmatpush1.xpose.msra.mxu0 0.0
    %2222 = vmatprep.subr.mxu0 0.0
    %2223 = vmatpush1.xpose.msra.mxu0 0.0
    %2224 = vmatprep.subr.mxu0 0.0
    %2225 = vmatpush1.xpose.msra.mxu0 0.0
    %2226 = vmatprep.subr.mxu0 0.0
    %2227 = vmatpush1.xpose.msra.mxu0 0.0
    %2228 = vmatprep.subr.mxu0 0.0
    %2229 = vmatpush1.xpose.msra.mxu0 0.0
    %2230 = vmatprep.subr.mxu0 0.0
    %2231 = vmatpush1.xpose.msra.mxu0 0.0
    %2232 = vmatprep.subr.mxu0 0.0
    %2233 = vmatpush1.xpose.msra.mxu0 0.0
    %2234 = vmatprep.subr.mxu0 0.0
    %2235 = vmatpush1.xpose.msra.mxu0 0.0
    %2236 = vmatprep.subr.mxu0 0.0
    %2237 = vmatpush1.xpose.msra.mxu0 0.0
    %2238 = vmatprep.subr.mxu0 0.0
    %2239 = vmatpush1.xpose.msra.mxu0 0.0
    %2240 = vmatprep.subr.mxu0 0.0
    %2241 = vmatpush1.xpose.msra.mxu0 0.0
    %2242 = vmatprep.subr.mxu0 0.0
    %2243 = vmatpush1.xpose.msra.mxu0 0.0
    %2244 = vmatprep.subr.mxu0 0.0
    %2245 = vmatpush1.xpose.msra.mxu0 0.0
    %2246 = vmatprep.subr.mxu0 0.0
    %2247 = vmatpush1.xpose.msra.mxu0 0.0
    %2248 = vmatprep.subr.mxu0 0.0
    %2249 = vmatpush1.xpose.msra.mxu0 0.0
    %2250 = vmatprep.subr.mxu0 0.0
    %2251 = vmatpush1.xpose.msra.mxu0 0.0
    %2252 = vmatprep.subr.mxu0 0.0
    %2253 = vmatpush1.xpose.msra.mxu0 0.0
    %2254 = vmatprep.subr.mxu0 0.0
    %2255 = vmatpush1.xpose.msra.mxu0 0.0
    %2256 = vmatprep.subr.mxu0 0.0
    %2257 = vmatpush1.xpose.msra.mxu0 0.0
    %2258 = vmatprep.subr.mxu0 0.0
    %2259 = vmatpush1.xpose.msra.mxu0 0.0
    %2260 = vmatprep.subr.mxu0 0.0
    %2261 = vmatpush1.xpose.msra.mxu0 0.0
    %2262 = vmatprep.subr.mxu0 0.0
    %2263 = vmatpush1.xpose.msra.mxu0 0.0
    %2264 = vmatprep.subr.mxu0 0.0
    %2265 = vmatpush1.xpose.msra.mxu0 0.0
    %2266 = vmatprep.subr.mxu0 0.0
    %2267 = vmatpush1.xpose.msra.mxu0 0.0
    %2268 = vmatprep.subr.mxu0 0.0
    %2269 = vmatpush1.xpose.msra.mxu0 0.0
    %2270 = vmatprep.subr.mxu0 0.0
    %2271 = vmatpush1.xpose.msra.mxu0 0.0
    %2272 = vmatprep.subr.mxu0 0.0
    %2273 = vmatpush1.xpose.msra.mxu0 0.0
    %2274 = vmatprep.subr.mxu0 0.0
    %2275 = vmatpush1.xpose.msra.mxu0 0.0
    %2276 = vmatprep.subr.mxu0 0.0
    %2277 = vmatpush1.xpose.msra.mxu0 0.0
    %2278 = vmatprep.subr.mxu0 0.0
    %2279 = vmatpush1.xpose.msra.mxu0 0.0
    %2280 = vmatprep.subr.mxu0 0.0
    %2281 = vmatpush1.xpose.msra.mxu0 0.0
    %2282 = vmatprep.mubr.f32.mxu0 0.0
    %2283 = vmatmul.mubr.f32.gmra.mrb[0].mxu0 %v2214
    %v2284 = vpop.f32.mrb[0].mxu0
    %v2285 = vadd.f32 0.0, %v2284
    %v2286 = vpop.f32.mrb[0].mxu0
    %2287 = vdwg.mxu0
    %v2288 = vmul.f32 %v2207, 0.5
    %v2289 = vmul.f32 %v2285, 0.5
    %v2290 = vsel %vm297, %v2288, -inf
    %2291 = vmax.xlane.f32.xlu0 %v2290
    %v2292 = vpop.xlane.xlu0 %2291
    %v2293 = vsel %vm297, %v2289, -inf
    %2294 = vmax.xlane.f32.xlu0 %v2293
    %v2295 = vpop.xlane.xlu0 %2294
    %v2296 = vsub.f32 %v2288, %v2292
    %v2297 = vsub.f32 %v2289, %v2295
    %v2298 = vmul.f32 %v2296, 1.442695
    %v2299 = vpow.pop %v2298
    %v2300 = vmul.f32 %v2297, 1.442695
    %v2301 = vpow.pop %v2300
    %v2302 = vsel %vm297, %v2299, 0.0
    %2303 = vadd.xlane.f32.xlu0 %v2302
    %v2304 = vpop.xlane.xlu0 %2303
    %v2305 = vsel %vm297, %v2301, 0.0
    %2306 = vadd.xlane.f32.xlu0 %v2305
    %v2307 = vpop.xlane.xlu0 %2306
    %v2308 = vrcp.pop %v2304
    %v2309 = vrcp.pop %v2307
    %v2310 = vmul.f32 %v2299, %v2308
    %v2311 = vmul.f32 %v2301, %v2309
    %2312 = vrot.lane.b32.xlu0 %v128, 8
    %v2313 = vpop.permute.xlu0 %2312
    %v2316 = vsel %vm297, %v2310, 0
    %2318 = vmatprep.subr.mxu0 0.0
    %2319 = vmatpush1.msra.mxu0 %v2313
    %2320 = vmatprep.subr.mxu0 0.0
    %2321 = vmatpush1.msra.mxu0 0.0
    %2322 = vmatprep.subr.mxu0 0.0
    %2323 = vmatpush1.msra.mxu0 0.0
    %2324 = vmatprep.subr.mxu0 0.0
    %2325 = vmatpush1.msra.mxu0 0.0
    %2326 = vmatprep.subr.mxu0 0.0
    %2327 = vmatpush1.msra.mxu0 0.0
    %2328 = vmatprep.subr.mxu0 0.0
    %2329 = vmatpush1.msra.mxu0 0.0
    %2330 = vmatprep.subr.mxu0 0.0
    %2331 = vmatpush1.msra.mxu0 0.0
    %2332 = vmatprep.subr.mxu0 0.0
    %2333 = vmatpush1.msra.mxu0 0.0
    %2334 = vmatprep.subr.mxu0 0.0
    %2335 = vmatpush1.msra.mxu0 0.0
    %2336 = vmatprep.subr.mxu0 0.0
    %2337 = vmatpush1.msra.mxu0 0.0
    %2338 = vmatprep.subr.mxu0 0.0
    %2339 = vmatpush1.msra.mxu0 0.0
    %2340 = vmatprep.subr.mxu0 0.0
    %2341 = vmatpush1.msra.mxu0 0.0
    %2342 = vmatprep.subr.mxu0 0.0
    %2343 = vmatpush1.msra.mxu0 0.0
    %2344 = vmatprep.subr.mxu0 0.0
    %2345 = vmatpush1.msra.mxu0 0.0
    %2346 = vmatprep.subr.mxu0 0.0
    %2347 = vmatpush1.msra.mxu0 0.0
    %2348 = vmatprep.subr.mxu0 0.0
    %2349 = vmatpush1.msra.mxu0 0.0
    %2350 = vmatprep.subr.mxu0 0.0
    %2351 = vmatpush1.msra.mxu0 0.0
    %2352 = vmatprep.subr.mxu0 0.0
    %2353 = vmatpush1.msra.mxu0 0.0
    %2354 = vmatprep.subr.mxu0 0.0
    %2355 = vmatpush1.msra.mxu0 0.0
    %2356 = vmatprep.subr.mxu0 0.0
    %2357 = vmatpush1.msra.mxu0 0.0
    %2358 = vmatprep.subr.mxu0 0.0
    %2359 = vmatpush1.msra.mxu0 0.0
    %2360 = vmatprep.subr.mxu0 0.0
    %2361 = vmatpush1.msra.mxu0 0.0
    %2362 = vmatprep.subr.mxu0 0.0
    %2363 = vmatpush1.msra.mxu0 0.0
    %2364 = vmatprep.subr.mxu0 0.0
    %2365 = vmatpush1.msra.mxu0 0.0
    %2366 = vmatprep.subr.mxu0 0.0
    %2367 = vmatpush1.msra.mxu0 0.0
    %2368 = vmatprep.subr.mxu0 0.0
    %2369 = vmatpush1.msra.mxu0 0.0
    %2370 = vmatprep.subr.mxu0 0.0
    %2371 = vmatpush1.msra.mxu0 0.0
    %2372 = vmatprep.subr.mxu0 0.0
    %2373 = vmatpush1.msra.mxu0 0.0
    %2374 = vmatprep.subr.mxu0 0.0
    %2375 = vmatpush1.msra.mxu0 0.0
    %2376 = vmatprep.subr.mxu0 0.0
    %2377 = vmatpush1.msra.mxu0 0.0
    %2378 = vmatprep.subr.mxu0 0.0
    %2379 = vmatpush1.msra.mxu0 0.0
    %2380 = vmatprep.subr.mxu0 0.0
    %2381 = vmatpush1.msra.mxu0 0.0
    %2382 = vmatprep.mubr.f32.mxu0 0.0
    %2383 = vmatmul.mubr.f32.gmra.mrb[0].mxu0 %v2316
    %v2384 = vpop.f32.mrb[0].mxu0
    %v2385 = vadd.f32 0.0, %v2384
    %v2386 = vpop.f32.mrb[0].mxu0
    %2387 = vdwg.mxu0
    %2388 = vrot.lane.b32.xlu0 %v133, 8
    %v2389 = vpop.permute.xlu0 %2388
    %v2392 = vsel %vm297, %v2311, 0
    %2394 = vmatprep.subr.mxu0 0.0
    %2395 = vmatpush1.msra.mxu0 %v2389
    %2396 = vmatprep.subr.mxu0 0.0
    %2397 = vmatpush1.msra.mxu0 0.0
    %2398 = vmatprep.subr.mxu0 0.0
    %2399 = vmatpush1.msra.mxu0 0.0
    %2400 = vmatprep.subr.mxu0 0.0
    %2401 = vmatpush1.msra.mxu0 0.0
    %2402 = vmatprep.subr.mxu0 0.0
    %2403 = vmatpush1.msra.mxu0 0.0
    %2404 = vmatprep.subr.mxu0 0.0
    %2405 = vmatpush1.msra.mxu0 0.0
    %2406 = vmatprep.subr.mxu0 0.0
    %2407 = vmatpush1.msra.mxu0 0.0
    %2408 = vmatprep.subr.mxu0 0.0
    %2409 = vmatpush1.msra.mxu0 0.0
    %2410 = vmatprep.subr.mxu0 0.0
    %2411 = vmatpush1.msra.mxu0 0.0
    %2412 = vmatprep.subr.mxu0 0.0
    %2413 = vmatpush1.msra.mxu0 0.0
    %2414 = vmatprep.subr.mxu0 0.0
    %2415 = vmatpush1.msra.mxu0 0.0
    %2416 = vmatprep.subr.mxu0 0.0
    %2417 = vmatpush1.msra.mxu0 0.0
    %2418 = vmatprep.subr.mxu0 0.0
    %2419 = vmatpush1.msra.mxu0 0.0
    %2420 = vmatprep.subr.mxu0 0.0
    %2421 = vmatpush1.msra.mxu0 0.0
    %2422 = vmatprep.subr.mxu0 0.0
    %2423 = vmatpush1.msra.mxu0 0.0
    %2424 = vmatprep.subr.mxu0 0.0
    %2425 = vmatpush1.msra.mxu0 0.0
    %2426 = vmatprep.subr.mxu0 0.0
    %2427 = vmatpush1.msra.mxu0 0.0
    %2428 = vmatprep.subr.mxu0 0.0
    %2429 = vmatpush1.msra.mxu0 0.0
    %2430 = vmatprep.subr.mxu0 0.0
    %2431 = vmatpush1.msra.mxu0 0.0
    %2432 = vmatprep.subr.mxu0 0.0
    %2433 = vmatpush1.msra.mxu0 0.0
    %2434 = vmatprep.subr.mxu0 0.0
    %2435 = vmatpush1.msra.mxu0 0.0
    %2436 = vmatprep.subr.mxu0 0.0
    %2437 = vmatpush1.msra.mxu0 0.0
    %2438 = vmatprep.subr.mxu0 0.0
    %2439 = vmatpush1.msra.mxu0 0.0
    %2440 = vmatprep.subr.mxu0 0.0
    %2441 = vmatpush1.msra.mxu0 0.0
    %2442 = vmatprep.subr.mxu0 0.0
    %2443 = vmatpush1.msra.mxu0 0.0
    %2444 = vmatprep.subr.mxu0 0.0
    %2445 = vmatpush1.msra.mxu0 0.0
    %2446 = vmatprep.subr.mxu0 0.0
    %2447 = vmatpush1.msra.mxu0 0.0
    %2448 = vmatprep.subr.mxu0 0.0
    %2449 = vmatpush1.msra.mxu0 0.0
    %2450 = vmatprep.subr.mxu0 0.0
    %2451 = vmatpush1.msra.mxu0 0.0
    %2452 = vmatprep.subr.mxu0 0.0
    %2453 = vmatpush1.msra.mxu0 0.0
    %2454 = vmatprep.subr.mxu0 0.0
    %2455 = vmatpush1.msra.mxu0 0.0
    %2456 = vmatprep.subr.mxu0 0.0
    %2457 = vmatpush1.msra.mxu0 0.0
    %2458 = vmatprep.mubr.f32.mxu0 0.0
    %2459 = vmatmul.mubr.f32.gmra.mrb[0].mxu0 %v2392
    %v2460 = vpop.f32.mrb[0].mxu0
    %v2461 = vadd.f32 0.0, %v2460
    %v2462 = vpop.f32.mrb[0].mxu0
    %2463 = vdwg.mxu0
    %2464 = vrot.lane.b32.xlu0 %v128, 68
    %v2465 = vpop.permute.xlu0 %2464
    %2466 = vrot.lane.b32.xlu0 %v128, 36
    %v2467 = vpop.permute.xlu0 %2466
    %v2468 = vsel %vm141, %v2465, 0
    %v2470 = vsel %vm141, %v2467, 0
    %2472 = vmatprep.subr.mxu0 0.0
    %2473 = vmatpush1.xpose.msra.mxu0 %v2470
    %2474 = vmatprep.subr.mxu0 0.0
    %2475 = vmatpush1.xpose.msra.mxu0 0.0
    %2476 = vmatprep.subr.mxu0 0.0
    %2477 = vmatpush1.xpose.msra.mxu0 0.0
    %2478 = vmatprep.subr.mxu0 0.0
    %2479 = vmatpush1.xpose.msra.mxu0 0.0
    %2480 = vmatprep.subr.mxu0 0.0
    %2481 = vmatpush1.xpose.msra.mxu0 0.0
    %2482 = vmatprep.subr.mxu0 0.0
    %2483 = vmatpush1.xpose.msra.mxu0 0.0
    %2484 = vmatprep.subr.mxu0 0.0
    %2485 = vmatpush1.xpose.msra.mxu0 0.0
    %2486 = vmatprep.subr.mxu0 0.0
    %2487 = vmatpush1.xpose.msra.mxu0 0.0
    %2488 = vmatprep.subr.mxu0 0.0
    %2489 = vmatpush1.xpose.msra.mxu0 0.0
    %2490 = vmatprep.subr.mxu0 0.0
    %2491 = vmatpush1.xpose.msra.mxu0 0.0
    %2492 = vmatprep.subr.mxu0 0.0
    %2493 = vmatpush1.xpose.msra.mxu0 0.0
    %2494 = vmatprep.subr.mxu0 0.0
    %2495 = vmatpush1.xpose.msra.mxu0 0.0
    %2496 = vmatprep.subr.mxu0 0.0
    %2497 = vmatpush1.xpose.msra.mxu0 0.0
    %2498 = vmatprep.subr.mxu0 0.0
    %2499 = vmatpush1.xpose.msra.mxu0 0.0
    %2500 = vmatprep.subr.mxu0 0.0
    %2501 = vmatpush1.xpose.msra.mxu0 0.0
    %2502 = vmatprep.subr.mxu0 0.0
    %2503 = vmatpush1.xpose.msra.mxu0 0.0
    %2504 = vmatprep.subr.mxu0 0.0
    %2505 = vmatpush1.xpose.msra.mxu0 0.0
    %2506 = vmatprep.subr.mxu0 0.0
    %2507 = vmatpush1.xpose.msra.mxu0 0.0
    %2508 = vmatprep.subr.mxu0 0.0
    %2509 = vmatpush1.xpose.msra.mxu0 0.0
    %2510 = vmatprep.subr.mxu0 0.0
    %2511 = vmatpush1.xpose.msra.mxu0 0.0
    %2512 = vmatprep.subr.mxu0 0.0
    %2513 = vmatpush1.xpose.msra.mxu0 0.0
    %2514 = vmatprep.subr.mxu0 0.0
    %2515 = vmatpush1.xpose.msra.mxu0 0.0
    %2516 = vmatprep.subr.mxu0 0.0
    %2517 = vmatpush1.xpose.msra.mxu0 0.0
    %2518 = vmatprep.subr.mxu0 0.0
    %2519 = vmatpush1.xpose.msra.mxu0 0.0
    %2520 = vmatprep.subr.mxu0 0.0
    %2521 = vmatpush1.xpose.msra.mxu0 0.0
    %2522 = vmatprep.subr.mxu0 0.0
    %2523 = vmatpush1.xpose.msra.mxu0 0.0
    %2524 = vmatprep.subr.mxu0 0.0
    %2525 = vmatpush1.xpose.msra.mxu0 0.0
    %2526 = vmatprep.subr.mxu0 0.0
    %2527 = vmatpush1.xpose.msra.mxu0 0.0
    %2528 = vmatprep.subr.mxu0 0.0
    %2529 = vmatpush1.xpose.msra.mxu0 0.0
    %2530 = vmatprep.subr.mxu0 0.0
    %2531 = vmatpush1.xpose.msra.mxu0 0.0
    %2532 = vmatprep.subr.mxu0 0.0
    %2533 = vmatpush1.xpose.msra.mxu0 0.0
    %2534 = vmatprep.subr.mxu0 0.0
    %2535 = vmatpush1.xpose.msra.mxu0 0.0
    %2536 = vmatprep.mubr.f32.mxu0 0.0
    %2537 = vmatmul.mubr.f32.gmra.mrb[0].mxu0 %v2468
    %v2538 = vpop.f32.mrb[0].mxu0
    %v2539 = vadd.f32 0.0, %v2538
    %v2540 = vpop.f32.mrb[0].mxu0
    %2541 = vdwg.mxu0
    %2542 = vrot.lane.b32.xlu0 %v133, 68
    %v2543 = vpop.permute.xlu0 %2542
    %2544 = vrot.lane.b32.xlu0 %v133, 36
    %v2545 = vpop.permute.xlu0 %2544
    %v2546 = vsel %vm141, %v2543, 0
    %v2548 = vsel %vm141, %v2545, 0
    %2550 = vmatprep.subr.mxu0 0.0
    %2551 = vmatpush1.xpose.msra.mxu0 %v2548
    %2552 = vmatprep.subr.mxu0 0.0
    %2553 = vmatpush1.xpose.msra.mxu0 0.0
    %2554 = vmatprep.subr.mxu0 0.0
    %2555 = vmatpush1.xpose.msra.mxu0 0.0
    %2556 = vmatprep.subr.mxu0 0.0
    %2557 = vmatpush1.xpose.msra.mxu0 0.0
    %2558 = vmatprep.subr.mxu0 0.0
    %2559 = vmatpush1.xpose.msra.mxu0 0.0
    %2560 = vmatprep.subr.mxu0 0.0
    %2561 = vmatpush1.xpose.msra.mxu0 0.0
    %2562 = vmatprep.subr.mxu0 0.0
    %2563 = vmatpush1.xpose.msra.mxu0 0.0
    %2564 = vmatprep.subr.mxu0 0.0
    %2565 = vmatpush1.xpose.msra.mxu0 0.0
    %2566 = vmatprep.subr.mxu0 0.0
    %2567 = vmatpush1.xpose.msra.mxu0 0.0
    %2568 = vmatprep.subr.mxu0 0.0
    %2569 = vmatpush1.xpose.msra.mxu0 0.0
    %2570 = vmatprep.subr.mxu0 0.0
    %2571 = vmatpush1.xpose.msra.mxu0 0.0
    %2572 = vmatprep.subr.mxu0 0.0
    %2573 = vmatpush1.xpose.msra.mxu0 0.0
    %2574 = vmatprep.subr.mxu0 0.0
    %2575 = vmatpush1.xpose.msra.mxu0 0.0
    %2576 = vmatprep.subr.mxu0 0.0
    %2577 = vmatpush1.xpose.msra.mxu0 0.0
    %2578 = vmatprep.subr.mxu0 0.0
    %2579 = vmatpush1.xpose.msra.mxu0 0.0
    %2580 = vmatprep.subr.mxu0 0.0
    %2581 = vmatpush1.xpose.msra.mxu0 0.0
    %2582 = vmatprep.subr.mxu0 0.0
    %2583 = vmatpush1.xpose.msra.mxu0 0.0
    %2584 = vmatprep.subr.mxu0 0.0
    %2585 = vmatpush1.xpose.msra.mxu0 0.0
    %2586 = vmatprep.subr.mxu0 0.0
    %2587 = vmatpush1.xpose.msra.mxu0 0.0
    %2588 = vmatprep.subr.mxu0 0.0
    %2589 = vmatpush1.xpose.msra.mxu0 0.0
    %2590 = vmatprep.subr.mxu0 0.0
    %2591 = vmatpush1.xpose.msra.mxu0 0.0
    %2592 = vmatprep.subr.mxu0 0.0
    %2593 = vmatpush1.xpose.msra.mxu0 0.0
    %2594 = vmatprep.subr.mxu0 0.0
    %2595 = vmatpush1.xpose.msra.mxu0 0.0
    %2596 = vmatprep.subr.mxu0 0.0
    %2597 = vmatpush1.xpose.msra.mxu0 0.0
    %2598 = vmatprep.subr.mxu0 0.0
    %2599 = vmatpush1.xpose.msra.mxu0 0.0
    %2600 = vmatprep.subr.mxu0 0.0
    %2601 = vmatpush1.xpose.msra.mxu0 0.0
    %2602 = vmatprep.subr.mxu0 0.0
    %2603 = vmatpush1.xpose.msra.mxu0 0.0
    %2604 = vmatprep.subr.mxu0 0.0
    %2605 = vmatpush1.xpose.msra.mxu0 0.0
    %2606 = vmatprep.subr.mxu0 0.0
    %2607 = vmatpush1.xpose.msra.mxu0 0.0
    %2608 = vmatprep.subr.mxu0 0.0
    %2609 = vmatpush1.xpose.msra.mxu0 0.0
    %2610 = vmatprep.subr.mxu0 0.0
    %2611 = vmatpush1.xpose.msra.mxu0 0.0
    %2612 = vmatprep.subr.mxu0 0.0
    %2613 = vmatpush1.xpose.msra.mxu0 0.0
    %2614 = vmatprep.mubr.f32.mxu0 0.0
    %2615 = vmatmul.mubr.f32.gmra.mrb[0].mxu0 %v2546
    %v2616 = vpop.f32.mrb[0].mxu0
    %v2617 = vadd.f32 0.0, %v2616
    %v2618 = vpop.f32.mrb[0].mxu0
    %2619 = vdwg.mxu0
    %v2620 = vmul.f32 %v2539, 0.5
    %v2621 = vmul.f32 %v2617, 0.5
    %v2622 = vsel %vm297, %v2620, -inf
    %2623 = vmax.xlane.f32.xlu0 %v2622
    %v2624 = vpop.xlane.xlu0 %2623
    %v2625 = vsel %vm297, %v2621, -inf
    %2626 = vmax.xlane.f32.xlu0 %v2625
    %v2627 = vpop.xlane.xlu0 %2626
    %v2628 = vsub.f32 %v2620, %v2624
    %v2629 = vsub.f32 %v2621, %v2627
    %v2630 = vmul.f32 %v2628, 1.442695
    %v2631 = vpow.pop %v2630
    %v2632 = vmul.f32 %v2629, 1.442695
    %v2633 = vpow.pop %v2632
    %v2634 = vsel %vm297, %v2631, 0.0
    %2635 = vadd.xlane.f32.xlu0 %v2634
    %v2636 = vpop.xlane.xlu0 %2635
    %v2637 = vsel %vm297, %v2633, 0.0
    %2638 = vadd.xlane.f32.xlu0 %v2637
    %v2639 = vpop.xlane.xlu0 %2638
    %v2640 = vrcp.pop %v2636
    %v2641 = vrcp.pop %v2639
    %v2642 = vmul.f32 %v2631, %v2640
    %v2643 = vmul.f32 %v2633, %v2641
    %2644 = vrot.lane.b32.xlu0 %v128, 4
    %v2645 = vpop.permute.xlu0 %2644
    %v2648 = vsel %vm297, %v2642, 0
    %2650 = vmatprep.subr.mxu0 0.0
    %2651 = vmatpush1.msra.mxu0 %v2645
    %2652 = vmatprep.subr.mxu0 0.0
    %2653 = vmatpush1.msra.mxu0 0.0
    %2654 = vmatprep.subr.mxu0 0.0
    %2655 = vmatpush1.msra.mxu0 0.0
    %2656 = vmatprep.subr.mxu0 0.0
    %2657 = vmatpush1.msra.mxu0 0.0
    %2658 = vmatprep.subr.mxu0 0.0
    %2659 = vmatpush1.msra.mxu0 0.0
    %2660 = vmatprep.subr.mxu0 0.0
    %2661 = vmatpush1.msra.mxu0 0.0
    %2662 = vmatprep.subr.mxu0 0.0
    %2663 = vmatpush1.msra.mxu0 0.0
    %2664 = vmatprep.subr.mxu0 0.0
    %2665 = vmatpush1.msra.mxu0 0.0
    %2666 = vmatprep.subr.mxu0 0.0
    %2667 = vmatpush1.msra.mxu0 0.0
    %2668 = vmatprep.subr.mxu0 0.0
    %2669 = vmatpush1.msra.mxu0 0.0
    %2670 = vmatprep.subr.mxu0 0.0
    %2671 = vmatpush1.msra.mxu0 0.0
    %2672 = vmatprep.subr.mxu0 0.0
    %2673 = vmatpush1.msra.mxu0 0.0
    %2674 = vmatprep.subr.mxu0 0.0
    %2675 = vmatpush1.msra.mxu0 0.0
    %2676 = vmatprep.subr.mxu0 0.0
    %2677 = vmatpush1.msra.mxu0 0.0
    %2678 = vmatprep.subr.mxu0 0.0
    %2679 = vmatpush1.msra.mxu0 0.0
    %2680 = vmatprep.subr.mxu0 0.0
    %2681 = vmatpush1.msra.mxu0 0.0
    %2682 = vmatprep.subr.mxu0 0.0
    %2683 = vmatpush1.msra.mxu0 0.0
    %2684 = vmatprep.subr.mxu0 0.0
    %2685 = vmatpush1.msra.mxu0 0.0
    %2686 = vmatprep.subr.mxu0 0.0
    %2687 = vmatpush1.msra.mxu0 0.0
    %2688 = vmatprep.subr.mxu0 0.0
    %2689 = vmatpush1.msra.mxu0 0.0
    %2690 = vmatprep.subr.mxu0 0.0
    %2691 = vmatpush1.msra.mxu0 0.0
    %2692 = vmatprep.subr.mxu0 0.0
    %2693 = vmatpush1.msra.mxu0 0.0
    %2694 = vmatprep.subr.mxu0 0.0
    %2695 = vmatpush1.msra.mxu0 0.0
    %2696 = vmatprep.subr.mxu0 0.0
    %2697 = vmatpush1.msra.mxu0 0.0
    %2698 = vmatprep.subr.mxu0 0.0
    %2699 = vmatpush1.msra.mxu0 0.0
    %2700 = vmatprep.subr.mxu0 0.0
    %2701 = vmatpush1.msra.mxu0 0.0
    %2702 = vmatprep.subr.mxu0 0.0
    %2703 = vmatpush1.msra.mxu0 0.0
    %2704 = vmatprep.subr.mxu0 0.0
    %2705 = vmatpush1.msra.mxu0 0.0
    %2706 = vmatprep.subr.mxu0 0.0
    %2707 = vmatpush1.msra.mxu0 0.0
    %2708 = vmatprep.subr.mxu0 0.0
    %2709 = vmatpush1.msra.mxu0 0.0
    %2710 = vmatprep.subr.mxu0 0.0
    %2711 = vmatpush1.msra.mxu0 0.0
    %2712 = vmatprep.subr.mxu0 0.0
    %2713 = vmatpush1.msra.mxu0 0.0
    %2714 = vmatprep.mubr.f32.mxu0 0.0
    %2715 = vmatmul.mubr.f32.gmra.mrb[0].mxu0 %v2648
    %v2716 = vpop.f32.mrb[0].mxu0
    %v2717 = vadd.f32 0.0, %v2716
    %v2718 = vpop.f32.mrb[0].mxu0
    %2719 = vdwg.mxu0
    %2720 = vrot.lane.b32.xlu0 %v133, 4
    %v2721 = vpop.permute.xlu0 %2720
    %v2724 = vsel %vm297, %v2643, 0
    %2726 = vmatprep.subr.mxu0 0.0
    %2727 = vmatpush1.msra.mxu0 %v2721
    %2728 = vmatprep.subr.mxu0 0.0
    %2729 = vmatpush1.msra.mxu0 0.0
    %2730 = vmatprep.subr.mxu0 0.0
    %2731 = vmatpush1.msra.mxu0 0.0
    %2732 = vmatprep.subr.mxu0 0.0
    %2733 = vmatpush1.msra.mxu0 0.0
    %2734 = vmatprep.subr.mxu0 0.0
    %2735 = vmatpush1.msra.mxu0 0.0
    %2736 = vmatprep.subr.mxu0 0.0
    %2737 = vmatpush1.msra.mxu0 0.0
    %2738 = vmatprep.subr.mxu0 0.0
    %2739 = vmatpush1.msra.mxu0 0.0
    %2740 = vmatprep.subr.mxu0 0.0
    %2741 = vmatpush1.msra.mxu0 0.0
    %2742 = vmatprep.subr.mxu0 0.0
    %2743 = vmatpush1.msra.mxu0 0.0
    %2744 = vmatprep.subr.mxu0 0.0
    %2745 = vmatpush1.msra.mxu0 0.0
    %2746 = vmatprep.subr.mxu0 0.0
    %2747 = vmatpush1.msra.mxu0 0.0
    %2748 = vmatprep.subr.mxu0 0.0
    %2749 = vmatpush1.msra.mxu0 0.0
    %2750 = vmatprep.subr.mxu0 0.0
    %2751 = vmatpush1.msra.mxu0 0.0
    %2752 = vmatprep.subr.mxu0 0.0
    %2753 = vmatpush1.msra.mxu0 0.0
    %2754 = vmatprep.subr.mxu0 0.0
    %2755 = vmatpush1.msra.mxu0 0.0
    %2756 = vmatprep.subr.mxu0 0.0
    %2757 = vmatpush1.msra.mxu0 0.0
    %2758 = vmatprep.subr.mxu0 0.0
    %2759 = vmatpush1.msra.mxu0 0.0
    %2760 = vmatprep.subr.mxu0 0.0
    %2761 = vmatpush1.msra.mxu0 0.0
    %2762 = vmatprep.subr.mxu0 0.0
    %2763 = vmatpush1.msra.mxu0 0.0
    %2764 = vmatprep.subr.mxu0 0.0
    %2765 = vmatpush1.msra.mxu0 0.0
    %2766 = vmatprep.subr.mxu0 0.0
    %2767 = vmatpush1.msra.mxu0 0.0
    %2768 = vmatprep.subr.mxu0 0.0
    %2769 = vmatpush1.msra.mxu0 0.0
    %2770 = vmatprep.subr.mxu0 0.0
    %2771 = vmatpush1.msra.mxu0 0.0
    %2772 = vmatprep.subr.mxu0 0.0
    %2773 = vmatpush1.msra.mxu0 0.0
    %2774 = vmatprep.subr.mxu0 0.0
    %2775 = vmatpush1.msra.mxu0 0.0
    %2776 = vmatprep.subr.mxu0 0.0
    %2777 = vmatpush1.msra.mxu0 0.0
    %2778 = vmatprep.subr.mxu0 0.0
    %2779 = vmatpush1.msra.mxu0 0.0
    %2780 = vmatprep.subr.mxu0 0.0
    %2781 = vmatpush1.msra.mxu0 0.0
    %2782 = vmatprep.subr.mxu0 0.0
    %2783 = vmatpush1.msra.mxu0 0.0
    %2784 = vmatprep.subr.mxu0 0.0
    %2785 = vmatpush1.msra.mxu0 0.0
    %2786 = vmatprep.subr.mxu0 0.0
    %2787 = vmatpush1.msra.mxu0 0.0
    %2788 = vmatprep.subr.mxu0 0.0
    %2789 = vmatpush1.msra.mxu0 0.0
    %2790 = vmatprep.mubr.f32.mxu0 0.0
    %2791 = vmatmul.mubr.f32.gmra.mrb[0].mxu0 %v2724
    %v2792 = vpop.f32.mrb[0].mxu0
    %v2793 = vadd.f32 0.0, %v2792
    %v2794 = vpop.f32.mrb[0].mxu0
    %2795 = vdwg.mxu0
    %2798 = vrot.lane.b32.xlu0 %v725, 4
    %v2799 = vpop.permute.xlu0 %2798
    %2800 = vrot.lane.b32.xlu0 %v801, 4
    %v2801 = vpop.permute.xlu0 %2800
    %2806 = vrot.lane.b32.xlu0 %v1057, 8
    %v2807 = vpop.permute.xlu0 %2806
    %2808 = vrot.lane.b32.xlu0 %v1133, 8
    %v2809 = vpop.permute.xlu0 %2808
    %2814 = vrot.lane.b32.xlu0 %v1389, 12
    %v2815 = vpop.permute.xlu0 %2814
    %2816 = vrot.lane.b32.xlu0 %v1465, 12
    %v2817 = vpop.permute.xlu0 %2816
    %2822 = vrot.lane.b32.xlu0 %v1721, 16
    %v2823 = vpop.permute.xlu0 %2822
    %2824 = vrot.lane.b32.xlu0 %v1797, 16
    %v2825 = vpop.permute.xlu0 %2824
    %2830 = vrot.lane.b32.xlu0 %v2053, 20
    %v2831 = vpop.permute.xlu0 %2830
    %2832 = vrot.lane.b32.xlu0 %v2129, 20
    %v2833 = vpop.permute.xlu0 %2832
    %2838 = vrot.lane.b32.xlu0 %v2385, 24
    %v2839 = vpop.permute.xlu0 %2838
    %2840 = vrot.lane.b32.xlu0 %v2461, 24
    %v2841 = vpop.permute.xlu0 %2840
    %2846 = vrot.lane.b32.xlu0 %v2717, 28
    %v2847 = vpop.permute.xlu0 %2846
    %2848 = vrot.lane.b32.xlu0 %v2793, 28
    %v2849 = vpop.permute.xlu0 %2848
    %v2852 = vsel %vm141, %v393, %v2799
    %v2853 = vsel %vm141, %v469, %v2801
    %v2854 = vsel %vm297, %v2852, %v2807
    %v2855 = vsel %vm297, %v2853, %v2809
    %vm2856 = vcmask 97280
    %v2857 = vsel %vm2856, %v2854, %v2815
    %v2858 = vsel %vm2856, %v2855, %v2817
    %vm2859 = vcmask 130048
    %v2860 = vsel %vm2859, %v2857, %v2823
    %v2861 = vsel %vm2859, %v2858, %v2825
    %vm2862 = vcmask 162816
    %v2863 = vsel %vm2862, %v2860, %v2831
    %v2864 = vsel %vm2862, %v2861, %v2833
    %vm2865 = vcmask 195584
    %v2866 = vsel %vm2865, %v2863, %v2839
    %v2867 = vsel %vm2865, %v2864, %v2841
    %vm2868 = vcmask 228352
    %v2869 = vsel %vm2868, %v2866, %v2847
    %v2870 = vsel %vm2868, %v2867, %v2849
    %v2871 = vld [vmem:[%s3] sm:$0xff]
    %v2872 = vld [vmem:[%s3 + $0x8] sm:$0xff]
    %v2873 = vld [vmem:[%s3 + $0x10] sm:$0xff]
    %v2874 = vld [vmem:[%s3 + $0x18] sm:$0xff]
    %v2875 = vlaneseq
    %v2876 = vshrl.u32 %v2875, 7
    %v2877 = vsub.s32 0, %v2876
    %v2878 = vrot.slane %v39, %v2877
    %vm2879 = vcmask 261120
    %v2881 = vsel %vm2879, %v2869, 0
    %v2884 = vsel %vm2879, %v2870, 0
    %2886 = vmatprep.subr.mxu0 0.0
    %2887 = vmatpush1.msra.mxu0 %v2871
    %2888 = vmatprep.subr.mxu0 0.0
    %2889 = vmatpush1.msra.mxu0 %v2872
    %2890 = vmatprep.subr.mxu0 0.0
    %2891 = vmatpush1.msra.mxu0 %v2873
    %2892 = vmatprep.subr.mxu0 0.0
    %2893 = vmatpush1.msra.mxu0 %v2874
    %2894 = vmatprep.subr.mxu0 0.0
    %2895 = vmatpush1.msra.mxu0 0.0
    %2896 = vmatprep.subr.mxu0 0.0
    %2897 = vmatpush1.msra.mxu0 0.0
    %2898 = vmatprep.subr.mxu0 0.0
    %2899 = vmatpush1.msra.mxu0 0.0
    %2900 = vmatprep.subr.mxu0 0.0
    %2901 = vmatpush1.msra.mxu0 0.0
    %2902 = vmatprep.subr.mxu0 0.0
    %2903 = vmatpush1.msra.mxu0 0.0
    %2904 = vmatprep.subr.mxu0 0.0
    %2905 = vmatpush1.msra.mxu0 0.0
    %2906 = vmatprep.subr.mxu0 0.0
    %2907 = vmatpush1.msra.mxu0 0.0
    %2908 = vmatprep.subr.mxu0 0.0
    %2909 = vmatpush1.msra.mxu0 0.0
    %2910 = vmatprep.subr.mxu0 0.0
    %2911 = vmatpush1.msra.mxu0 0.0
    %2912 = vmatprep.subr.mxu0 0.0
    %2913 = vmatpush1.msra.mxu0 0.0
    %2914 = vmatprep.subr.mxu0 0.0
    %2915 = vmatpush1.msra.mxu0 0.0
    %2916 = vmatprep.subr.mxu0 0.0
    %2917 = vmatpush1.msra.mxu0 0.0
    %2918 = vmatprep.subr.mxu0 0.0
    %2919 = vmatpush1.msra.mxu0 0.0
    %2920 = vmatprep.subr.mxu0 0.0
    %2921 = vmatpush1.msra.mxu0 0.0
    %2922 = vmatprep.subr.mxu0 0.0
    %2923 = vmatpush1.msra.mxu0 0.0
    %2924 = vmatprep.subr.mxu0 0.0
    %2925 = vmatpush1.msra.mxu0 0.0
    %2926 = vmatprep.subr.mxu0 0.0
    %2927 = vmatpush1.msra.mxu0 0.0
    %2928 = vmatprep.subr.mxu0 0.0
    %2929 = vmatpush1.msra.mxu0 0.0
    %2930 = vmatprep.subr.mxu0 0.0
    %2931 = vmatpush1.msra.mxu0 0.0
    %2932 = vmatprep.subr.mxu0 0.0
    %2933 = vmatpush1.msra.mxu0 0.0
    %2934 = vmatprep.subr.mxu0 0.0
    %2935 = vmatpush1.msra.mxu0 0.0
    %2936 = vmatprep.subr.mxu0 0.0
    %2937 = vmatpush1.msra.mxu0 0.0
    %2938 = vmatprep.subr.mxu0 0.0
    %2939 = vmatpush1.msra.mxu0 0.0
    %2940 = vmatprep.subr.mxu0 0.0
    %2941 = vmatpush1.msra.mxu0 0.0
    %2942 = vmatprep.subr.mxu0 0.0
    %2943 = vmatpush1.msra.mxu0 0.0
    %2944 = vmatprep.subr.mxu0 0.0
    %2945 = vmatpush1.msra.mxu0 0.0
    %2946 = vmatprep.subr.mxu0 0.0
    %2947 = vmatpush1.msra.mxu0 0.0
    %2948 = vmatprep.subr.mxu0 0.0
    %2949 = vmatpush1.msra.mxu0 0.0
    %2950 = vmatprep.mubr.f32.mxu0 0.0
    %2951 = vmatmul.mubr.f32.gmra.mrb[0].mxu0 %v2881
    %v2952 = vpop.f32.mrb[0].mxu0
    %v2953 = vadd.f32 %v2878, %v2952
    %v2954 = vpop.f32.mrb[0].mxu0
    %2955 = vmatprep.mubr.f32.mxu0 0.0
    %2956 = vmatmul.mubr.f32.gmra.mrb[0].mxu0 %v2884
    %v2957 = vpop.f32.mrb[0].mxu0
    %v2958 = vadd.f32 %v2878, %v2957
    %v2959 = vpop.f32.mrb[0].mxu0
    %2960 = vdwg.mxu0
    %v2961 = vadd.f32 %v128, %v2953
    %v2962 = vadd.f32 %v133, %v2958
    %v2963 = vsel %vm2879, %v2961, 0.0
    %2964 = vadd.xlane.f32.xlu0 %v2963
    %v2965 = vpop.xlane.xlu0 %2964
    %v2966 = vsel %vm2879, %v2962, 0.0
    %2967 = vadd.xlane.f32.xlu0 %v2966
    %v2968 = vpop.xlane.xlu0 %2967
    %v2969 = vrcp.pop 32.0
    %v2970 = vmul.f32 %v2965, %v2969
    %v2971 = vmul.f32 %v2968, %v2969
    %v2972 = vsub.f32 %v2961, %v2970
    %v2973 = vsub.f32 %v2962, %v2971
    %v2974 = vmul.f32 %v2972, %v2972
    %v2975 = vmul.f32 %v2973, %v2973
    %v2976 = vsel %vm2879, %v2974, 0.0
    %2977 = vadd.xlane.f32.xlu0 %v2976
    %v2978 = vpop.xlane.xlu0 %2977
    %v2979 = vsel %vm2879, %v2975, 0.0
    %2980 = vadd.xlane.f32.xlu0 %v2979
    %v2981 = vpop.xlane.xlu0 %2980
    %v2982 = vmul.f32 %v2978, %v2969
    %v2983 = vmul.f32 %v2981, %v2969
    %v2984 = vadd.f32 %v2982, 1e-05
    %v2985 = vadd.f32 %v2983, 1e-05
    %v2986 = vrsqrt.pop %v2984
    %v2987 = vrsqrt.pop %v2985
    %v2988 = vmul.f32 %v2972, %v2986
    %v2989 = vmul.f32 %v2973, %v2987
    %v2990 = vlaneseq
    %v2991 = vshrl.u32 %v2990, 7
    %v2992 = vsub.s32 1, %v2991
    %v2993 = vrot.slane %v39, %v2992
    %v2994 = vmul.f32 %v2988, %v2993
    %v2995 = vmul.f32 %v2989, %v2993
    %v2996 = vlaneseq
    %v2997 = vshrl.u32 %v2996, 7
    %v2998 = vsub.s32 2, %v2997
    %v2999 = vrot.slane %v39, %v2998
    %v3000 = vadd.f32 %v2994, %v2999
    %v3001 = vadd.f32 %v2995, %v2999
    %v3002 = vpack.c.bf16 %v3001, %v3000
    %v3003 = vld [vmem:[%s5] sm:$0xff]
    %v3004 = vld [vmem:[%s5 + $0x8] sm:$0xff]
    %v3005 = vld [vmem:[%s5 + $0x10] sm:$0xff]
    %v3006 = vld [vmem:[%s5 + $0x18] sm:$0xff]
    %v3007 = vld [vmem:[%s5 + $0x20] sm:$0xff]
    %v3008 = vld [vmem:[%s5 + $0x28] sm:$0xff]
    %v3009 = vld [vmem:[%s5 + $0x30] sm:$0xff]
    %v3010 = vld [vmem:[%s5 + $0x38] sm:$0xff]
    %v3011 = vld [vmem:[%s5 + $0x40] sm:$0xff]
    %v3012 = vld [vmem:[%s5 + $0x48] sm:$0xff]
    %v3013 = vld [vmem:[%s5 + $0x50] sm:$0xff]
    %v3014 = vld [vmem:[%s5 + $0x58] sm:$0xff]
    %v3015 = vld [vmem:[%s5 + $0x60] sm:$0xff]
    %v3016 = vld [vmem:[%s5 + $0x68] sm:$0xff]
    %v3017 = vld [vmem:[%s5 + $0x70] sm:$0xff]
    %v3018 = vld [vmem:[%s5 + $0x78] sm:$0xff]
    %v3019 = vld [vmem:[%s5 + $0x80] sm:$0xff]
    %v3020 = vld [vmem:[%s5 + $0x88] sm:$0xff]
    %v3021 = vld [vmem:[%s5 + $0x90] sm:$0xff]
    %v3022 = vld [vmem:[%s5 + $0x98] sm:$0xff]
    %v3023 = vld [vmem:[%s5 + $0xa0] sm:$0xff]
    %v3024 = vld [vmem:[%s5 + $0xa8] sm:$0xff]
    %v3025 = vld [vmem:[%s5 + $0xb0] sm:$0xff]
    %v3026 = vld [vmem:[%s5 + $0xb8] sm:$0xff]
    %v3027 = vld [vmem:[%s5 + $0xc0] sm:$0xff]
    %v3028 = vld [vmem:[%s5 + $0xc8] sm:$0xff]
    %v3029 = vld [vmem:[%s5 + $0xd0] sm:$0xff]
    %v3030 = vld [vmem:[%s5 + $0xd8] sm:$0xff]
    %v3031 = vld [vmem:[%s5 + $0xe0] sm:$0xff]
    %v3032 = vld [vmem:[%s5 + $0xe8] sm:$0xff]
    %v3033 = vld [vmem:[%s5 + $0xf0] sm:$0xff]
    %v3034 = vld [vmem:[%s5 + $0xf8] sm:$0xff]
    %v3035 = vld [vmem:[%s6] sm:$0xff]
    %v3036 = vld [vmem:[%s6 + $0x8] sm:$0xff]
    %v3039 = vlaneseq
    %v3040 = vshrl.u32 %v3039, 7
    %v3041 = vsub.s32 0, %v3040
    %v3042 = vrot.slane %v3035, %v3041
    %v3043 = vlaneseq
    %v3044 = vshrl.u32 %v3043, 7
    %v3045 = vsub.s32 1, %v3044
    %v3046 = vrot.slane %v3035, %v3045
    %v3047 = vlaneseq
    %v3048 = vshrl.u32 %v3047, 7
    %v3049 = vsub.s32 2, %v3048
    %v3050 = vrot.slane %v3035, %v3049
    %v3051 = vlaneseq
    %v3052 = vshrl.u32 %v3051, 7
    %v3053 = vsub.s32 3, %v3052
    %v3054 = vrot.slane %v3035, %v3053
    %v3055 = vlaneseq
    %v3056 = vshrl.u32 %v3055, 7
    %v3057 = vsub.s32 4, %v3056
    %v3058 = vrot.slane %v3035, %v3057
    %v3059 = vlaneseq
    %v3060 = vshrl.u32 %v3059, 7
    %v3061 = vsub.s32 5, %v3060
    %v3062 = vrot.slane %v3035, %v3061
    %v3063 = vlaneseq
    %v3064 = vshrl.u32 %v3063, 7
    %v3065 = vsub.s32 6, %v3064
    %v3066 = vrot.slane %v3035, %v3065
    %v3067 = vlaneseq
    %v3068 = vshrl.u32 %v3067, 7
    %v3069 = vsub.s32 7, %v3068
    %v3070 = vrot.slane %v3035, %v3069
    %v3071 = vlaneseq
    %v3072 = vshrl.u32 %v3071, 7
    %v3073 = vsub.s32 0, %v3072
    %v3074 = vrot.slane %v3036, %v3073
    %v3075 = vlaneseq
    %v3076 = vshrl.u32 %v3075, 7
    %v3077 = vsub.s32 1, %v3076
    %v3078 = vrot.slane %v3036, %v3077
    %v3079 = vlaneseq
    %v3080 = vshrl.u32 %v3079, 7
    %v3081 = vsub.s32 2, %v3080
    %v3082 = vrot.slane %v3036, %v3081
    %v3083 = vlaneseq
    %v3084 = vshrl.u32 %v3083, 7
    %v3085 = vsub.s32 3, %v3084
    %v3086 = vrot.slane %v3036, %v3085
    %v3087 = vlaneseq
    %v3088 = vshrl.u32 %v3087, 7
    %v3089 = vsub.s32 4, %v3088
    %v3090 = vrot.slane %v3036, %v3089
    %v3091 = vlaneseq
    %v3092 = vshrl.u32 %v3091, 7
    %v3093 = vsub.s32 5, %v3092
    %v3094 = vrot.slane %v3036, %v3093
    %v3095 = vlaneseq
    %v3096 = vshrl.u32 %v3095, 7
    %v3097 = vsub.s32 6, %v3096
    %v3098 = vrot.slane %v3036, %v3097
    %v3099 = vlaneseq
    %v3100 = vshrl.u32 %v3099, 7
    %v3101 = vsub.s32 7, %v3100
    %v3102 = vrot.slane %v3036, %v3101
    %v3151 = vunpack.c.l.b16 %v3003
    %v3152 = vunpack.c.h.b16 %v3003
    %v3153 = vunpack.c.l.b16 %v3004
    %v3154 = vunpack.c.h.b16 %v3004
    %v3155 = vunpack.c.l.b16 %v3005
    %v3156 = vunpack.c.h.b16 %v3005
    %v3157 = vunpack.c.l.b16 %v3006
    %v3158 = vunpack.c.h.b16 %v3006
    %v3159 = vunpack.c.l.b16 %v3007
    %v3160 = vunpack.c.h.b16 %v3007
    %v3161 = vunpack.c.l.b16 %v3008
    %v3162 = vunpack.c.h.b16 %v3008
    %v3163 = vunpack.c.l.b16 %v3009
    %v3164 = vunpack.c.h.b16 %v3009
    %v3165 = vunpack.c.l.b16 %v3010
    %v3166 = vunpack.c.h.b16 %v3010
    %v3167 = vunpack.c.l.b16 %v3011
    %v3168 = vunpack.c.h.b16 %v3011
    %v3169 = vunpack.c.l.b16 %v3012
    %v3170 = vunpack.c.h.b16 %v3012
    %v3171 = vunpack.c.l.b16 %v3013
    %v3172 = vunpack.c.h.b16 %v3013
    %v3173 = vunpack.c.l.b16 %v3014
    %v3174 = vunpack.c.h.b16 %v3014
    %v3175 = vunpack.c.l.b16 %v3015
    %v3176 = vunpack.c.h.b16 %v3015
    %v3177 = vunpack.c.l.b16 %v3016
    %v3178 = vunpack.c.h.b16 %v3016
    %v3179 = vunpack.c.l.b16 %v3017
    %v3180 = vunpack.c.h.b16 %v3017
    %v3181 = vunpack.c.l.b16 %v3018
    %v3182 = vunpack.c.h.b16 %v3018
    %v3183 = vunpack.c.l.b16 %v3019
    %v3184 = vunpack.c.h.b16 %v3019
    %v3185 = vunpack.c.l.b16 %v3020
    %v3186 = vunpack.c.h.b16 %v3020
    %v3187 = vunpack.c.l.b16 %v3021
    %v3188 = vunpack.c.h.b16 %v3021
    %v3189 = vunpack.c.l.b16 %v3022
    %v3190 = vunpack.c.h.b16 %v3022
    %v3191 = vunpack.c.l.b16 %v3023
    %v3192 = vunpack.c.h.b16 %v3023
    %v3193 = vunpack.c.l.b16 %v3024
    %v3194 = vunpack.c.h.b16 %v3024
    %v3195 = vunpack.c.l.b16 %v3025
    %v3196 = vunpack.c.h.b16 %v3025
    %v3197 = vunpack.c.l.b16 %v3026
    %v3198 = vunpack.c.h.b16 %v3026
    %v3199 = vunpack.c.l.b16 %v3027
    %v3200 = vunpack.c.h.b16 %v3027
    %v3201 = vunpack.c.l.b16 %v3028
    %v3202 = vunpack.c.h.b16 %v3028
    %v3203 = vunpack.c.l.b16 %v3029
    %v3204 = vunpack.c.h.b16 %v3029
    %v3205 = vunpack.c.l.b16 %v3030
    %v3206 = vunpack.c.h.b16 %v3030
    %v3207 = vunpack.c.l.b16 %v3031
    %v3208 = vunpack.c.h.b16 %v3031
    %v3209 = vunpack.c.l.b16 %v3032
    %v3210 = vunpack.c.h.b16 %v3032
    %v3211 = vunpack.c.l.b16 %v3033
    %v3212 = vunpack.c.h.b16 %v3033
    %v3213 = vunpack.c.l.b16 %v3034
    %v3214 = vunpack.c.h.b16 %v3034
    %v3215 = vpack.c.b16 %v3167, %v3151
    %v3216 = vpack.c.b16 %v3168, %v3152
    %v3217 = vpack.c.b16 %v3169, %v3153
    %v3218 = vpack.c.b16 %v3170, %v3154
    %v3219 = vpack.c.b16 %v3171, %v3155
    %v3220 = vpack.c.b16 %v3172, %v3156
    %v3221 = vpack.c.b16 %v3173, %v3157
    %v3222 = vpack.c.b16 %v3174, %v3158
    %v3223 = vpack.c.b16 %v3175, %v3159
    %v3224 = vpack.c.b16 %v3176, %v3160
    %v3225 = vpack.c.b16 %v3177, %v3161
    %v3226 = vpack.c.b16 %v3178, %v3162
    %v3227 = vpack.c.b16 %v3179, %v3163
    %v3228 = vpack.c.b16 %v3180, %v3164
    %v3229 = vpack.c.b16 %v3181, %v3165
    %v3230 = vpack.c.b16 %v3182, %v3166
    %v3231 = vpack.c.b16 %v3199, %v3183
    %v3232 = vpack.c.b16 %v3200, %v3184
    %v3233 = vpack.c.b16 %v3201, %v3185
    %v3234 = vpack.c.b16 %v3202, %v3186
    %v3235 = vpack.c.b16 %v3203, %v3187
    %v3236 = vpack.c.b16 %v3204, %v3188
    %v3237 = vpack.c.b16 %v3205, %v3189
    %v3238 = vpack.c.b16 %v3206, %v3190
    %v3239 = vpack.c.b16 %v3207, %v3191
    %v3240 = vpack.c.b16 %v3208, %v3192
    %v3241 = vpack.c.b16 %v3209, %v3193
    %v3242 = vpack.c.b16 %v3210, %v3194
    %v3243 = vpack.c.b16 %v3211, %v3195
    %v3244 = vpack.c.b16 %v3212, %v3196
    %v3245 = vpack.c.b16 %v3213, %v3197
    %v3246 = vpack.c.b16 %v3214, %v3198
    %v3280 = vsel %vm2879, %v3002, 0
    %3282 = vmatprep.subr.bf16.mxu0 %v3216
    %3283 = vmatpush1.bf16.msra.mxu0 %v3215
    %3284 = vmatprep.subr.bf16.mxu0 %v3232
    %3285 = vmatpush1.bf16.msra.mxu0 %v3231
    %3286 = vmatprep.subr.bf16.mxu0 0
    %3287 = vmatpush1.bf16.msra.mxu0 0
    %3288 = vmatprep.subr.bf16.mxu0 0
    %3289 = vmatpush1.bf16.msra.mxu0 0
    %3290 = vmatprep.subr.bf16.mxu0 0
    %3291 = vmatpush1.bf16.msra.mxu0 0
    %3292 = vmatprep.subr.bf16.mxu0 0
    %3293 = vmatpush1.bf16.msra.mxu0 0
    %3294 = vmatprep.subr.bf16.mxu0 0
    %3295 = vmatpush1.bf16.msra.mxu0 0
    %3296 = vmatprep.subr.bf16.mxu0 0
    %3297 = vmatpush1.bf16.msra.mxu0 0
    %3298 = vmatprep.subr.bf16.mxu0 0
    %3299 = vmatpush1.bf16.msra.mxu0 0
    %3300 = vmatprep.subr.bf16.mxu0 0
    %3301 = vmatpush1.bf16.msra.mxu0 0
    %3302 = vmatprep.subr.bf16.mxu0 0
    %3303 = vmatpush1.bf16.msra.mxu0 0
    %3304 = vmatprep.subr.bf16.mxu0 0
    %3305 = vmatpush1.bf16.msra.mxu0 0
    %3306 = vmatprep.subr.bf16.mxu0 0
    %3307 = vmatpush1.bf16.msra.mxu0 0
    %3308 = vmatprep.subr.bf16.mxu0 0
    %3309 = vmatpush1.bf16.msra.mxu0 0
    %3310 = vmatprep.subr.bf16.mxu0 0
    %3311 = vmatpush1.bf16.msra.mxu0 0
    %3312 = vmatprep.subr.bf16.mxu0 0
    %3313 = vmatpush1.bf16.msra.mxu0 0
    %3314 = vmatprep.mubr.bf16.mxu0 0
    %3315 = vmatmul.mubr.bf16.gmra.mrb[0].mxu0 %v3280
    %v3316 = vpop.f32.mrb[0].mxu0
    %v3317 = vadd.f32 %v3042, %v3316
    %v3318 = vpop.f32.mrb[0].mxu0
    %v3319 = vadd.f32 %v3046, %v3318
    %v3320 = vpop.f32.mrb[0].mxu0
    %v3321 = vadd.f32 %v3042, %v3320
    %v3322 = vpop.f32.mrb[0].mxu0
    %v3323 = vadd.f32 %v3046, %v3322
    %3324 = vdwg.mxu0
    %3325 = vmatprep.subr.bf16.mxu0 %v3218
    %3326 = vmatpush1.bf16.msra.mxu0 %v3217
    %3327 = vmatprep.subr.bf16.mxu0 %v3234
    %3328 = vmatpush1.bf16.msra.mxu0 %v3233
    %3329 = vmatprep.subr.bf16.mxu0 0
    %3330 = vmatpush1.bf16.msra.mxu0 0
    %3331 = vmatprep.subr.bf16.mxu0 0
    %3332 = vmatpush1.bf16.msra.mxu0 0
    %3333 = vmatprep.subr.bf16.mxu0 0
    %3334 = vmatpush1.bf16.msra.mxu0 0
    %3335 = vmatprep.subr.bf16.mxu0 0
    %3336 = vmatpush1.bf16.msra.mxu0 0
    %3337 = vmatprep.subr.bf16.mxu0 0
    %3338 = vmatpush1.bf16.msra.mxu0 0
    %3339 = vmatprep.subr.bf16.mxu0 0
    %3340 = vmatpush1.bf16.msra.mxu0 0
    %3341 = vmatprep.subr.bf16.mxu0 0
    %3342 = vmatpush1.bf16.msra.mxu0 0
    %3343 = vmatprep.subr.bf16.mxu0 0
    %3344 = vmatpush1.bf16.msra.mxu0 0
    %3345 = vmatprep.subr.bf16.mxu0 0
    %3346 = vmatpush1.bf16.msra.mxu0 0
    %3347 = vmatprep.subr.bf16.mxu0 0
    %3348 = vmatpush1.bf16.msra.mxu0 0
    %3349 = vmatprep.subr.bf16.mxu0 0
    %3350 = vmatpush1.bf16.msra.mxu0 0
    %3351 = vmatprep.subr.bf16.mxu0 0
    %3352 = vmatpush1.bf16.msra.mxu0 0
    %3353 = vmatprep.subr.bf16.mxu0 0
    %3354 = vmatpush1.bf16.msra.mxu0 0
    %3355 = vmatprep.subr.bf16.mxu0 0
    %3356 = vmatpush1.bf16.msra.mxu0 0
    %3357 = vmatprep.mubr.bf16.mxu0 0
    %3358 = vmatmul.mubr.bf16.gmra.mrb[0].mxu0 %v3280
    %v3359 = vpop.f32.mrb[0].mxu0
    %v3360 = vadd.f32 %v3050, %v3359
    %v3361 = vpop.f32.mrb[0].mxu0
    %v3362 = vadd.f32 %v3054, %v3361
    %v3363 = vpop.f32.mrb[0].mxu0
    %v3364 = vadd.f32 %v3050, %v3363
    %v3365 = vpop.f32.mrb[0].mxu0
    %v3366 = vadd.f32 %v3054, %v3365
    %3367 = vdwg.mxu0
    %3368 = vmatprep.subr.bf16.mxu0 %v3220
    %3369 = vmatpush1.bf16.msra.mxu0 %v3219
    %3370 = vmatprep.subr.bf16.mxu0 %v3236
    %3371 = vmatpush1.bf16.msra.mxu0 %v3235
    %3372 = vmatprep.subr.bf16.mxu0 0
    %3373 = vmatpush1.bf16.msra.mxu0 0
    %3374 = vmatprep.subr.bf16.mxu0 0
    %3375 = vmatpush1.bf16.msra.mxu0 0
    %3376 = vmatprep.subr.bf16.mxu0 0
    %3377 = vmatpush1.bf16.msra.mxu0 0
    %3378 = vmatprep.subr.bf16.mxu0 0
    %3379 = vmatpush1.bf16.msra.mxu0 0
    %3380 = vmatprep.subr.bf16.mxu0 0
    %3381 = vmatpush1.bf16.msra.mxu0 0
    %3382 = vmatprep.subr.bf16.mxu0 0
    %3383 = vmatpush1.bf16.msra.mxu0 0
    %3384 = vmatprep.subr.bf16.mxu0 0
    %3385 = vmatpush1.bf16.msra.mxu0 0
    %3386 = vmatprep.subr.bf16.mxu0 0
    %3387 = vmatpush1.bf16.msra.mxu0 0
    %3388 = vmatprep.subr.bf16.mxu0 0
    %3389 = vmatpush1.bf16.msra.mxu0 0
    %3390 = vmatprep.subr.bf16.mxu0 0
    %3391 = vmatpush1.bf16.msra.mxu0 0
    %3392 = vmatprep.subr.bf16.mxu0 0
    %3393 = vmatpush1.bf16.msra.mxu0 0
    %3394 = vmatprep.subr.bf16.mxu0 0
    %3395 = vmatpush1.bf16.msra.mxu0 0
    %3396 = vmatprep.subr.bf16.mxu0 0
    %3397 = vmatpush1.bf16.msra.mxu0 0
    %3398 = vmatprep.subr.bf16.mxu0 0
    %3399 = vmatpush1.bf16.msra.mxu0 0
    %3400 = vmatprep.mubr.bf16.mxu0 0
    %3401 = vmatmul.mubr.bf16.gmra.mrb[0].mxu0 %v3280
    %v3402 = vpop.f32.mrb[0].mxu0
    %v3403 = vadd.f32 %v3058, %v3402
    %v3404 = vpop.f32.mrb[0].mxu0
    %v3405 = vadd.f32 %v3062, %v3404
    %v3406 = vpop.f32.mrb[0].mxu0
    %v3407 = vadd.f32 %v3058, %v3406
    %v3408 = vpop.f32.mrb[0].mxu0
    %v3409 = vadd.f32 %v3062, %v3408
    %3410 = vdwg.mxu0
    %3411 = vmatprep.subr.bf16.mxu0 %v3222
    %3412 = vmatpush1.bf16.msra.mxu0 %v3221
    %3413 = vmatprep.subr.bf16.mxu0 %v3238
    %3414 = vmatpush1.bf16.msra.mxu0 %v3237
    %3415 = vmatprep.subr.bf16.mxu0 0
    %3416 = vmatpush1.bf16.msra.mxu0 0
    %3417 = vmatprep.subr.bf16.mxu0 0
    %3418 = vmatpush1.bf16.msra.mxu0 0
    %3419 = vmatprep.subr.bf16.mxu0 0
    %3420 = vmatpush1.bf16.msra.mxu0 0
    %3421 = vmatprep.subr.bf16.mxu0 0
    %3422 = vmatpush1.bf16.msra.mxu0 0
    %3423 = vmatprep.subr.bf16.mxu0 0
    %3424 = vmatpush1.bf16.msra.mxu0 0
    %3425 = vmatprep.subr.bf16.mxu0 0
    %3426 = vmatpush1.bf16.msra.mxu0 0
    %3427 = vmatprep.subr.bf16.mxu0 0
    %3428 = vmatpush1.bf16.msra.mxu0 0
    %3429 = vmatprep.subr.bf16.mxu0 0
    %3430 = vmatpush1.bf16.msra.mxu0 0
    %3431 = vmatprep.subr.bf16.mxu0 0
    %3432 = vmatpush1.bf16.msra.mxu0 0
    %3433 = vmatprep.subr.bf16.mxu0 0
    %3434 = vmatpush1.bf16.msra.mxu0 0
    %3435 = vmatprep.subr.bf16.mxu0 0
    %3436 = vmatpush1.bf16.msra.mxu0 0
    %3437 = vmatprep.subr.bf16.mxu0 0
    %3438 = vmatpush1.bf16.msra.mxu0 0
    %3439 = vmatprep.subr.bf16.mxu0 0
    %3440 = vmatpush1.bf16.msra.mxu0 0
    %3441 = vmatprep.subr.bf16.mxu0 0
    %3442 = vmatpush1.bf16.msra.mxu0 0
    %3443 = vmatprep.mubr.bf16.mxu0 0
    %3444 = vmatmul.mubr.bf16.gmra.mrb[0].mxu0 %v3280
    %v3445 = vpop.f32.mrb[0].mxu0
    %v3446 = vadd.f32 %v3066, %v3445
    %v3447 = vpop.f32.mrb[0].mxu0
    %v3448 = vadd.f32 %v3070, %v3447
    %v3449 = vpop.f32.mrb[0].mxu0
    %v3450 = vadd.f32 %v3066, %v3449
    %v3451 = vpop.f32.mrb[0].mxu0
    %v3452 = vadd.f32 %v3070, %v3451
    %3453 = vdwg.mxu0
    %3454 = vmatprep.subr.bf16.mxu0 %v3224
    %3455 = vmatpush1.bf16.msra.mxu0 %v3223
    %3456 = vmatprep.subr.bf16.mxu0 %v3240
    %3457 = vmatpush1.bf16.msra.mxu0 %v3239
    %3458 = vmatprep.subr.bf16.mxu0 0
    %3459 = vmatpush1.bf16.msra.mxu0 0
    %3460 = vmatprep.subr.bf16.mxu0 0
    %3461 = vmatpush1.bf16.msra.mxu0 0
    %3462 = vmatprep.subr.bf16.mxu0 0
    %3463 = vmatpush1.bf16.msra.mxu0 0
    %3464 = vmatprep.subr.bf16.mxu0 0
    %3465 = vmatpush1.bf16.msra.mxu0 0
    %3466 = vmatprep.subr.bf16.mxu0 0
    %3467 = vmatpush1.bf16.msra.mxu0 0
    %3468 = vmatprep.subr.bf16.mxu0 0
    %3469 = vmatpush1.bf16.msra.mxu0 0
    %3470 = vmatprep.subr.bf16.mxu0 0
    %3471 = vmatpush1.bf16.msra.mxu0 0
    %3472 = vmatprep.subr.bf16.mxu0 0
    %3473 = vmatpush1.bf16.msra.mxu0 0
    %3474 = vmatprep.subr.bf16.mxu0 0
    %3475 = vmatpush1.bf16.msra.mxu0 0
    %3476 = vmatprep.subr.bf16.mxu0 0
    %3477 = vmatpush1.bf16.msra.mxu0 0
    %3478 = vmatprep.subr.bf16.mxu0 0
    %3479 = vmatpush1.bf16.msra.mxu0 0
    %3480 = vmatprep.subr.bf16.mxu0 0
    %3481 = vmatpush1.bf16.msra.mxu0 0
    %3482 = vmatprep.subr.bf16.mxu0 0
    %3483 = vmatpush1.bf16.msra.mxu0 0
    %3484 = vmatprep.subr.bf16.mxu0 0
    %3485 = vmatpush1.bf16.msra.mxu0 0
    %3486 = vmatprep.mubr.bf16.mxu0 0
    %3487 = vmatmul.mubr.bf16.gmra.mrb[0].mxu0 %v3280
    %v3488 = vpop.f32.mrb[0].mxu0
    %v3489 = vadd.f32 %v3074, %v3488
    %v3490 = vpop.f32.mrb[0].mxu0
    %v3491 = vadd.f32 %v3078, %v3490
    %v3492 = vpop.f32.mrb[0].mxu0
    %v3493 = vadd.f32 %v3074, %v3492
    %v3494 = vpop.f32.mrb[0].mxu0
    %v3495 = vadd.f32 %v3078, %v3494
    %3496 = vdwg.mxu0
    %3497 = vmatprep.subr.bf16.mxu0 %v3226
    %3498 = vmatpush1.bf16.msra.mxu0 %v3225
    %3499 = vmatprep.subr.bf16.mxu0 %v3242
    %3500 = vmatpush1.bf16.msra.mxu0 %v3241
    %3501 = vmatprep.subr.bf16.mxu0 0
    %3502 = vmatpush1.bf16.msra.mxu0 0
    %3503 = vmatprep.subr.bf16.mxu0 0
    %3504 = vmatpush1.bf16.msra.mxu0 0
    %3505 = vmatprep.subr.bf16.mxu0 0
    %3506 = vmatpush1.bf16.msra.mxu0 0
    %3507 = vmatprep.subr.bf16.mxu0 0
    %3508 = vmatpush1.bf16.msra.mxu0 0
    %3509 = vmatprep.subr.bf16.mxu0 0
    %3510 = vmatpush1.bf16.msra.mxu0 0
    %3511 = vmatprep.subr.bf16.mxu0 0
    %3512 = vmatpush1.bf16.msra.mxu0 0
    %3513 = vmatprep.subr.bf16.mxu0 0
    %3514 = vmatpush1.bf16.msra.mxu0 0
    %3515 = vmatprep.subr.bf16.mxu0 0
    %3516 = vmatpush1.bf16.msra.mxu0 0
    %3517 = vmatprep.subr.bf16.mxu0 0
    %3518 = vmatpush1.bf16.msra.mxu0 0
    %3519 = vmatprep.subr.bf16.mxu0 0
    %3520 = vmatpush1.bf16.msra.mxu0 0
    %3521 = vmatprep.subr.bf16.mxu0 0
    %3522 = vmatpush1.bf16.msra.mxu0 0
    %3523 = vmatprep.subr.bf16.mxu0 0
    %3524 = vmatpush1.bf16.msra.mxu0 0
    %3525 = vmatprep.subr.bf16.mxu0 0
    %3526 = vmatpush1.bf16.msra.mxu0 0
    %3527 = vmatprep.subr.bf16.mxu0 0
    %3528 = vmatpush1.bf16.msra.mxu0 0
    %3529 = vmatprep.mubr.bf16.mxu0 0
    %3530 = vmatmul.mubr.bf16.gmra.mrb[0].mxu0 %v3280
    %v3531 = vpop.f32.mrb[0].mxu0
    %v3532 = vadd.f32 %v3082, %v3531
    %v3533 = vpop.f32.mrb[0].mxu0
    %v3534 = vadd.f32 %v3086, %v3533
    %v3535 = vpop.f32.mrb[0].mxu0
    %v3536 = vadd.f32 %v3082, %v3535
    %v3537 = vpop.f32.mrb[0].mxu0
    %v3538 = vadd.f32 %v3086, %v3537
    %3539 = vdwg.mxu0
    %3540 = vmatprep.subr.bf16.mxu0 %v3228
    %3541 = vmatpush1.bf16.msra.mxu0 %v3227
    %3542 = vmatprep.subr.bf16.mxu0 %v3244
    %3543 = vmatpush1.bf16.msra.mxu0 %v3243
    %3544 = vmatprep.subr.bf16.mxu0 0
    %3545 = vmatpush1.bf16.msra.mxu0 0
    %3546 = vmatprep.subr.bf16.mxu0 0
    %3547 = vmatpush1.bf16.msra.mxu0 0
    %3548 = vmatprep.subr.bf16.mxu0 0
    %3549 = vmatpush1.bf16.msra.mxu0 0
    %3550 = vmatprep.subr.bf16.mxu0 0
    %3551 = vmatpush1.bf16.msra.mxu0 0
    %3552 = vmatprep.subr.bf16.mxu0 0
    %3553 = vmatpush1.bf16.msra.mxu0 0
    %3554 = vmatprep.subr.bf16.mxu0 0
    %3555 = vmatpush1.bf16.msra.mxu0 0
    %3556 = vmatprep.subr.bf16.mxu0 0
    %3557 = vmatpush1.bf16.msra.mxu0 0
    %3558 = vmatprep.subr.bf16.mxu0 0
    %3559 = vmatpush1.bf16.msra.mxu0 0
    %3560 = vmatprep.subr.bf16.mxu0 0
    %3561 = vmatpush1.bf16.msra.mxu0 0
    %3562 = vmatprep.subr.bf16.mxu0 0
    %3563 = vmatpush1.bf16.msra.mxu0 0
    %3564 = vmatprep.subr.bf16.mxu0 0
    %3565 = vmatpush1.bf16.msra.mxu0 0
    %3566 = vmatprep.subr.bf16.mxu0 0
    %3567 = vmatpush1.bf16.msra.mxu0 0
    %3568 = vmatprep.subr.bf16.mxu0 0
    %3569 = vmatpush1.bf16.msra.mxu0 0
    %3570 = vmatprep.subr.bf16.mxu0 0
    %3571 = vmatpush1.bf16.msra.mxu0 0
    %3572 = vmatprep.mubr.bf16.mxu0 0
    %3573 = vmatmul.mubr.bf16.gmra.mrb[0].mxu0 %v3280
    %v3574 = vpop.f32.mrb[0].mxu0
    %v3575 = vadd.f32 %v3090, %v3574
    %v3576 = vpop.f32.mrb[0].mxu0
    %v3577 = vadd.f32 %v3094, %v3576
    %v3578 = vpop.f32.mrb[0].mxu0
    %v3579 = vadd.f32 %v3090, %v3578
    %v3580 = vpop.f32.mrb[0].mxu0
    %v3581 = vadd.f32 %v3094, %v3580
    %3582 = vdwg.mxu0
    %3583 = vmatprep.subr.bf16.mxu0 %v3230
    %3584 = vmatpush1.bf16.msra.mxu0 %v3229
    %3585 = vmatprep.subr.bf16.mxu0 %v3246
    %3586 = vmatpush1.bf16.msra.mxu0 %v3245
    %3587 = vmatprep.subr.bf16.mxu0 0
    %3588 = vmatpush1.bf16.msra.mxu0 0
    %3589 = vmatprep.subr.bf16.mxu0 0
    %3590 = vmatpush1.bf16.msra.mxu0 0
    %3591 = vmatprep.subr.bf16.mxu0 0
    %3592 = vmatpush1.bf16.msra.mxu0 0
    %3593 = vmatprep.subr.bf16.mxu0 0
    %3594 = vmatpush1.bf16.msra.mxu0 0
    %3595 = vmatprep.subr.bf16.mxu0 0
    %3596 = vmatpush1.bf16.msra.mxu0 0
    %3597 = vmatprep.subr.bf16.mxu0 0
    %3598 = vmatpush1.bf16.msra.mxu0 0
    %3599 = vmatprep.subr.bf16.mxu0 0
    %3600 = vmatpush1.bf16.msra.mxu0 0
    %3601 = vmatprep.subr.bf16.mxu0 0
    %3602 = vmatpush1.bf16.msra.mxu0 0
    %3603 = vmatprep.subr.bf16.mxu0 0
    %3604 = vmatpush1.bf16.msra.mxu0 0
    %3605 = vmatprep.subr.bf16.mxu0 0
    %3606 = vmatpush1.bf16.msra.mxu0 0
    %3607 = vmatprep.subr.bf16.mxu0 0
    %3608 = vmatpush1.bf16.msra.mxu0 0
    %3609 = vmatprep.subr.bf16.mxu0 0
    %3610 = vmatpush1.bf16.msra.mxu0 0
    %3611 = vmatprep.subr.bf16.mxu0 0
    %3612 = vmatpush1.bf16.msra.mxu0 0
    %3613 = vmatprep.subr.bf16.mxu0 0
    %3614 = vmatpush1.bf16.msra.mxu0 0
    %3615 = vmatprep.mubr.bf16.mxu0 0
    %3616 = vmatmul.mubr.bf16.gmra.mrb[0].mxu0 %v3280
    %v3617 = vpop.f32.mrb[0].mxu0
    %v3618 = vadd.f32 %v3098, %v3617
    %v3619 = vpop.f32.mrb[0].mxu0
    %v3620 = vadd.f32 %v3102, %v3619
    %v3621 = vpop.f32.mrb[0].mxu0
    %v3622 = vadd.f32 %v3098, %v3621
    %v3623 = vpop.f32.mrb[0].mxu0
    %v3624 = vadd.f32 %v3102, %v3623
    %3625 = vdwg.mxu0
    %v3626 = vmax.f32 %v3317, 0.0
    %v3627 = vmax.f32 %v3319, 0.0
    %v3628 = vmax.f32 %v3360, 0.0
    %v3629 = vmax.f32 %v3362, 0.0
    %v3630 = vmax.f32 %v3403, 0.0
    %v3631 = vmax.f32 %v3405, 0.0
    %v3632 = vmax.f32 %v3446, 0.0
    %v3633 = vmax.f32 %v3448, 0.0
    %v3634 = vmax.f32 %v3489, 0.0
    %v3635 = vmax.f32 %v3491, 0.0
    %v3636 = vmax.f32 %v3532, 0.0
    %v3637 = vmax.f32 %v3534, 0.0
    %v3638 = vmax.f32 %v3575, 0.0
    %v3639 = vmax.f32 %v3577, 0.0
    %v3640 = vmax.f32 %v3618, 0.0
    %v3641 = vmax.f32 %v3620, 0.0
    %v3642 = vmax.f32 %v3321, 0.0
    %v3643 = vmax.f32 %v3323, 0.0
    %v3644 = vmax.f32 %v3364, 0.0
    %v3645 = vmax.f32 %v3366, 0.0
    %v3646 = vmax.f32 %v3407, 0.0
    %v3647 = vmax.f32 %v3409, 0.0
    %v3648 = vmax.f32 %v3450, 0.0
    %v3649 = vmax.f32 %v3452, 0.0
    %v3650 = vmax.f32 %v3493, 0.0
    %v3651 = vmax.f32 %v3495, 0.0
    %v3652 = vmax.f32 %v3536, 0.0
    %v3653 = vmax.f32 %v3538, 0.0
    %v3654 = vmax.f32 %v3579, 0.0
    %v3655 = vmax.f32 %v3581, 0.0
    %v3656 = vmax.f32 %v3622, 0.0
    %v3657 = vmax.f32 %v3624, 0.0
    %v3658 = vpack.c.bf16 %v3642, %v3626
    %v3659 = vpack.c.bf16 %v3643, %v3627
    %v3660 = vpack.c.bf16 %v3644, %v3628
    %v3661 = vpack.c.bf16 %v3645, %v3629
    %v3662 = vpack.c.bf16 %v3646, %v3630
    %v3663 = vpack.c.bf16 %v3647, %v3631
    %v3664 = vpack.c.bf16 %v3648, %v3632
    %v3665 = vpack.c.bf16 %v3649, %v3633
    %v3666 = vpack.c.bf16 %v3650, %v3634
    %v3667 = vpack.c.bf16 %v3651, %v3635
    %v3668 = vpack.c.bf16 %v3652, %v3636
    %v3669 = vpack.c.bf16 %v3653, %v3637
    %v3670 = vpack.c.bf16 %v3654, %v3638
    %v3671 = vpack.c.bf16 %v3655, %v3639
    %v3672 = vpack.c.bf16 %v3656, %v3640
    %v3673 = vpack.c.bf16 %v3657, %v3641
    %v3674 = vld [vmem:[%s7] sm:$0xf]
    %v3675 = vld [vmem:[%s7 + $0x4] sm:$0xf]
    %v3676 = vld [vmem:[%s7 + $0x8] sm:$0xf]
    %v3677 = vld [vmem:[%s7 + $0xc] sm:$0xf]
    %v3678 = vld [vmem:[%s7 + $0x10] sm:$0xf]
    %v3679 = vld [vmem:[%s7 + $0x14] sm:$0xf]
    %v3680 = vld [vmem:[%s7 + $0x18] sm:$0xf]
    %v3681 = vld [vmem:[%s7 + $0x1c] sm:$0xf]
    %v3682 = vld [vmem:[%s7 + $0x20] sm:$0xf]
    %v3683 = vld [vmem:[%s7 + $0x24] sm:$0xf]
    %v3684 = vld [vmem:[%s7 + $0x28] sm:$0xf]
    %v3685 = vld [vmem:[%s7 + $0x2c] sm:$0xf]
    %v3686 = vld [vmem:[%s7 + $0x30] sm:$0xf]
    %v3687 = vld [vmem:[%s7 + $0x34] sm:$0xf]
    %v3688 = vld [vmem:[%s7 + $0x38] sm:$0xf]
    %v3689 = vld [vmem:[%s7 + $0x3c] sm:$0xf]
    %v3690 = vld [vmem:[%s7 + $0x40] sm:$0xf]
    %v3691 = vld [vmem:[%s7 + $0x44] sm:$0xf]
    %v3692 = vld [vmem:[%s7 + $0x48] sm:$0xf]
    %v3693 = vld [vmem:[%s7 + $0x4c] sm:$0xf]
    %v3694 = vld [vmem:[%s7 + $0x50] sm:$0xf]
    %v3695 = vld [vmem:[%s7 + $0x54] sm:$0xf]
    %v3696 = vld [vmem:[%s7 + $0x58] sm:$0xf]
    %v3697 = vld [vmem:[%s7 + $0x5c] sm:$0xf]
    %v3698 = vld [vmem:[%s7 + $0x60] sm:$0xf]
    %v3699 = vld [vmem:[%s7 + $0x64] sm:$0xf]
    %v3700 = vld [vmem:[%s7 + $0x68] sm:$0xf]
    %v3701 = vld [vmem:[%s7 + $0x6c] sm:$0xf]
    %v3702 = vld [vmem:[%s7 + $0x70] sm:$0xf]
    %v3703 = vld [vmem:[%s7 + $0x74] sm:$0xf]
    %v3704 = vld [vmem:[%s7 + $0x78] sm:$0xf]
    %v3705 = vld [vmem:[%s7 + $0x7c] sm:$0xf]
    %v3706 = vld [vmem:[%s7 + $0x80] sm:$0xf]
    %v3707 = vld [vmem:[%s7 + $0x84] sm:$0xf]
    %v3708 = vld [vmem:[%s7 + $0x88] sm:$0xf]
    %v3709 = vld [vmem:[%s7 + $0x8c] sm:$0xf]
    %v3710 = vld [vmem:[%s7 + $0x90] sm:$0xf]
    %v3711 = vld [vmem:[%s7 + $0x94] sm:$0xf]
    %v3712 = vld [vmem:[%s7 + $0x98] sm:$0xf]
    %v3713 = vld [vmem:[%s7 + $0x9c] sm:$0xf]
    %v3714 = vld [vmem:[%s7 + $0xa0] sm:$0xf]
    %v3715 = vld [vmem:[%s7 + $0xa4] sm:$0xf]
    %v3716 = vld [vmem:[%s7 + $0xa8] sm:$0xf]
    %v3717 = vld [vmem:[%s7 + $0xac] sm:$0xf]
    %v3718 = vld [vmem:[%s7 + $0xb0] sm:$0xf]
    %v3719 = vld [vmem:[%s7 + $0xb4] sm:$0xf]
    %v3720 = vld [vmem:[%s7 + $0xb8] sm:$0xf]
    %v3721 = vld [vmem:[%s7 + $0xbc] sm:$0xf]
    %v3722 = vld [vmem:[%s7 + $0xc0] sm:$0xf]
    %v3723 = vld [vmem:[%s7 + $0xc4] sm:$0xf]
    %v3724 = vld [vmem:[%s7 + $0xc8] sm:$0xf]
    %v3725 = vld [vmem:[%s7 + $0xcc] sm:$0xf]
    %v3726 = vld [vmem:[%s7 + $0xd0] sm:$0xf]
    %v3727 = vld [vmem:[%s7 + $0xd4] sm:$0xf]
    %v3728 = vld [vmem:[%s7 + $0xd8] sm:$0xf]
    %v3729 = vld [vmem:[%s7 + $0xdc] sm:$0xf]
    %v3730 = vld [vmem:[%s7 + $0xe0] sm:$0xf]
    %v3731 = vld [vmem:[%s7 + $0xe4] sm:$0xf]
    %v3732 = vld [vmem:[%s7 + $0xe8] sm:$0xf]
    %v3733 = vld [vmem:[%s7 + $0xec] sm:$0xf]
    %v3734 = vld [vmem:[%s7 + $0xf0] sm:$0xf]
    %v3735 = vld [vmem:[%s7 + $0xf4] sm:$0xf]
    %v3736 = vld [vmem:[%s7 + $0xf8] sm:$0xf]
    %v3737 = vld [vmem:[%s7 + $0xfc] sm:$0xf]
    %v3738 = vld [vmem:[%s7 + $0x100] sm:$0xf]
    %v3739 = vld [vmem:[%s7 + $0x104] sm:$0xf]
    %v3740 = vld [vmem:[%s7 + $0x108] sm:$0xf]
    %v3741 = vld [vmem:[%s7 + $0x10c] sm:$0xf]
    %v3742 = vld [vmem:[%s7 + $0x110] sm:$0xf]
    %v3743 = vld [vmem:[%s7 + $0x114] sm:$0xf]
    %v3744 = vld [vmem:[%s7 + $0x118] sm:$0xf]
    %v3745 = vld [vmem:[%s7 + $0x11c] sm:$0xf]
    %v3746 = vld [vmem:[%s7 + $0x120] sm:$0xf]
    %v3747 = vld [vmem:[%s7 + $0x124] sm:$0xf]
    %v3748 = vld [vmem:[%s7 + $0x128] sm:$0xf]
    %v3749 = vld [vmem:[%s7 + $0x12c] sm:$0xf]
    %v3750 = vld [vmem:[%s7 + $0x130] sm:$0xf]
    %v3751 = vld [vmem:[%s7 + $0x134] sm:$0xf]
    %v3752 = vld [vmem:[%s7 + $0x138] sm:$0xf]
    %v3753 = vld [vmem:[%s7 + $0x13c] sm:$0xf]
    %v3754 = vld [vmem:[%s7 + $0x140] sm:$0xf]
    %v3755 = vld [vmem:[%s7 + $0x144] sm:$0xf]
    %v3756 = vld [vmem:[%s7 + $0x148] sm:$0xf]
    %v3757 = vld [vmem:[%s7 + $0x14c] sm:$0xf]
    %v3758 = vld [vmem:[%s7 + $0x150] sm:$0xf]
    %v3759 = vld [vmem:[%s7 + $0x154] sm:$0xf]
    %v3760 = vld [vmem:[%s7 + $0x158] sm:$0xf]
    %v3761 = vld [vmem:[%s7 + $0x15c] sm:$0xf]
    %v3762 = vld [vmem:[%s7 + $0x160] sm:$0xf]
    %v3763 = vld [vmem:[%s7 + $0x164] sm:$0xf]
    %v3764 = vld [vmem:[%s7 + $0x168] sm:$0xf]
    %v3765 = vld [vmem:[%s7 + $0x16c] sm:$0xf]
    %v3766 = vld [vmem:[%s7 + $0x170] sm:$0xf]
    %v3767 = vld [vmem:[%s7 + $0x174] sm:$0xf]
    %v3768 = vld [vmem:[%s7 + $0x178] sm:$0xf]
    %v3769 = vld [vmem:[%s7 + $0x17c] sm:$0xf]
    %v3770 = vld [vmem:[%s7 + $0x180] sm:$0xf]
    %v3771 = vld [vmem:[%s7 + $0x184] sm:$0xf]
    %v3772 = vld [vmem:[%s7 + $0x188] sm:$0xf]
    %v3773 = vld [vmem:[%s7 + $0x18c] sm:$0xf]
    %v3774 = vld [vmem:[%s7 + $0x190] sm:$0xf]
    %v3775 = vld [vmem:[%s7 + $0x194] sm:$0xf]
    %v3776 = vld [vmem:[%s7 + $0x198] sm:$0xf]
    %v3777 = vld [vmem:[%s7 + $0x19c] sm:$0xf]
    %v3778 = vld [vmem:[%s7 + $0x1a0] sm:$0xf]
    %v3779 = vld [vmem:[%s7 + $0x1a4] sm:$0xf]
    %v3780 = vld [vmem:[%s7 + $0x1a8] sm:$0xf]
    %v3781 = vld [vmem:[%s7 + $0x1ac] sm:$0xf]
    %v3782 = vld [vmem:[%s7 + $0x1b0] sm:$0xf]
    %v3783 = vld [vmem:[%s7 + $0x1b4] sm:$0xf]
    %v3784 = vld [vmem:[%s7 + $0x1b8] sm:$0xf]
    %v3785 = vld [vmem:[%s7 + $0x1bc] sm:$0xf]
    %v3786 = vld [vmem:[%s7 + $0x1c0] sm:$0xf]
    %v3787 = vld [vmem:[%s7 + $0x1c4] sm:$0xf]
    %v3788 = vld [vmem:[%s7 + $0x1c8] sm:$0xf]
    %v3789 = vld [vmem:[%s7 + $0x1cc] sm:$0xf]
    %v3790 = vld [vmem:[%s7 + $0x1d0] sm:$0xf]
    %v3791 = vld [vmem:[%s7 + $0x1d4] sm:$0xf]
    %v3792 = vld [vmem:[%s7 + $0x1d8] sm:$0xf]
    %v3793 = vld [vmem:[%s7 + $0x1dc] sm:$0xf]
    %v3794 = vld [vmem:[%s7 + $0x1e0] sm:$0xf]
    %v3795 = vld [vmem:[%s7 + $0x1e4] sm:$0xf]
    %v3796 = vld [vmem:[%s7 + $0x1e8] sm:$0xf]
    %v3797 = vld [vmem:[%s7 + $0x1ec] sm:$0xf]
    %v3798 = vld [vmem:[%s7 + $0x1f0] sm:$0xf]
    %v3799 = vld [vmem:[%s7 + $0x1f4] sm:$0xf]
    %v3800 = vld [vmem:[%s7 + $0x1f8] sm:$0xf]
    %v3801 = vld [vmem:[%s7 + $0x1fc] sm:$0xf]
    %v3802 = vld [vmem:[%s7 + $0x200] sm:$0xf]
    %v3803 = vld [vmem:[%s7 + $0x204] sm:$0xf]
    %v3804 = vld [vmem:[%s7 + $0x208] sm:$0xf]
    %v3805 = vld [vmem:[%s7 + $0x20c] sm:$0xf]
    %v3806 = vld [vmem:[%s7 + $0x210] sm:$0xf]
    %v3807 = vld [vmem:[%s7 + $0x214] sm:$0xf]
    %v3808 = vld [vmem:[%s7 + $0x218] sm:$0xf]
    %v3809 = vld [vmem:[%s7 + $0x21c] sm:$0xf]
    %v3810 = vld [vmem:[%s7 + $0x220] sm:$0xf]
    %v3811 = vld [vmem:[%s7 + $0x224] sm:$0xf]
    %v3812 = vld [vmem:[%s7 + $0x228] sm:$0xf]
    %v3813 = vld [vmem:[%s7 + $0x22c] sm:$0xf]
    %v3814 = vld [vmem:[%s7 + $0x230] sm:$0xf]
    %v3815 = vld [vmem:[%s7 + $0x234] sm:$0xf]
    %v3816 = vld [vmem:[%s7 + $0x238] sm:$0xf]
    %v3817 = vld [vmem:[%s7 + $0x23c] sm:$0xf]
    %v3818 = vld [vmem:[%s7 + $0x240] sm:$0xf]
    %v3819 = vld [vmem:[%s7 + $0x244] sm:$0xf]
    %v3820 = vld [vmem:[%s7 + $0x248] sm:$0xf]
    %v3821 = vld [vmem:[%s7 + $0x24c] sm:$0xf]
    %v3822 = vld [vmem:[%s7 + $0x250] sm:$0xf]
    %v3823 = vld [vmem:[%s7 + $0x254] sm:$0xf]
    %v3824 = vld [vmem:[%s7 + $0x258] sm:$0xf]
    %v3825 = vld [vmem:[%s7 + $0x25c] sm:$0xf]
    %v3826 = vld [vmem:[%s7 + $0x260] sm:$0xf]
    %v3827 = vld [vmem:[%s7 + $0x264] sm:$0xf]
    %v3828 = vld [vmem:[%s7 + $0x268] sm:$0xf]
    %v3829 = vld [vmem:[%s7 + $0x26c] sm:$0xf]
    %v3830 = vld [vmem:[%s7 + $0x270] sm:$0xf]
    %v3831 = vld [vmem:[%s7 + $0x274] sm:$0xf]
    %v3832 = vld [vmem:[%s7 + $0x278] sm:$0xf]
    %v3833 = vld [vmem:[%s7 + $0x27c] sm:$0xf]
    %v3834 = vld [vmem:[%s7 + $0x280] sm:$0xf]
    %v3835 = vld [vmem:[%s7 + $0x284] sm:$0xf]
    %v3836 = vld [vmem:[%s7 + $0x288] sm:$0xf]
    %v3837 = vld [vmem:[%s7 + $0x28c] sm:$0xf]
    %v3838 = vld [vmem:[%s7 + $0x290] sm:$0xf]
    %v3839 = vld [vmem:[%s7 + $0x294] sm:$0xf]
    %v3840 = vld [vmem:[%s7 + $0x298] sm:$0xf]
    %v3841 = vld [vmem:[%s7 + $0x29c] sm:$0xf]
    %v3842 = vld [vmem:[%s7 + $0x2a0] sm:$0xf]
    %v3843 = vld [vmem:[%s7 + $0x2a4] sm:$0xf]
    %v3844 = vld [vmem:[%s7 + $0x2a8] sm:$0xf]
    %v3845 = vld [vmem:[%s7 + $0x2ac] sm:$0xf]
    %v3846 = vld [vmem:[%s7 + $0x2b0] sm:$0xf]
    %v3847 = vld [vmem:[%s7 + $0x2b4] sm:$0xf]
    %v3848 = vld [vmem:[%s7 + $0x2b8] sm:$0xf]
    %v3849 = vld [vmem:[%s7 + $0x2bc] sm:$0xf]
    %v3850 = vld [vmem:[%s7 + $0x2c0] sm:$0xf]
    %v3851 = vld [vmem:[%s7 + $0x2c4] sm:$0xf]
    %v3852 = vld [vmem:[%s7 + $0x2c8] sm:$0xf]
    %v3853 = vld [vmem:[%s7 + $0x2cc] sm:$0xf]
    %v3854 = vld [vmem:[%s7 + $0x2d0] sm:$0xf]
    %v3855 = vld [vmem:[%s7 + $0x2d4] sm:$0xf]
    %v3856 = vld [vmem:[%s7 + $0x2d8] sm:$0xf]
    %v3857 = vld [vmem:[%s7 + $0x2dc] sm:$0xf]
    %v3858 = vld [vmem:[%s7 + $0x2e0] sm:$0xf]
    %v3859 = vld [vmem:[%s7 + $0x2e4] sm:$0xf]
    %v3860 = vld [vmem:[%s7 + $0x2e8] sm:$0xf]
    %v3861 = vld [vmem:[%s7 + $0x2ec] sm:$0xf]
    %v3862 = vld [vmem:[%s7 + $0x2f0] sm:$0xf]
    %v3863 = vld [vmem:[%s7 + $0x2f4] sm:$0xf]
    %v3864 = vld [vmem:[%s7 + $0x2f8] sm:$0xf]
    %v3865 = vld [vmem:[%s7 + $0x2fc] sm:$0xf]
    %v3866 = vld [vmem:[%s7 + $0x300] sm:$0xf]
    %v3867 = vld [vmem:[%s7 + $0x304] sm:$0xf]
    %v3868 = vld [vmem:[%s7 + $0x308] sm:$0xf]
    %v3869 = vld [vmem:[%s7 + $0x30c] sm:$0xf]
    %v3870 = vld [vmem:[%s7 + $0x310] sm:$0xf]
    %v3871 = vld [vmem:[%s7 + $0x314] sm:$0xf]
    %v3872 = vld [vmem:[%s7 + $0x318] sm:$0xf]
    %v3873 = vld [vmem:[%s7 + $0x31c] sm:$0xf]
    %v3874 = vld [vmem:[%s7 + $0x320] sm:$0xf]
    %v3875 = vld [vmem:[%s7 + $0x324] sm:$0xf]
    %v3876 = vld [vmem:[%s7 + $0x328] sm:$0xf]
    %v3877 = vld [vmem:[%s7 + $0x32c] sm:$0xf]
    %v3878 = vld [vmem:[%s7 + $0x330] sm:$0xf]
    %v3879 = vld [vmem:[%s7 + $0x334] sm:$0xf]
    %v3880 = vld [vmem:[%s7 + $0x338] sm:$0xf]
    %v3881 = vld [vmem:[%s7 + $0x33c] sm:$0xf]
    %v3882 = vld [vmem:[%s7 + $0x340] sm:$0xf]
    %v3883 = vld [vmem:[%s7 + $0x344] sm:$0xf]
    %v3884 = vld [vmem:[%s7 + $0x348] sm:$0xf]
    %v3885 = vld [vmem:[%s7 + $0x34c] sm:$0xf]
    %v3886 = vld [vmem:[%s7 + $0x350] sm:$0xf]
    %v3887 = vld [vmem:[%s7 + $0x354] sm:$0xf]
    %v3888 = vld [vmem:[%s7 + $0x358] sm:$0xf]
    %v3889 = vld [vmem:[%s7 + $0x35c] sm:$0xf]
    %v3890 = vld [vmem:[%s7 + $0x360] sm:$0xf]
    %v3891 = vld [vmem:[%s7 + $0x364] sm:$0xf]
    %v3892 = vld [vmem:[%s7 + $0x368] sm:$0xf]
    %v3893 = vld [vmem:[%s7 + $0x36c] sm:$0xf]
    %v3894 = vld [vmem:[%s7 + $0x370] sm:$0xf]
    %v3895 = vld [vmem:[%s7 + $0x374] sm:$0xf]
    %v3896 = vld [vmem:[%s7 + $0x378] sm:$0xf]
    %v3897 = vld [vmem:[%s7 + $0x37c] sm:$0xf]
    %v3898 = vld [vmem:[%s7 + $0x380] sm:$0xf]
    %v3899 = vld [vmem:[%s7 + $0x384] sm:$0xf]
    %v3900 = vld [vmem:[%s7 + $0x388] sm:$0xf]
    %v3901 = vld [vmem:[%s7 + $0x38c] sm:$0xf]
    %v3902 = vld [vmem:[%s7 + $0x390] sm:$0xf]
    %v3903 = vld [vmem:[%s7 + $0x394] sm:$0xf]
    %v3904 = vld [vmem:[%s7 + $0x398] sm:$0xf]
    %v3905 = vld [vmem:[%s7 + $0x39c] sm:$0xf]
    %v3906 = vld [vmem:[%s7 + $0x3a0] sm:$0xf]
    %v3907 = vld [vmem:[%s7 + $0x3a4] sm:$0xf]
    %v3908 = vld [vmem:[%s7 + $0x3a8] sm:$0xf]
    %v3909 = vld [vmem:[%s7 + $0x3ac] sm:$0xf]
    %v3910 = vld [vmem:[%s7 + $0x3b0] sm:$0xf]
    %v3911 = vld [vmem:[%s7 + $0x3b4] sm:$0xf]
    %v3912 = vld [vmem:[%s7 + $0x3b8] sm:$0xf]
    %v3913 = vld [vmem:[%s7 + $0x3bc] sm:$0xf]
    %v3914 = vld [vmem:[%s7 + $0x3c0] sm:$0xf]
    %v3915 = vld [vmem:[%s7 + $0x3c4] sm:$0xf]
    %v3916 = vld [vmem:[%s7 + $0x3c8] sm:$0xf]
    %v3917 = vld [vmem:[%s7 + $0x3cc] sm:$0xf]
    %v3918 = vld [vmem:[%s7 + $0x3d0] sm:$0xf]
    %v3919 = vld [vmem:[%s7 + $0x3d4] sm:$0xf]
    %v3920 = vld [vmem:[%s7 + $0x3d8] sm:$0xf]
    %v3921 = vld [vmem:[%s7 + $0x3dc] sm:$0xf]
    %v3922 = vld [vmem:[%s7 + $0x3e0] sm:$0xf]
    %v3923 = vld [vmem:[%s7 + $0x3e4] sm:$0xf]
    %v3924 = vld [vmem:[%s7 + $0x3e8] sm:$0xf]
    %v3925 = vld [vmem:[%s7 + $0x3ec] sm:$0xf]
    %v3926 = vld [vmem:[%s7 + $0x3f0] sm:$0xf]
    %v3927 = vld [vmem:[%s7 + $0x3f4] sm:$0xf]
    %v3928 = vld [vmem:[%s7 + $0x3f8] sm:$0xf]
    %v3929 = vld [vmem:[%s7 + $0x3fc] sm:$0xf]
    %v3930 = vlaneseq
    %v3931 = vshrl.u32 %v3930, 7
    %v3932 = vsub.s32 3, %v3931
    %v3933 = vrot.slane %v39, %v3932
    %v4190 = vunpack.c.l.b16 %v3674
    %v4191 = vunpack.c.l.b16 %v3675
    %v4192 = vunpack.c.l.b16 %v3676
    %v4193 = vunpack.c.l.b16 %v3677
    %v4194 = vunpack.c.l.b16 %v3678
    %v4195 = vunpack.c.l.b16 %v3679
    %v4196 = vunpack.c.l.b16 %v3680
    %v4197 = vunpack.c.l.b16 %v3681
    %v4198 = vunpack.c.l.b16 %v3682
    %v4199 = vunpack.c.l.b16 %v3683
    %v4200 = vunpack.c.l.b16 %v3684
    %v4201 = vunpack.c.l.b16 %v3685
    %v4202 = vunpack.c.l.b16 %v3686
    %v4203 = vunpack.c.l.b16 %v3687
    %v4204 = vunpack.c.l.b16 %v3688
    %v4205 = vunpack.c.l.b16 %v3689
    %v4206 = vunpack.c.l.b16 %v3690
    %v4207 = vunpack.c.l.b16 %v3691
    %v4208 = vunpack.c.l.b16 %v3692
    %v4209 = vunpack.c.l.b16 %v3693
    %v4210 = vunpack.c.l.b16 %v3694
    %v4211 = vunpack.c.l.b16 %v3695
    %v4212 = vunpack.c.l.b16 %v3696
    %v4213 = vunpack.c.l.b16 %v3697
    %v4214 = vunpack.c.l.b16 %v3698
    %v4215 = vunpack.c.l.b16 %v3699
    %v4216 = vunpack.c.l.b16 %v3700
    %v4217 = vunpack.c.l.b16 %v3701
    %v4218 = vunpack.c.l.b16 %v3702
    %v4219 = vunpack.c.l.b16 %v3703
    %v4220 = vunpack.c.l.b16 %v3704
    %v4221 = vunpack.c.l.b16 %v3705
    %v4222 = vunpack.c.l.b16 %v3706
    %v4223 = vunpack.c.l.b16 %v3707
    %v4224 = vunpack.c.l.b16 %v3708
    %v4225 = vunpack.c.l.b16 %v3709
    %v4226 = vunpack.c.l.b16 %v3710
    %v4227 = vunpack.c.l.b16 %v3711
    %v4228 = vunpack.c.l.b16 %v3712
    %v4229 = vunpack.c.l.b16 %v3713
    %v4230 = vunpack.c.l.b16 %v3714
    %v4231 = vunpack.c.l.b16 %v3715
    %v4232 = vunpack.c.l.b16 %v3716
    %v4233 = vunpack.c.l.b16 %v3717
    %v4234 = vunpack.c.l.b16 %v3718
    %v4235 = vunpack.c.l.b16 %v3719
    %v4236 = vunpack.c.l.b16 %v3720
    %v4237 = vunpack.c.l.b16 %v3721
    %v4238 = vunpack.c.l.b16 %v3722
    %v4239 = vunpack.c.l.b16 %v3723
    %v4240 = vunpack.c.l.b16 %v3724
    %v4241 = vunpack.c.l.b16 %v3725
    %v4242 = vunpack.c.l.b16 %v3726
    %v4243 = vunpack.c.l.b16 %v3727
    %v4244 = vunpack.c.l.b16 %v3728
    %v4245 = vunpack.c.l.b16 %v3729
    %v4246 = vunpack.c.l.b16 %v3730
    %v4247 = vunpack.c.l.b16 %v3731
    %v4248 = vunpack.c.l.b16 %v3732
    %v4249 = vunpack.c.l.b16 %v3733
    %v4250 = vunpack.c.l.b16 %v3734
    %v4251 = vunpack.c.l.b16 %v3735
    %v4252 = vunpack.c.l.b16 %v3736
    %v4253 = vunpack.c.l.b16 %v3737
    %v4254 = vunpack.c.l.b16 %v3738
    %v4255 = vunpack.c.l.b16 %v3739
    %v4256 = vunpack.c.l.b16 %v3740
    %v4257 = vunpack.c.l.b16 %v3741
    %v4258 = vunpack.c.l.b16 %v3742
    %v4259 = vunpack.c.l.b16 %v3743
    %v4260 = vunpack.c.l.b16 %v3744
    %v4261 = vunpack.c.l.b16 %v3745
    %v4262 = vunpack.c.l.b16 %v3746
    %v4263 = vunpack.c.l.b16 %v3747
    %v4264 = vunpack.c.l.b16 %v3748
    %v4265 = vunpack.c.l.b16 %v3749
    %v4266 = vunpack.c.l.b16 %v3750
    %v4267 = vunpack.c.l.b16 %v3751
    %v4268 = vunpack.c.l.b16 %v3752
    %v4269 = vunpack.c.l.b16 %v3753
    %v4270 = vunpack.c.l.b16 %v3754
    %v4271 = vunpack.c.l.b16 %v3755
    %v4272 = vunpack.c.l.b16 %v3756
    %v4273 = vunpack.c.l.b16 %v3757
    %v4274 = vunpack.c.l.b16 %v3758
    %v4275 = vunpack.c.l.b16 %v3759
    %v4276 = vunpack.c.l.b16 %v3760
    %v4277 = vunpack.c.l.b16 %v3761
    %v4278 = vunpack.c.l.b16 %v3762
    %v4279 = vunpack.c.l.b16 %v3763
    %v4280 = vunpack.c.l.b16 %v3764
    %v4281 = vunpack.c.l.b16 %v3765
    %v4282 = vunpack.c.l.b16 %v3766
    %v4283 = vunpack.c.l.b16 %v3767
    %v4284 = vunpack.c.l.b16 %v3768
    %v4285 = vunpack.c.l.b16 %v3769
    %v4286 = vunpack.c.l.b16 %v3770
    %v4287 = vunpack.c.l.b16 %v3771
    %v4288 = vunpack.c.l.b16 %v3772
    %v4289 = vunpack.c.l.b16 %v3773
    %v4290 = vunpack.c.l.b16 %v3774
    %v4291 = vunpack.c.l.b16 %v3775
    %v4292 = vunpack.c.l.b16 %v3776
    %v4293 = vunpack.c.l.b16 %v3777
    %v4294 = vunpack.c.l.b16 %v3778
    %v4295 = vunpack.c.l.b16 %v3779
    %v4296 = vunpack.c.l.b16 %v3780
    %v4297 = vunpack.c.l.b16 %v3781
    %v4298 = vunpack.c.l.b16 %v3782
    %v4299 = vunpack.c.l.b16 %v3783
    %v4300 = vunpack.c.l.b16 %v3784
    %v4301 = vunpack.c.l.b16 %v3785
    %v4302 = vunpack.c.l.b16 %v3786
    %v4303 = vunpack.c.l.b16 %v3787
    %v4304 = vunpack.c.l.b16 %v3788
    %v4305 = vunpack.c.l.b16 %v3789
    %v4306 = vunpack.c.l.b16 %v3790
    %v4307 = vunpack.c.l.b16 %v3791
    %v4308 = vunpack.c.l.b16 %v3792
    %v4309 = vunpack.c.l.b16 %v3793
    %v4310 = vunpack.c.l.b16 %v3794
    %v4311 = vunpack.c.l.b16 %v3795
    %v4312 = vunpack.c.l.b16 %v3796
    %v4313 = vunpack.c.l.b16 %v3797
    %v4314 = vunpack.c.l.b16 %v3798
    %v4315 = vunpack.c.l.b16 %v3799
    %v4316 = vunpack.c.l.b16 %v3800
    %v4317 = vunpack.c.l.b16 %v3801
    %v4318 = vunpack.c.l.b16 %v3802
    %v4319 = vunpack.c.l.b16 %v3803
    %v4320 = vunpack.c.l.b16 %v3804
    %v4321 = vunpack.c.l.b16 %v3805
    %v4322 = vunpack.c.l.b16 %v3806
    %v4323 = vunpack.c.l.b16 %v3807
    %v4324 = vunpack.c.l.b16 %v3808
    %v4325 = vunpack.c.l.b16 %v3809
    %v4326 = vunpack.c.l.b16 %v3810
    %v4327 = vunpack.c.l.b16 %v3811
    %v4328 = vunpack.c.l.b16 %v3812
    %v4329 = vunpack.c.l.b16 %v3813
    %v4330 = vunpack.c.l.b16 %v3814
    %v4331 = vunpack.c.l.b16 %v3815
    %v4332 = vunpack.c.l.b16 %v3816
    %v4333 = vunpack.c.l.b16 %v3817
    %v4334 = vunpack.c.l.b16 %v3818
    %v4335 = vunpack.c.l.b16 %v3819
    %v4336 = vunpack.c.l.b16 %v3820
    %v4337 = vunpack.c.l.b16 %v3821
    %v4338 = vunpack.c.l.b16 %v3822
    %v4339 = vunpack.c.l.b16 %v3823
    %v4340 = vunpack.c.l.b16 %v3824
    %v4341 = vunpack.c.l.b16 %v3825
    %v4342 = vunpack.c.l.b16 %v3826
    %v4343 = vunpack.c.l.b16 %v3827
    %v4344 = vunpack.c.l.b16 %v3828
    %v4345 = vunpack.c.l.b16 %v3829
    %v4346 = vunpack.c.l.b16 %v3830
    %v4347 = vunpack.c.l.b16 %v3831
    %v4348 = vunpack.c.l.b16 %v3832
    %v4349 = vunpack.c.l.b16 %v3833
    %v4350 = vunpack.c.l.b16 %v3834
    %v4351 = vunpack.c.l.b16 %v3835
    %v4352 = vunpack.c.l.b16 %v3836
    %v4353 = vunpack.c.l.b16 %v3837
    %v4354 = vunpack.c.l.b16 %v3838
    %v4355 = vunpack.c.l.b16 %v3839
    %v4356 = vunpack.c.l.b16 %v3840
    %v4357 = vunpack.c.l.b16 %v3841
    %v4358 = vunpack.c.l.b16 %v3842
    %v4359 = vunpack.c.l.b16 %v3843
    %v4360 = vunpack.c.l.b16 %v3844
    %v4361 = vunpack.c.l.b16 %v3845
    %v4362 = vunpack.c.l.b16 %v3846
    %v4363 = vunpack.c.l.b16 %v3847
    %v4364 = vunpack.c.l.b16 %v3848
    %v4365 = vunpack.c.l.b16 %v3849
    %v4366 = vunpack.c.l.b16 %v3850
    %v4367 = vunpack.c.l.b16 %v3851
    %v4368 = vunpack.c.l.b16 %v3852
    %v4369 = vunpack.c.l.b16 %v3853
    %v4370 = vunpack.c.l.b16 %v3854
    %v4371 = vunpack.c.l.b16 %v3855
    %v4372 = vunpack.c.l.b16 %v3856
    %v4373 = vunpack.c.l.b16 %v3857
    %v4374 = vunpack.c.l.b16 %v3858
    %v4375 = vunpack.c.l.b16 %v3859
    %v4376 = vunpack.c.l.b16 %v3860
    %v4377 = vunpack.c.l.b16 %v3861
    %v4378 = vunpack.c.l.b16 %v3862
    %v4379 = vunpack.c.l.b16 %v3863
    %v4380 = vunpack.c.l.b16 %v3864
    %v4381 = vunpack.c.l.b16 %v3865
    %v4382 = vunpack.c.l.b16 %v3866
    %v4383 = vunpack.c.l.b16 %v3867
    %v4384 = vunpack.c.l.b16 %v3868
    %v4385 = vunpack.c.l.b16 %v3869
    %v4386 = vunpack.c.l.b16 %v3870
    %v4387 = vunpack.c.l.b16 %v3871
    %v4388 = vunpack.c.l.b16 %v3872
    %v4389 = vunpack.c.l.b16 %v3873
    %v4390 = vunpack.c.l.b16 %v3874
    %v4391 = vunpack.c.l.b16 %v3875
    %v4392 = vunpack.c.l.b16 %v3876
    %v4393 = vunpack.c.l.b16 %v3877
    %v4394 = vunpack.c.l.b16 %v3878
    %v4395 = vunpack.c.l.b16 %v3879
    %v4396 = vunpack.c.l.b16 %v3880
    %v4397 = vunpack.c.l.b16 %v3881
    %v4398 = vunpack.c.l.b16 %v3882
    %v4399 = vunpack.c.l.b16 %v3883
    %v4400 = vunpack.c.l.b16 %v3884
    %v4401 = vunpack.c.l.b16 %v3885
    %v4402 = vunpack.c.l.b16 %v3886
    %v4403 = vunpack.c.l.b16 %v3887
    %v4404 = vunpack.c.l.b16 %v3888
    %v4405 = vunpack.c.l.b16 %v3889
    %v4406 = vunpack.c.l.b16 %v3890
    %v4407 = vunpack.c.l.b16 %v3891
    %v4408 = vunpack.c.l.b16 %v3892
    %v4409 = vunpack.c.l.b16 %v3893
    %v4410 = vunpack.c.l.b16 %v3894
    %v4411 = vunpack.c.l.b16 %v3895
    %v4412 = vunpack.c.l.b16 %v3896
    %v4413 = vunpack.c.l.b16 %v3897
    %v4414 = vunpack.c.l.b16 %v3898
    %v4415 = vunpack.c.l.b16 %v3899
    %v4416 = vunpack.c.l.b16 %v3900
    %v4417 = vunpack.c.l.b16 %v3901
    %v4418 = vunpack.c.l.b16 %v3902
    %v4419 = vunpack.c.l.b16 %v3903
    %v4420 = vunpack.c.l.b16 %v3904
    %v4421 = vunpack.c.l.b16 %v3905
    %v4422 = vunpack.c.l.b16 %v3906
    %v4423 = vunpack.c.l.b16 %v3907
    %v4424 = vunpack.c.l.b16 %v3908
    %v4425 = vunpack.c.l.b16 %v3909
    %v4426 = vunpack.c.l.b16 %v3910
    %v4427 = vunpack.c.l.b16 %v3911
    %v4428 = vunpack.c.l.b16 %v3912
    %v4429 = vunpack.c.l.b16 %v3913
    %v4430 = vunpack.c.l.b16 %v3914
    %v4431 = vunpack.c.l.b16 %v3915
    %v4432 = vunpack.c.l.b16 %v3916
    %v4433 = vunpack.c.l.b16 %v3917
    %v4434 = vunpack.c.l.b16 %v3918
    %v4435 = vunpack.c.l.b16 %v3919
    %v4436 = vunpack.c.l.b16 %v3920
    %v4437 = vunpack.c.l.b16 %v3921
    %v4438 = vunpack.c.l.b16 %v3922
    %v4439 = vunpack.c.l.b16 %v3923
    %v4440 = vunpack.c.l.b16 %v3924
    %v4441 = vunpack.c.l.b16 %v3925
    %v4442 = vunpack.c.l.b16 %v3926
    %v4443 = vunpack.c.l.b16 %v3927
    %v4444 = vunpack.c.l.b16 %v3928
    %v4445 = vunpack.c.l.b16 %v3929
    %v4446 = vpack.c.b16 %v4191, %v4190
    %v4447 = vpack.c.b16 %v4193, %v4192
    %v4448 = vpack.c.b16 %v4195, %v4194
    %v4449 = vpack.c.b16 %v4197, %v4196
    %v4450 = vpack.c.b16 %v4199, %v4198
    %v4451 = vpack.c.b16 %v4201, %v4200
    %v4452 = vpack.c.b16 %v4203, %v4202
    %v4453 = vpack.c.b16 %v4205, %v4204
    %v4454 = vpack.c.b16 %v4207, %v4206
    %v4455 = vpack.c.b16 %v4209, %v4208
    %v4456 = vpack.c.b16 %v4211, %v4210
    %v4457 = vpack.c.b16 %v4213, %v4212
    %v4458 = vpack.c.b16 %v4215, %v4214
    %v4459 = vpack.c.b16 %v4217, %v4216
    %v4460 = vpack.c.b16 %v4219, %v4218
    %v4461 = vpack.c.b16 %v4221, %v4220
    %v4462 = vpack.c.b16 %v4223, %v4222
    %v4463 = vpack.c.b16 %v4225, %v4224
    %v4464 = vpack.c.b16 %v4227, %v4226
    %v4465 = vpack.c.b16 %v4229, %v4228
    %v4466 = vpack.c.b16 %v4231, %v4230
    %v4467 = vpack.c.b16 %v4233, %v4232
    %v4468 = vpack.c.b16 %v4235, %v4234
    %v4469 = vpack.c.b16 %v4237, %v4236
    %v4470 = vpack.c.b16 %v4239, %v4238
    %v4471 = vpack.c.b16 %v4241, %v4240
    %v4472 = vpack.c.b16 %v4243, %v4242
    %v4473 = vpack.c.b16 %v4245, %v4244
    %v4474 = vpack.c.b16 %v4247, %v4246
    %v4475 = vpack.c.b16 %v4249, %v4248
    %v4476 = vpack.c.b16 %v4251, %v4250
    %v4477 = vpack.c.b16 %v4253, %v4252
    %v4478 = vpack.c.b16 %v4255, %v4254
    %v4479 = vpack.c.b16 %v4257, %v4256
    %v4480 = vpack.c.b16 %v4259, %v4258
    %v4481 = vpack.c.b16 %v4261, %v4260
    %v4482 = vpack.c.b16 %v4263, %v4262
    %v4483 = vpack.c.b16 %v4265, %v4264
    %v4484 = vpack.c.b16 %v4267, %v4266
    %v4485 = vpack.c.b16 %v4269, %v4268
    %v4486 = vpack.c.b16 %v4271, %v4270
    %v4487 = vpack.c.b16 %v4273, %v4272
    %v4488 = vpack.c.b16 %v4275, %v4274
    %v4489 = vpack.c.b16 %v4277, %v4276
    %v4490 = vpack.c.b16 %v4279, %v4278
    %v4491 = vpack.c.b16 %v4281, %v4280
    %v4492 = vpack.c.b16 %v4283, %v4282
    %v4493 = vpack.c.b16 %v4285, %v4284
    %v4494 = vpack.c.b16 %v4287, %v4286
    %v4495 = vpack.c.b16 %v4289, %v4288
    %v4496 = vpack.c.b16 %v4291, %v4290
    %v4497 = vpack.c.b16 %v4293, %v4292
    %v4498 = vpack.c.b16 %v4295, %v4294
    %v4499 = vpack.c.b16 %v4297, %v4296
    %v4500 = vpack.c.b16 %v4299, %v4298
    %v4501 = vpack.c.b16 %v4301, %v4300
    %v4502 = vpack.c.b16 %v4303, %v4302
    %v4503 = vpack.c.b16 %v4305, %v4304
    %v4504 = vpack.c.b16 %v4307, %v4306
    %v4505 = vpack.c.b16 %v4309, %v4308
    %v4506 = vpack.c.b16 %v4311, %v4310
    %v4507 = vpack.c.b16 %v4313, %v4312
    %v4508 = vpack.c.b16 %v4315, %v4314
    %v4509 = vpack.c.b16 %v4317, %v4316
    %v4510 = vpack.c.b16 %v4319, %v4318
    %v4511 = vpack.c.b16 %v4321, %v4320
    %v4512 = vpack.c.b16 %v4323, %v4322
    %v4513 = vpack.c.b16 %v4325, %v4324
    %v4514 = vpack.c.b16 %v4327, %v4326
    %v4515 = vpack.c.b16 %v4329, %v4328
    %v4516 = vpack.c.b16 %v4331, %v4330
    %v4517 = vpack.c.b16 %v4333, %v4332
    %v4518 = vpack.c.b16 %v4335, %v4334
    %v4519 = vpack.c.b16 %v4337, %v4336
    %v4520 = vpack.c.b16 %v4339, %v4338
    %v4521 = vpack.c.b16 %v4341, %v4340
    %v4522 = vpack.c.b16 %v4343, %v4342
    %v4523 = vpack.c.b16 %v4345, %v4344
    %v4524 = vpack.c.b16 %v4347, %v4346
    %v4525 = vpack.c.b16 %v4349, %v4348
    %v4526 = vpack.c.b16 %v4351, %v4350
    %v4527 = vpack.c.b16 %v4353, %v4352
    %v4528 = vpack.c.b16 %v4355, %v4354
    %v4529 = vpack.c.b16 %v4357, %v4356
    %v4530 = vpack.c.b16 %v4359, %v4358
    %v4531 = vpack.c.b16 %v4361, %v4360
    %v4532 = vpack.c.b16 %v4363, %v4362
    %v4533 = vpack.c.b16 %v4365, %v4364
    %v4534 = vpack.c.b16 %v4367, %v4366
    %v4535 = vpack.c.b16 %v4369, %v4368
    %v4536 = vpack.c.b16 %v4371, %v4370
    %v4537 = vpack.c.b16 %v4373, %v4372
    %v4538 = vpack.c.b16 %v4375, %v4374
    %v4539 = vpack.c.b16 %v4377, %v4376
    %v4540 = vpack.c.b16 %v4379, %v4378
    %v4541 = vpack.c.b16 %v4381, %v4380
    %v4542 = vpack.c.b16 %v4383, %v4382
    %v4543 = vpack.c.b16 %v4385, %v4384
    %v4544 = vpack.c.b16 %v4387, %v4386
    %v4545 = vpack.c.b16 %v4389, %v4388
    %v4546 = vpack.c.b16 %v4391, %v4390
    %v4547 = vpack.c.b16 %v4393, %v4392
    %v4548 = vpack.c.b16 %v4395, %v4394
    %v4549 = vpack.c.b16 %v4397, %v4396
    %v4550 = vpack.c.b16 %v4399, %v4398
    %v4551 = vpack.c.b16 %v4401, %v4400
    %v4552 = vpack.c.b16 %v4403, %v4402
    %v4553 = vpack.c.b16 %v4405, %v4404
    %v4554 = vpack.c.b16 %v4407, %v4406
    %v4555 = vpack.c.b16 %v4409, %v4408
    %v4556 = vpack.c.b16 %v4411, %v4410
    %v4557 = vpack.c.b16 %v4413, %v4412
    %v4558 = vpack.c.b16 %v4415, %v4414
    %v4559 = vpack.c.b16 %v4417, %v4416
    %v4560 = vpack.c.b16 %v4419, %v4418
    %v4561 = vpack.c.b16 %v4421, %v4420
    %v4562 = vpack.c.b16 %v4423, %v4422
    %v4563 = vpack.c.b16 %v4425, %v4424
    %v4564 = vpack.c.b16 %v4427, %v4426
    %v4565 = vpack.c.b16 %v4429, %v4428
    %v4566 = vpack.c.b16 %v4431, %v4430
    %v4567 = vpack.c.b16 %v4433, %v4432
    %v4568 = vpack.c.b16 %v4435, %v4434
    %v4569 = vpack.c.b16 %v4437, %v4436
    %v4570 = vpack.c.b16 %v4439, %v4438
    %v4571 = vpack.c.b16 %v4441, %v4440
    %v4572 = vpack.c.b16 %v4443, %v4442
    %v4573 = vpack.c.b16 %v4445, %v4444
    %4702 = vmatprep.subr.bf16.mxu0 0
    %4703 = vmatpush1.bf16.msra.mxu0 %v4446
    %4704 = vmatprep.subr.bf16.mxu0 0
    %4705 = vmatpush1.bf16.msra.mxu0 %v4447
    %4706 = vmatprep.subr.bf16.mxu0 0
    %4707 = vmatpush1.bf16.msra.mxu0 %v4448
    %4708 = vmatprep.subr.bf16.mxu0 0
    %4709 = vmatpush1.bf16.msra.mxu0 %v4449
    %4710 = vmatprep.subr.bf16.mxu0 0
    %4711 = vmatpush1.bf16.msra.mxu0 %v4450
    %4712 = vmatprep.subr.bf16.mxu0 0
    %4713 = vmatpush1.bf16.msra.mxu0 %v4451
    %4714 = vmatprep.subr.bf16.mxu0 0
    %4715 = vmatpush1.bf16.msra.mxu0 %v4452
    %4716 = vmatprep.subr.bf16.mxu0 0
    %4717 = vmatpush1.bf16.msra.mxu0 %v4453
    %4718 = vmatprep.subr.bf16.mxu0 0
    %4719 = vmatpush1.bf16.msra.mxu0 %v4454
    %4720 = vmatprep.subr.bf16.mxu0 0
    %4721 = vmatpush1.bf16.msra.mxu0 %v4455
    %4722 = vmatprep.subr.bf16.mxu0 0
    %4723 = vmatpush1.bf16.msra.mxu0 %v4456
    %4724 = vmatprep.subr.bf16.mxu0 0
    %4725 = vmatpush1.bf16.msra.mxu0 %v4457
    %4726 = vmatprep.subr.bf16.mxu0 0
    %4727 = vmatpush1.bf16.msra.mxu0 %v4458
    %4728 = vmatprep.subr.bf16.mxu0 0
    %4729 = vmatpush1.bf16.msra.mxu0 %v4459
    %4730 = vmatprep.subr.bf16.mxu0 0
    %4731 = vmatpush1.bf16.msra.mxu0 %v4460
    %4732 = vmatprep.subr.bf16.mxu0 0
    %4733 = vmatpush1.bf16.msra.mxu0 %v4461
    %4734 = vmatprep.mubr.bf16.mxu0 %v3659
    %4735 = vmatmul.mubr.bf16.gmra.mrb[0].mxu0 %v3658
    %v4736 = vpop.f32.mrb[0].mxu0
    %v4737 = vadd.f32 %v3933, %v4736
    %v4738 = vpop.f32.mrb[0].mxu0
    %v4739 = vpop.f32.mrb[0].mxu0
    %v4740 = vadd.f32 %v3933, %v4739
    %v4741 = vpop.f32.mrb[0].mxu0
    %4742 = vdwg.mxu0
    %4743 = vmatprep.subr.bf16.mxu0 0
    %4744 = vmatpush1.bf16.msra.mxu0 %v4462
    %4745 = vmatprep.subr.bf16.mxu0 0
    %4746 = vmatpush1.bf16.msra.mxu0 %v4463
    %4747 = vmatprep.subr.bf16.mxu0 0
    %4748 = vmatpush1.bf16.msra.mxu0 %v4464
    %4749 = vmatprep.subr.bf16.mxu0 0
    %4750 = vmatpush1.bf16.msra.mxu0 %v4465
    %4751 = vmatprep.subr.bf16.mxu0 0
    %4752 = vmatpush1.bf16.msra.mxu0 %v4466
    %4753 = vmatprep.subr.bf16.mxu0 0
    %4754 = vmatpush1.bf16.msra.mxu0 %v4467
    %4755 = vmatprep.subr.bf16.mxu0 0
    %4756 = vmatpush1.bf16.msra.mxu0 %v4468
    %4757 = vmatprep.subr.bf16.mxu0 0
    %4758 = vmatpush1.bf16.msra.mxu0 %v4469
    %4759 = vmatprep.subr.bf16.mxu0 0
    %4760 = vmatpush1.bf16.msra.mxu0 %v4470
    %4761 = vmatprep.subr.bf16.mxu0 0
    %4762 = vmatpush1.bf16.msra.mxu0 %v4471
    %4763 = vmatprep.subr.bf16.mxu0 0
    %4764 = vmatpush1.bf16.msra.mxu0 %v4472
    %4765 = vmatprep.subr.bf16.mxu0 0
    %4766 = vmatpush1.bf16.msra.mxu0 %v4473
    %4767 = vmatprep.subr.bf16.mxu0 0
    %4768 = vmatpush1.bf16.msra.mxu0 %v4474
    %4769 = vmatprep.subr.bf16.mxu0 0
    %4770 = vmatpush1.bf16.msra.mxu0 %v4475
    %4771 = vmatprep.subr.bf16.mxu0 0
    %4772 = vmatpush1.bf16.msra.mxu0 %v4476
    %4773 = vmatprep.subr.bf16.mxu0 0
    %4774 = vmatpush1.bf16.msra.mxu0 %v4477
    %4775 = vmatprep.mubr.bf16.mxu0 %v3661
    %4776 = vmatmul.mubr.bf16.gmra.mrb[0].mxu0 %v3660
    %v4777 = vpop.f32.mrb[0].mxu0
    %v4778 = vadd.f32 %v4737, %v4777
    %v4779 = vpop.f32.mrb[0].mxu0
    %v4780 = vpop.f32.mrb[0].mxu0
    %v4781 = vadd.f32 %v4740, %v4780
    %v4782 = vpop.f32.mrb[0].mxu0
    %4783 = vdwg.mxu0
    %4784 = vmatprep.subr.bf16.mxu0 0
    %4785 = vmatpush1.bf16.msra.mxu0 %v4478
    %4786 = vmatprep.subr.bf16.mxu0 0
    %4787 = vmatpush1.bf16.msra.mxu0 %v4479
    %4788 = vmatprep.subr.bf16.mxu0 0
    %4789 = vmatpush1.bf16.msra.mxu0 %v4480
    %4790 = vmatprep.subr.bf16.mxu0 0
    %4791 = vmatpush1.bf16.msra.mxu0 %v4481
    %4792 = vmatprep.subr.bf16.mxu0 0
    %4793 = vmatpush1.bf16.msra.mxu0 %v4482
    %4794 = vmatprep.subr.bf16.mxu0 0
    %4795 = vmatpush1.bf16.msra.mxu0 %v4483
    %4796 = vmatprep.subr.bf16.mxu0 0
    %4797 = vmatpush1.bf16.msra.mxu0 %v4484
    %4798 = vmatprep.subr.bf16.mxu0 0
    %4799 = vmatpush1.bf16.msra.mxu0 %v4485
    %4800 = vmatprep.subr.bf16.mxu0 0
    %4801 = vmatpush1.bf16.msra.mxu0 %v4486
    %4802 = vmatprep.subr.bf16.mxu0 0
    %4803 = vmatpush1.bf16.msra.mxu0 %v4487
    %4804 = vmatprep.subr.bf16.mxu0 0
    %4805 = vmatpush1.bf16.msra.mxu0 %v4488
    %4806 = vmatprep.subr.bf16.mxu0 0
    %4807 = vmatpush1.bf16.msra.mxu0 %v4489
    %4808 = vmatprep.subr.bf16.mxu0 0
    %4809 = vmatpush1.bf16.msra.mxu0 %v4490
    %4810 = vmatprep.subr.bf16.mxu0 0
    %4811 = vmatpush1.bf16.msra.mxu0 %v4491
    %4812 = vmatprep.subr.bf16.mxu0 0
    %4813 = vmatpush1.bf16.msra.mxu0 %v4492
    %4814 = vmatprep.subr.bf16.mxu0 0
    %4815 = vmatpush1.bf16.msra.mxu0 %v4493
    %4816 = vmatprep.mubr.bf16.mxu0 %v3663
    %4817 = vmatmul.mubr.bf16.gmra.mrb[0].mxu0 %v3662
    %v4818 = vpop.f32.mrb[0].mxu0
    %v4819 = vadd.f32 %v4778, %v4818
    %v4820 = vpop.f32.mrb[0].mxu0
    %v4821 = vpop.f32.mrb[0].mxu0
    %v4822 = vadd.f32 %v4781, %v4821
    %v4823 = vpop.f32.mrb[0].mxu0
    %4824 = vdwg.mxu0
    %4825 = vmatprep.subr.bf16.mxu0 0
    %4826 = vmatpush1.bf16.msra.mxu0 %v4494
    %4827 = vmatprep.subr.bf16.mxu0 0
    %4828 = vmatpush1.bf16.msra.mxu0 %v4495
    %4829 = vmatprep.subr.bf16.mxu0 0
    %4830 = vmatpush1.bf16.msra.mxu0 %v4496
    %4831 = vmatprep.subr.bf16.mxu0 0
    %4832 = vmatpush1.bf16.msra.mxu0 %v4497
    %4833 = vmatprep.subr.bf16.mxu0 0
    %4834 = vmatpush1.bf16.msra.mxu0 %v4498
    %4835 = vmatprep.subr.bf16.mxu0 0
    %4836 = vmatpush1.bf16.msra.mxu0 %v4499
    %4837 = vmatprep.subr.bf16.mxu0 0
    %4838 = vmatpush1.bf16.msra.mxu0 %v4500
    %4839 = vmatprep.subr.bf16.mxu0 0
    %4840 = vmatpush1.bf16.msra.mxu0 %v4501
    %4841 = vmatprep.subr.bf16.mxu0 0
    %4842 = vmatpush1.bf16.msra.mxu0 %v4502
    %4843 = vmatprep.subr.bf16.mxu0 0
    %4844 = vmatpush1.bf16.msra.mxu0 %v4503
    %4845 = vmatprep.subr.bf16.mxu0 0
    %4846 = vmatpush1.bf16.msra.mxu0 %v4504
    %4847 = vmatprep.subr.bf16.mxu0 0
    %4848 = vmatpush1.bf16.msra.mxu0 %v4505
    %4849 = vmatprep.subr.bf16.mxu0 0
    %4850 = vmatpush1.bf16.msra.mxu0 %v4506
    %4851 = vmatprep.subr.bf16.mxu0 0
    %4852 = vmatpush1.bf16.msra.mxu0 %v4507
    %4853 = vmatprep.subr.bf16.mxu0 0
    %4854 = vmatpush1.bf16.msra.mxu0 %v4508
    %4855 = vmatprep.subr.bf16.mxu0 0
    %4856 = vmatpush1.bf16.msra.mxu0 %v4509
    %4857 = vmatprep.mubr.bf16.mxu0 %v3665
    %4858 = vmatmul.mubr.bf16.gmra.mrb[0].mxu0 %v3664
    %v4859 = vpop.f32.mrb[0].mxu0
    %v4860 = vadd.f32 %v4819, %v4859
    %v4861 = vpop.f32.mrb[0].mxu0
    %v4862 = vpop.f32.mrb[0].mxu0
    %v4863 = vadd.f32 %v4822, %v4862
    %v4864 = vpop.f32.mrb[0].mxu0
    %4865 = vdwg.mxu0
    %4866 = vmatprep.subr.bf16.mxu0 0
    %4867 = vmatpush1.bf16.msra.mxu0 %v4510
    %4868 = vmatprep.subr.bf16.mxu0 0
    %4869 = vmatpush1.bf16.msra.mxu0 %v4511
    %4870 = vmatprep.subr.bf16.mxu0 0
    %4871 = vmatpush1.bf16.msra.mxu0 %v4512
    %4872 = vmatprep.subr.bf16.mxu0 0
    %4873 = vmatpush1.bf16.msra.mxu0 %v4513
    %4874 = vmatprep.subr.bf16.mxu0 0
    %4875 = vmatpush1.bf16.msra.mxu0 %v4514
    %4876 = vmatprep.subr.bf16.mxu0 0
    %4877 = vmatpush1.bf16.msra.mxu0 %v4515
    %4878 = vmatprep.subr.bf16.mxu0 0
    %4879 = vmatpush1.bf16.msra.mxu0 %v4516
    %4880 = vmatprep.subr.bf16.mxu0 0
    %4881 = vmatpush1.bf16.msra.mxu0 %v4517
    %4882 = vmatprep.subr.bf16.mxu0 0
    %4883 = vmatpush1.bf16.msra.mxu0 %v4518
    %4884 = vmatprep.subr.bf16.mxu0 0
    %4885 = vmatpush1.bf16.msra.mxu0 %v4519
    %4886 = vmatprep.subr.bf16.mxu0 0
    %4887 = vmatpush1.bf16.msra.mxu0 %v4520
    %4888 = vmatprep.subr.bf16.mxu0 0
    %4889 = vmatpush1.bf16.msra.mxu0 %v4521
    %4890 = vmatprep.subr.bf16.mxu0 0
    %4891 = vmatpush1.bf16.msra.mxu0 %v4522
    %4892 = vmatprep.subr.bf16.mxu0 0
    %4893 = vmatpush1.bf16.msra.mxu0 %v4523
    %4894 = vmatprep.subr.bf16.mxu0 0
    %4895 = vmatpush1.bf16.msra.mxu0 %v4524
    %4896 = vmatprep.subr.bf16.mxu0 0
    %4897 = vmatpush1.bf16.msra.mxu0 %v4525
    %4898 = vmatprep.mubr.bf16.mxu0 %v3667
    %4899 = vmatmul.mubr.bf16.gmra.mrb[0].mxu0 %v3666
    %v4900 = vpop.f32.mrb[0].mxu0
    %v4901 = vadd.f32 %v4860, %v4900
    %v4902 = vpop.f32.mrb[0].mxu0
    %v4903 = vpop.f32.mrb[0].mxu0
    %v4904 = vadd.f32 %v4863, %v4903
    %v4905 = vpop.f32.mrb[0].mxu0
    %4906 = vdwg.mxu0
    %4907 = vmatprep.subr.bf16.mxu0 0
    %4908 = vmatpush1.bf16.msra.mxu0 %v4526
    %4909 = vmatprep.subr.bf16.mxu0 0
    %4910 = vmatpush1.bf16.msra.mxu0 %v4527
    %4911 = vmatprep.subr.bf16.mxu0 0
    %4912 = vmatpush1.bf16.msra.mxu0 %v4528
    %4913 = vmatprep.subr.bf16.mxu0 0
    %4914 = vmatpush1.bf16.msra.mxu0 %v4529
    %4915 = vmatprep.subr.bf16.mxu0 0
    %4916 = vmatpush1.bf16.msra.mxu0 %v4530
    %4917 = vmatprep.subr.bf16.mxu0 0
    %4918 = vmatpush1.bf16.msra.mxu0 %v4531
    %4919 = vmatprep.subr.bf16.mxu0 0
    %4920 = vmatpush1.bf16.msra.mxu0 %v4532
    %4921 = vmatprep.subr.bf16.mxu0 0
    %4922 = vmatpush1.bf16.msra.mxu0 %v4533
    %4923 = vmatprep.subr.bf16.mxu0 0
    %4924 = vmatpush1.bf16.msra.mxu0 %v4534
    %4925 = vmatprep.subr.bf16.mxu0 0
    %4926 = vmatpush1.bf16.msra.mxu0 %v4535
    %4927 = vmatprep.subr.bf16.mxu0 0
    %4928 = vmatpush1.bf16.msra.mxu0 %v4536
    %4929 = vmatprep.subr.bf16.mxu0 0
    %4930 = vmatpush1.bf16.msra.mxu0 %v4537
    %4931 = vmatprep.subr.bf16.mxu0 0
    %4932 = vmatpush1.bf16.msra.mxu0 %v4538
    %4933 = vmatprep.subr.bf16.mxu0 0
    %4934 = vmatpush1.bf16.msra.mxu0 %v4539
    %4935 = vmatprep.subr.bf16.mxu0 0
    %4936 = vmatpush1.bf16.msra.mxu0 %v4540
    %4937 = vmatprep.subr.bf16.mxu0 0
    %4938 = vmatpush1.bf16.msra.mxu0 %v4541
    %4939 = vmatprep.mubr.bf16.mxu0 %v3669
    %4940 = vmatmul.mubr.bf16.gmra.mrb[0].mxu0 %v3668
    %v4941 = vpop.f32.mrb[0].mxu0
    %v4942 = vadd.f32 %v4901, %v4941
    %v4943 = vpop.f32.mrb[0].mxu0
    %v4944 = vpop.f32.mrb[0].mxu0
    %v4945 = vadd.f32 %v4904, %v4944
    %v4946 = vpop.f32.mrb[0].mxu0
    %4947 = vdwg.mxu0
    %4948 = vmatprep.subr.bf16.mxu0 0
    %4949 = vmatpush1.bf16.msra.mxu0 %v4542
    %4950 = vmatprep.subr.bf16.mxu0 0
    %4951 = vmatpush1.bf16.msra.mxu0 %v4543
    %4952 = vmatprep.subr.bf16.mxu0 0
    %4953 = vmatpush1.bf16.msra.mxu0 %v4544
    %4954 = vmatprep.subr.bf16.mxu0 0
    %4955 = vmatpush1.bf16.msra.mxu0 %v4545
    %4956 = vmatprep.subr.bf16.mxu0 0
    %4957 = vmatpush1.bf16.msra.mxu0 %v4546
    %4958 = vmatprep.subr.bf16.mxu0 0
    %4959 = vmatpush1.bf16.msra.mxu0 %v4547
    %4960 = vmatprep.subr.bf16.mxu0 0
    %4961 = vmatpush1.bf16.msra.mxu0 %v4548
    %4962 = vmatprep.subr.bf16.mxu0 0
    %4963 = vmatpush1.bf16.msra.mxu0 %v4549
    %4964 = vmatprep.subr.bf16.mxu0 0
    %4965 = vmatpush1.bf16.msra.mxu0 %v4550
    %4966 = vmatprep.subr.bf16.mxu0 0
    %4967 = vmatpush1.bf16.msra.mxu0 %v4551
    %4968 = vmatprep.subr.bf16.mxu0 0
    %4969 = vmatpush1.bf16.msra.mxu0 %v4552
    %4970 = vmatprep.subr.bf16.mxu0 0
    %4971 = vmatpush1.bf16.msra.mxu0 %v4553
    %4972 = vmatprep.subr.bf16.mxu0 0
    %4973 = vmatpush1.bf16.msra.mxu0 %v4554
    %4974 = vmatprep.subr.bf16.mxu0 0
    %4975 = vmatpush1.bf16.msra.mxu0 %v4555
    %4976 = vmatprep.subr.bf16.mxu0 0
    %4977 = vmatpush1.bf16.msra.mxu0 %v4556
    %4978 = vmatprep.subr.bf16.mxu0 0
    %4979 = vmatpush1.bf16.msra.mxu0 %v4557
    %4980 = vmatprep.mubr.bf16.mxu0 %v3671
    %4981 = vmatmul.mubr.bf16.gmra.mrb[0].mxu0 %v3670
    %v4982 = vpop.f32.mrb[0].mxu0
    %v4983 = vadd.f32 %v4942, %v4982
    %v4984 = vpop.f32.mrb[0].mxu0
    %v4985 = vpop.f32.mrb[0].mxu0
    %v4986 = vadd.f32 %v4945, %v4985
    %v4987 = vpop.f32.mrb[0].mxu0
    %4988 = vdwg.mxu0
    %4989 = vmatprep.subr.bf16.mxu0 0
    %4990 = vmatpush1.bf16.msra.mxu0 %v4558
    %4991 = vmatprep.subr.bf16.mxu0 0
    %4992 = vmatpush1.bf16.msra.mxu0 %v4559
    %4993 = vmatprep.subr.bf16.mxu0 0
    %4994 = vmatpush1.bf16.msra.mxu0 %v4560
    %4995 = vmatprep.subr.bf16.mxu0 0
    %4996 = vmatpush1.bf16.msra.mxu0 %v4561
    %4997 = vmatprep.subr.bf16.mxu0 0
    %4998 = vmatpush1.bf16.msra.mxu0 %v4562
    %4999 = vmatprep.subr.bf16.mxu0 0
    %5000 = vmatpush1.bf16.msra.mxu0 %v4563
    %5001 = vmatprep.subr.bf16.mxu0 0
    %5002 = vmatpush1.bf16.msra.mxu0 %v4564
    %5003 = vmatprep.subr.bf16.mxu0 0
    %5004 = vmatpush1.bf16.msra.mxu0 %v4565
    %5005 = vmatprep.subr.bf16.mxu0 0
    %5006 = vmatpush1.bf16.msra.mxu0 %v4566
    %5007 = vmatprep.subr.bf16.mxu0 0
    %5008 = vmatpush1.bf16.msra.mxu0 %v4567
    %5009 = vmatprep.subr.bf16.mxu0 0
    %5010 = vmatpush1.bf16.msra.mxu0 %v4568
    %5011 = vmatprep.subr.bf16.mxu0 0
    %5012 = vmatpush1.bf16.msra.mxu0 %v4569
    %5013 = vmatprep.subr.bf16.mxu0 0
    %5014 = vmatpush1.bf16.msra.mxu0 %v4570
    %5015 = vmatprep.subr.bf16.mxu0 0
    %5016 = vmatpush1.bf16.msra.mxu0 %v4571
    %5017 = vmatprep.subr.bf16.mxu0 0
    %5018 = vmatpush1.bf16.msra.mxu0 %v4572
    %5019 = vmatprep.subr.bf16.mxu0 0
    %5020 = vmatpush1.bf16.msra.mxu0 %v4573
    %5021 = vmatprep.mubr.bf16.mxu0 %v3673
    %5022 = vmatmul.mubr.bf16.gmra.mrb[0].mxu0 %v3672
    %v5023 = vpop.f32.mrb[0].mxu0
    %v5024 = vadd.f32 %v4983, %v5023
    %v5025 = vpop.f32.mrb[0].mxu0
    %v5026 = vpop.f32.mrb[0].mxu0
    %v5027 = vadd.f32 %v4986, %v5026
    %v5028 = vpop.f32.mrb[0].mxu0
    %5029 = vdwg.mxu0
    %v5030 = vadd.f32 %v3000, %v5024
    %v5031 = vadd.f32 %v3001, %v5027
    %v5032 = vsel %vm2879, %v5030, 0.0
    %5033 = vadd.xlane.f32.xlu0 %v5032
    %v5034 = vpop.xlane.xlu0 %5033
    %v5035 = vsel %vm2879, %v5031, 0.0
    %5036 = vadd.xlane.f32.xlu0 %v5035
    %v5037 = vpop.xlane.xlu0 %5036
    %v5038 = vmul.f32 %v5034, %v2969
    %v5039 = vmul.f32 %v5037, %v2969
    %v5040 = vsub.f32 %v5030, %v5038
    %v5041 = vsub.f32 %v5031, %v5039
    %v5042 = vmul.f32 %v5040, %v5040
    %v5043 = vmul.f32 %v5041, %v5041
    %v5044 = vsel %vm2879, %v5042, 0.0
    %5045 = vadd.xlane.f32.xlu0 %v5044
    %v5046 = vpop.xlane.xlu0 %5045
    %v5047 = vsel %vm2879, %v5043, 0.0
    %5048 = vadd.xlane.f32.xlu0 %v5047
    %v5049 = vpop.xlane.xlu0 %5048
    %v5050 = vmul.f32 %v5046, %v2969
    %v5051 = vmul.f32 %v5049, %v2969
    %v5052 = vadd.f32 %v5050, 1e-05
    %v5053 = vadd.f32 %v5051, 1e-05
    %v5054 = vrsqrt.pop %v5052
    %v5055 = vrsqrt.pop %v5053
    %v5056 = vmul.f32 %v5040, %v5054
    %v5057 = vmul.f32 %v5041, %v5055
    %v5058 = vlaneseq
    %v5059 = vshrl.u32 %v5058, 7
    %v5060 = vsub.s32 4, %v5059
    %v5061 = vrot.slane %v39, %v5060
    %v5062 = vmul.f32 %v5056, %v5061
    %v5063 = vmul.f32 %v5057, %v5061
    %v5064 = vlaneseq
    %v5065 = vshrl.u32 %v5064, 7
    %v5066 = vsub.s32 5, %v5065
    %v5067 = vrot.slane %v39, %v5066
    %v5068 = vadd.f32 %v5062, %v5067
    %v5069 = vadd.f32 %v5063, %v5067
    %v5070 = vsel %vm2879, %v5068, 0.0
    %v5071 = vrot.slane %v5070, 4
    %v5072 = vadd.f32 %v5070, %v5071
    %v5073 = vrot.slane %v5072, 2
    %v5074 = vadd.f32 %v5072, %v5073
    %v5075 = vrot.slane %v5074, 1
    %v5076 = vadd.f32 %v5074, %v5075
    %v5077 = vsel %vm2879, %v5069, 0.0
    %v5078 = vrot.slane %v5077, 4
    %v5079 = vadd.f32 %v5077, %v5078
    %v5080 = vrot.slane %v5079, 2
    %v5081 = vadd.f32 %v5079, %v5080
    %v5082 = vrot.slane %v5081, 1
    %v5083 = vadd.f32 %v5081, %v5082
    %v5084 = vrcp.pop 8.0
    %v5085 = vmul.f32 %v5076, %v5084
    %v5086 = vmul.f32 %v5083, %v5084
    %v5087 = vld [vmem:[%s8] sm:$0xff]
    %v5088 = vld [vmem:[%s8 + $0x8] sm:$0xff]
    %v5089 = vld [vmem:[%s8 + $0x10] sm:$0xff]
    %v5090 = vld [vmem:[%s8 + $0x18] sm:$0xff]
    %v5091 = vld [vmem:[%s9] sm:$0x1]
    %v5093 = vlaneseq
    %v5094 = vshrl.u32 %v5093, 7
    %v5095 = vsub.s32 0, %v5094
    %v5096 = vrot.slane %v5091, %v5095
    %vm5100 = vcmask 1041409
    %v5101 = vsel %vm5100, %v5086, %v5085
    %v5102 = vsel %vm2879, %v5101, 0
    %5104 = vmatprep.subr.mxu0 0.0
    %5105 = vmatpush1.msra.mxu0 %v5087
    %5106 = vmatprep.subr.mxu0 0.0
    %5107 = vmatpush1.msra.mxu0 %v5088
    %5108 = vmatprep.subr.mxu0 0.0
    %5109 = vmatpush1.msra.mxu0 %v5089
    %5110 = vmatprep.subr.mxu0 0.0
    %5111 = vmatpush1.msra.mxu0 %v5090
    %5112 = vmatprep.subr.mxu0 0.0
    %5113 = vmatpush1.msra.mxu0 0.0
    %5114 = vmatprep.subr.mxu0 0.0
    %5115 = vmatpush1.msra.mxu0 0.0
    %5116 = vmatprep.subr.mxu0 0.0
    %5117 = vmatpush1.msra.mxu0 0.0
    %5118 = vmatprep.subr.mxu0 0.0
    %5119 = vmatpush1.msra.mxu0 0.0
    %5120 = vmatprep.subr.mxu0 0.0
    %5121 = vmatpush1.msra.mxu0 0.0
    %5122 = vmatprep.subr.mxu0 0.0
    %5123 = vmatpush1.msra.mxu0 0.0
    %5124 = vmatprep.subr.mxu0 0.0
    %5125 = vmatpush1.msra.mxu0 0.0
    %5126 = vmatprep.subr.mxu0 0.0
    %5127 = vmatpush1.msra.mxu0 0.0
    %5128 = vmatprep.subr.mxu0 0.0
    %5129 = vmatpush1.msra.mxu0 0.0
    %5130 = vmatprep.subr.mxu0 0.0
    %5131 = vmatpush1.msra.mxu0 0.0
    %5132 = vmatprep.subr.mxu0 0.0
    %5133 = vmatpush1.msra.mxu0 0.0
    %5134 = vmatprep.subr.mxu0 0.0
    %5135 = vmatpush1.msra.mxu0 0.0
    %5136 = vmatprep.subr.mxu0 0.0
    %5137 = vmatpush1.msra.mxu0 0.0
    %5138 = vmatprep.subr.mxu0 0.0
    %5139 = vmatpush1.msra.mxu0 0.0
    %5140 = vmatprep.subr.mxu0 0.0
    %5141 = vmatpush1.msra.mxu0 0.0
    %5142 = vmatprep.subr.mxu0 0.0
    %5143 = vmatpush1.msra.mxu0 0.0
    %5144 = vmatprep.subr.mxu0 0.0
    %5145 = vmatpush1.msra.mxu0 0.0
    %5146 = vmatprep.subr.mxu0 0.0
    %5147 = vmatpush1.msra.mxu0 0.0
    %5148 = vmatprep.subr.mxu0 0.0
    %5149 = vmatpush1.msra.mxu0 0.0
    %5150 = vmatprep.subr.mxu0 0.0
    %5151 = vmatpush1.msra.mxu0 0.0
    %5152 = vmatprep.subr.mxu0 0.0
    %5153 = vmatpush1.msra.mxu0 0.0
    %5154 = vmatprep.subr.mxu0 0.0
    %5155 = vmatpush1.msra.mxu0 0.0
    %5156 = vmatprep.subr.mxu0 0.0
    %5157 = vmatpush1.msra.mxu0 0.0
    %5158 = vmatprep.subr.mxu0 0.0
    %5159 = vmatpush1.msra.mxu0 0.0
    %5160 = vmatprep.subr.mxu0 0.0
    %5161 = vmatpush1.msra.mxu0 0.0
    %5162 = vmatprep.subr.mxu0 0.0
    %5163 = vmatpush1.msra.mxu0 0.0
    %5164 = vmatprep.subr.mxu0 0.0
    %5165 = vmatpush1.msra.mxu0 0.0
    %5166 = vmatprep.subr.mxu0 0.0
    %5167 = vmatpush1.msra.mxu0 0.0
    %5168 = vmatprep.mubr.f32.mxu0 0.0
    %5169 = vmatmul.mubr.f32.gmra.mrb[0].mxu0 %v5102
    %v5170 = vpop.f32.mrb[0].mxu0
    %v5171 = vadd.f32 %v5096, %v5170
    %v5172 = vpop.f32.mrb[0].mxu0
    %5173 = vdwg.mxu0
    %v5174 = vlaneseq
    %v5175 = vand.u32 %v5174, 127
    %vm5176 = vcmp.lt.s32.totalorder %v5175, 16
    %v5177 = vsel %vm5176, %v5171, -1e+30
    %vm5178 = vcmask 1041408
    %v5179 = vsel %vm5178, %v5177, -inf
    %5180 = vmax.xlane.f32.xlu0 %v5179
    %v5181 = vpop.xlane.xlu0 %5180
    %v5182 = vsub.f32 %v5171, %v5181
    %v5183 = vmul.f32 %v5182, 1.442695
    %v5184 = vpow.pop %v5183
    %v5185 = vsel %vm5176, %v5184, 0.0
    %v5186 = vsel %vm5178, %v5185, 0.0
    %5187 = vadd.xlane.f32.xlu0 %v5186
    %v5188 = vpop.xlane.xlu0 %5187
    %v5189 = vlog2.pop %v5188
    %v5190 = vmul.f32 %v5189, 0.6931472
    %v5191 = vsub.f32 %v5182, %v5190
    %v5192 = vsel %vm5176, %v5191, %v5171
    %5193 = vst [vmem:[#allocation2] sm:$0x3] %v5192
    // Predicated region
    $region42: #{tpu_custom_call.1} parent=1 // pred_check
      _
    $region43: #{tpu_custom_call.1} parent=1 // pred_check_branch
      %5195 = sbr.rel (0) target = $region45
    $region44: #{tpu_custom_call.1} parent=1 // pred_region
      %s5197 = ssub.s32 32, 32
      %5198 = vsyncadd [#allocation3], %s5197
      %s5200 = sshll.u32 [#allocation2], 4
      %s5201 = int_to_ptr.vmem [resolvable:$true] %s5200
      %5203 = dma.vmem_to_hbm [thread:$0]  %s5201, 32, %s10, [#allocation3]
    $region45: #{tpu_custom_call.1} parent=1 // pred_fallthru
      _
    // Predicated region
    $region46: #{tpu_custom_call.1} parent=1 // pred_check
      _
    $region47: #{tpu_custom_call.1} parent=1 // pred_check_branch
      %5205 = sbr.rel (0) target = $region49
    $region48: #{tpu_custom_call.1} parent=1 // pred_region
      %5206 = dma.done [#allocation3], 32
    $region49: #{tpu_custom_call.1} parent=1 // pred_fallthru
      _
    %5207 = vsyncpa [#allocation3], 1

</llo_original>
